<compile_context>
chip_gen: v7x
topology: tpu7x:2x2x1
jax: 0.10.0
libtpu: 0.0.40
codegen_flags: <defaults>
</compile_context>

<pallas_src>
import functools

import jax
import jax.numpy as jnp
from jax import lax
from jax.experimental import pallas as pl
from jax.experimental.pallas import tpu as pltpu


_DILATIONS = (1, 2, 4, 6, 8)     # branch1..branch5 dilation / padding


def _round_up(x, m):
    return (x + m - 1) // m * m


# ---------------------------------------------------------------------------
# Fused SPRM kernel (one batch element per grid step, channels-first layout)
# ---------------------------------------------------------------------------

def _sprm_kernel(H, W, PAD,
                 x_ref,                  # (1, Cin, H*W)
                 idx_ref,                # (2, H*W) int32: row / col of each flat pos
                 wcv_ref, bcv_ref,       # (Cout, Cin), (Cout, 1)      convert (BN folded)
                 wbr_ref, bbr_ref,       # (5, Cout, 9*Cout), (5, Cout, 1)  branches
                 wred_ref, bred_ref,     # (5, Cout, Cout), (Cout, 1)  reduce (per-chunk)
                 wsc_ref, bsc_ref,       # (Cout, Cout), (Cout, 1)     shortconnect
                 o_ref,                  # (1, Cout, H*W)
                 sp_ref):                # (Cout, H*W + 2*PAD) flat running-sum scratch
    HW = H * W
    f32 = jnp.float32

    h_idx = idx_ref[0:1, :]              # (1, HW)
    w_idx = idx_ref[1:2, :]              # (1, HW)

    # ---- convert: 1x1 conv (+ folded BN) + ReLU ---------------------------
    x = x_ref[0]                                                    # (Cin, HW)
    x0 = jnp.maximum(
        jnp.dot(wcv_ref[...], x, preferred_element_type=f32) + bcv_ref[...],
        0.0)                                                        # (Cout, HW)
    Cout = x0.shape[0]

    # Hygiene only: halo lanes are never *used* (every out-of-image tap is
    # masked to zero below), but keep the scratch deterministic.
    sp_ref[...] = jnp.zeros_like(sp_ref)

    s = x0                                        # running-sum residual
    acc_red = jnp.zeros((Cout, HW), f32)          # fused reduce accumulator

    # ---- 5 dilated 3x3 branches (im2col) + fused reduce accumulation ------
    for k, d in enumerate(_DILATIONS):
        # Stage the current running sum once; every shifted tap below is a
        # plain static lane-offset slice of this flat buffer.
        sp_ref[:, PAD:PAD + HW] = s

        chunks = []
        for kh in range(3):
            dr = (kh - 1) * d
            for kw in range(3):
                dc = (kw - 1) * d
                off = dr * W + dc
                if off == 0:                       # center tap: no shift, no mask
                    chunks.append(s)
                    continue
                shifted = sp_ref[:, PAD + off:PAD + off + HW]       # (Cout, HW)
                conds = []
                if dr > 0:
                    conds.append(h_idx < (H - dr))
                elif dr < 0:
                    conds.append(h_idx >= (-dr))
                if dc > 0:
                    conds.append(w_idx < (W - dc))
                elif dc < 0:
                    conds.append(w_idx >= (-dc))
                mask = conds[0]
                for c in conds[1:]:
                    mask = jnp.logical_and(mask, c)
                chunks.append(jnp.where(mask, shifted, 0.0))
        slab = jnp.concatenate(chunks, axis=0)     # (9*Cout, HW) im2col slab

        xk = jnp.maximum(
            jnp.dot(wbr_ref[k], slab, preferred_element_type=f32) + bbr_ref[k],
            0.0)                                   # branch-k output (Cout, HW)

        # reduce(concat(x1..x5)) == sum_k  Wred_k @ xk
        acc_red = acc_red + jnp.dot(wred_ref[k], xk, preferred_element_type=f32)

        if k + 1 < len(_DILATIONS):
            s = s + xk                             # running-sum residual

    # ---- shortconnect + reduce epilogue ------------------------------------
    x_res = jnp.maximum(
        jnp.dot(wsc_ref[...], x0, preferred_element_type=f32) + bsc_ref[...],
        0.0)
    y = jnp.maximum(acc_red + bred_ref[...], 0.0)
    # Final ReLU omitted: y >= 0 and x_res >= 0, so relu(y + x_res) == y + x_res.
    o_ref[0] = (y + x_res).astype(o_ref.dtype)


# ---------------------------------------------------------------------------
# Wrapper
# ---------------------------------------------------------------------------

def sprm_forward(x_nchw, params):
    """x_nchw: (N, Cin, H, W) float32.  Returns (N, Cout, H, W) float32."""
    N, Cin, H, W = x_nchw.shape
    Cout = params["w_convert"].shape[0]
    HW = H * W
    max_off = max(_DILATIONS) * (W + 1)
    PAD = _round_up(max_off, 128)                  # lane-aligned center offset
    HWP = HW + 2 * PAD

    x_flat = x_nchw.reshape(N, Cin, HW)            # metadata-only reshape

    pp = jnp.arange(HW, dtype=jnp.int32)
    idx = jnp.stack([pp // W, pp % W], axis=0)     # (2, HW) row / col indices

    kernel = functools.partial(_sprm_kernel, H, W, PAD)

    grid_spec = pltpu.PrefetchScalarGridSpec(
        num_scalar_prefetch=0,
        grid=(N,),
        in_specs=[
            pl.BlockSpec((1, Cin, HW), lambda n: (n, 0, 0)),
            pl.BlockSpec((2, HW), lambda n: (0, 0)),
            pl.BlockSpec((Cout, Cin), lambda n: (0, 0)),
            pl.BlockSpec((Cout, 1), lambda n: (0, 0)),
            pl.BlockSpec((5, Cout, 9 * Cout), lambda n: (0, 0, 0)),
            pl.BlockSpec((5, Cout, 1), lambda n: (0, 0, 0)),
            pl.BlockSpec((5, Cout, Cout), lambda n: (0, 0, 0)),
            pl.BlockSpec((Cout, 1), lambda n: (0, 0)),
            pl.BlockSpec((Cout, Cout), lambda n: (0, 0)),
            pl.BlockSpec((Cout, 1), lambda n: (0, 0)),
        ],
        out_specs=pl.BlockSpec((1, Cout, HW), lambda n: (n, 0, 0)),
        scratch_shapes=[pltpu.VMEM((Cout, HWP), jnp.float32)],
    )

    out_flat = pl.pallas_call(
        kernel,
        out_shape=jax.ShapeDtypeStruct((N, Cout, HW), jnp.float32),
        grid_spec=grid_spec,
        compiler_params=pltpu.CompilerParams(dimension_semantics=("parallel",)),
    )(x_flat, idx,
      params["w_convert"], params["b_convert"],
      params["w_branch"], params["b_branch"],
      params["w_reduce"], params["b_reduce"],
      params["w_short"], params["b_short"])

    return out_flat.reshape(N, Cout, H, W)         # metadata-only reshape


# ---------------------------------------------------------------------------
# Parameters (deterministic synthetic init; BN folded into weights & biases)
# ---------------------------------------------------------------------------

def _bn_fold(key, cout, eps=1e-5):
    kb, kg, kbt, km, kv = jax.random.split(key, 5)
    b_conv = 0.05 * jax.random.normal(kb, (cout,), jnp.float32)
    gamma = 1.0 + 0.1 * jax.random.normal(kg, (cout,), jnp.float32)
    beta = 0.05 * jax.random.normal(kbt, (cout,), jnp.float32)
    mean = 0.05 * jax.random.normal(km, (cout,), jnp.float32)
    var = 0.9 + 0.1 * jnp.abs(jax.random.normal(kv, (cout,), jnp.float32))
    scale = gamma / jnp.sqrt(var + eps)
    bias = beta + scale * (b_conv - mean)
    return scale, bias


def init_sprm_params(key, in_channel, out_channel):
    C = out_channel
    ks = jax.random.split(key, 8)

    def make_1x1(k, cin):
        kw_, kf = jax.random.split(k)
        w = 0.1 * jax.random.normal(kw_, (C, cin), jnp.float32)   # (Cout, Cin)
        scale, bias = _bn_fold(kf, C)
        return w * scale[:, None], bias.reshape(C, 1)

    def make_3x3(k):
        kw_, kf = jax.random.split(k)
        # tap-major, channel-minor K layout: w2d[o, (kh*3+kw)*C + c]
        w = 0.1 * jax.random.normal(kw_, (C, 9 * C), jnp.float32)
        scale, bias = _bn_fold(kf, C)
        return w * scale[:, None], bias.reshape(C, 1)

    w_cv, b_cv = make_1x1(ks[0], in_channel)
    branches = [make_3x3(ks[i + 1]) for i in range(5)]
    wred_full, b_red = make_1x1(ks[6], 5 * C)                     # (C, 5C)
    w_red = wred_full.reshape(C, 5, C).transpose(1, 0, 2)         # (5, C, C)
    w_sc, b_sc = make_1x1(ks[7], C)

    return {
        "w_convert": w_cv, "b_convert": b_cv,                     # (C,Cin), (C,1)
        "w_branch": jnp.stack([b[0] for b in branches]),          # (5, C, 9C)
        "b_branch": jnp.stack([b[1] for b in branches]),          # (5, C, 1)
        "w_reduce": w_red, "b_reduce": b_red,                     # (5,C,C), (C,1)
        "w_short": w_sc, "b_short": b_sc,                         # (C,C), (C,1)
    }


# ---------------------------------------------------------------------------
# Pure-JAX reference (NCHW, lax convs, high precision) for validation
# ---------------------------------------------------------------------------

def sprm_reference(x_nchw, params):
    HIGH = lax.Precision.HIGHEST

    def conv1x1(x, w, b):          # w: (Co, Ci), b: (Co, 1)
        y = jnp.einsum('oc,nchw->nohw', w, x, precision=HIGH)
        return jnp.maximum(y + b[None, :, :, None], 0.0)

    def conv3x3(x, w2d, b, d):     # w2d: (Co, 9*Ci) tap-major / channel-minor
        Co = w2d.shape[0]
        Ci = x.shape[1]
        w4 = w2d.reshape(Co, 3, 3, Ci).transpose(0, 3, 1, 2)     # OIHW
        y = lax.conv_general_dilated(
            x, w4, window_strides=(1, 1), padding=((d, d), (d, d)),
            rhs_dilation=(d, d),
            dimension_numbers=('NCHW', 'OIHW', 'NCHW'), precision=HIGH)
        return jnp.maximum(y + b[None, :, :, None], 0.0)

    x0 = conv1x1(x_nchw, params["w_convert"], params["b_convert"])
    s = x0
    branch_outs = []
    for k, d in enumerate(_DILATIONS):
        xk = conv3x3(s, params["w_branch"][k], params["b_branch"][k], d)
        branch_outs.append(xk)
        s = s + xk
    x_res = conv1x1(x0, params["w_short"], params["b_short"])
    C = x0.shape[1]
    wred_full = params["w_reduce"].transpose(1, 0, 2).reshape(C, 5 * C)
    x_cat = jnp.concatenate(branch_outs, axis=1)
    y = conv1x1(x_cat, wred_full, params["b_reduce"])
    return jnp.maximum(y + x_res, 0.0)


# ---------------------------------------------------------------------------

if __name__ == "__main__":
    key = jax.random.PRNGKey(0)
    k_x, k_p = jax.random.split(key)

    N, C_IN, H, W = 2, 4, 16, 16
    C_OUT = 8

    x = jax.random.normal(k_x, (N, C_IN, H, W), jnp.float32)
    params = init_sprm_params(k_p, C_IN, C_OUT)

    fwd = jax.jit(sprm_forward)
    out = jax.block_until_ready(fwd(x, params))

    assert out.shape == (N, C_OUT, H, W), out.shape
    assert out.dtype == jnp.float32
    assert bool(jnp.all(jnp.isfinite(out)))

    ref = sprm_reference(x, params)
    err = float(jnp.max(jnp.abs(out - ref) / (1.0 + jnp.abs(ref))))
    assert err < 2e-2, f"kernel/reference mismatch: max scaled err = {err}"

    print("KERNEL_OK")
</pallas_src>

<mosaic_0001>
module attributes {stable_mosaic.version = 11 : i64} {
  func.func @_sprm_kernel(%arg0: i32, %arg1: memref<1x4x256xf32, #tpu.memory_space<vmem>>, %arg2: memref<2x256xi32, #tpu.memory_space<vmem>>, %arg3: memref<8x4xf32, #tpu.memory_space<vmem>>, %arg4: memref<8x1xf32, #tpu.memory_space<vmem>>, %arg5: memref<5x8x72xf32, #tpu.memory_space<vmem>>, %arg6: memref<5x8x1xf32, #tpu.memory_space<vmem>>, %arg7: memref<5x8x8xf32, #tpu.memory_space<vmem>>, %arg8: memref<8x1xf32, #tpu.memory_space<vmem>>, %arg9: memref<8x8xf32, #tpu.memory_space<vmem>>, %arg10: memref<8x1xf32, #tpu.memory_space<vmem>>, %arg11: memref<1x8x256xf32, #tpu.memory_space<vmem>>, %arg12: memref<8x768xf32, #tpu.memory_space<vmem>>) attributes {dimension_semantics = [#tpu.dimension_semantics<parallel>], iteration_bounds = array<i64: 2>, scalar_prefetch = 0 : i64, scratch_operands = 1 : i64, tpu.core_type = #tpu.core_type<tc>, window_params = [{transform_indices = @transform_0, window_bounds = array<i64: 1, 4, 256>}, {pipeline_mode = #tpu.pipeline_mode<synchronous>, transform_indices = @transform_1, window_bounds = array<i64: 2, 256>}, {pipeline_mode = #tpu.pipeline_mode<synchronous>, transform_indices = @transform_2, window_bounds = array<i64: 8, 4>}, {pipeline_mode = #tpu.pipeline_mode<synchronous>, transform_indices = @transform_3, window_bounds = array<i64: 8, 1>}, {pipeline_mode = #tpu.pipeline_mode<synchronous>, transform_indices = @transform_4, window_bounds = array<i64: 5, 8, 72>}, {pipeline_mode = #tpu.pipeline_mode<synchronous>, transform_indices = @transform_5, window_bounds = array<i64: 5, 8, 1>}, {pipeline_mode = #tpu.pipeline_mode<synchronous>, transform_indices = @transform_6, window_bounds = array<i64: 5, 8, 8>}, {pipeline_mode = #tpu.pipeline_mode<synchronous>, transform_indices = @transform_7, window_bounds = array<i64: 8, 1>}, {pipeline_mode = #tpu.pipeline_mode<synchronous>, transform_indices = @transform_8, window_bounds = array<i64: 8, 8>}, {pipeline_mode = #tpu.pipeline_mode<synchronous>, transform_indices = @transform_9, window_bounds = array<i64: 8, 1>}, {transform_indices = @transform_10, window_bounds = array<i64: 1, 8, 256>}]} {
    %c0 = arith.constant 0 : index
    %c0_0 = arith.constant 0 : index
    %0 = vector.load %arg2[%c0, %c0_0] : memref<2x256xi32, #tpu.memory_space<vmem>>, vector<1x256xi32>
    %c1 = arith.constant 1 : index
    %c0_1 = arith.constant 0 : index
    %1 = vector.load %arg2[%c1, %c0_1] : memref<2x256xi32, #tpu.memory_space<vmem>>, vector<1x256xi32>
    %c0_2 = arith.constant 0 : index
    %c0_3 = arith.constant 0 : index
    %c0_4 = arith.constant 0 : index
    %2 = vector.load %arg1[%c0_2, %c0_3, %c0_4] : memref<1x4x256xf32, #tpu.memory_space<vmem>>, vector<1x4x256xf32>
    %3 = vector.shape_cast %2 : vector<1x4x256xf32> to vector<4x256xf32>
    %c0_5 = arith.constant 0 : index
    %c0_6 = arith.constant 0 : index
    %4 = vector.load %arg3[%c0_5, %c0_6] : memref<8x4xf32, #tpu.memory_space<vmem>>, vector<8x4xf32>
    %cst = arith.constant dense<0.000000e+00> : vector<8x256xf32>
    %5 = tpu.matmul %4, %3, %cst {dimension_numbers = #tpu.dot_dimension_numbers<[1], [0], [0], [1], [0, 0, 1, 1], [], []>} : vector<8x4xf32>, vector<4x256xf32>, vector<8x256xf32> -> vector<8x256xf32>
    %c0_7 = arith.constant 0 : index
    %c0_8 = arith.constant 0 : index
    %6 = vector.load %arg4[%c0_7, %c0_8] : memref<8x1xf32, #tpu.memory_space<vmem>>, vector<8x1xf32>
    %7 = vector.broadcast %6 : vector<8x1xf32> to vector<8x256xf32>
    %8 = arith.addf %5, %7 : vector<8x256xf32>
    %cst_9 = arith.constant 0.000000e+00 : f32
    %9 = vector.broadcast %cst_9 : f32 to vector<8x256xf32>
    %10 = arith.maximumf %8, %9 : vector<8x256xf32>
    %cst_10 = arith.constant 0.000000e+00 : f32
    %11 = vector.broadcast %cst_10 : f32 to vector<8x768xf32>
    %c0_11 = arith.constant 0 : index
    %c0_12 = arith.constant 0 : index
    %12 = vector.load %arg12[%c0_11, %c0_12] : memref<8x768xf32, #tpu.memory_space<vmem>>, vector<8x768xf32>
    tpu.vector_store %arg12[%c0_11, %c0_12], %11 {strides = array<i32>} : memref<8x768xf32, #tpu.memory_space<vmem>>, vector<8x768xf32>,
    %cst_13 = arith.constant 0.000000e+00 : f32
    %13 = vector.broadcast %cst_13 : f32 to vector<8x256xf32>
    %c0_14 = arith.constant 0 : index
    %c256 = arith.constant 256 : index
    %14 = vector.load %arg12[%c0_14, %c256] : memref<8x768xf32, #tpu.memory_space<vmem>>, vector<8x256xf32>
    tpu.vector_store %arg12[%c0_14, %c256], %10 {strides = array<i32>} : memref<8x768xf32, #tpu.memory_space<vmem>>, vector<8x256xf32>,
    %c0_15 = arith.constant 0 : index
    %c239 = arith.constant 239 : index
    %15 = vector.load %arg12[%c0_15, %c239] : memref<8x768xf32, #tpu.memory_space<vmem>>, vector<8x256xf32>
    %c1_i32 = arith.constant 1 : i32
    %16 = vector.broadcast %c1_i32 : i32 to vector<1x256xi32>
    %17 = arith.cmpi sge, %0, %16 : vector<1x256xi32>
    %c1_i32_16 = arith.constant 1 : i32
    %18 = vector.broadcast %c1_i32_16 : i32 to vector<1x256xi32>
    %19 = arith.cmpi sge, %1, %18 : vector<1x256xi32>
    %20 = arith.andi %17, %19 : vector<1x256xi1>
    %cst_17 = arith.constant 0.000000e+00 : f32
    %21 = vector.shape_cast %20 : vector<1x256xi1> to vector<1x256xi1>
    %22 = vector.broadcast %21 : vector<1x256xi1> to vector<8x256xi1>
    %23 = vector.broadcast %cst_17 : f32 to vector<8x256xf32>
    %24 = arith.select %22, %15, %23 : vector<8x256xi1>, vector<8x256xf32>
    %c0_18 = arith.constant 0 : index
    %c240 = arith.constant 240 : index
    %25 = vector.load %arg12[%c0_18, %c240] : memref<8x768xf32, #tpu.memory_space<vmem>>, vector<8x256xf32>
    %c1_i32_19 = arith.constant 1 : i32
    %26 = vector.broadcast %c1_i32_19 : i32 to vector<1x256xi32>
    %27 = arith.cmpi sge, %0, %26 : vector<1x256xi32>
    %cst_20 = arith.constant 0.000000e+00 : f32
    %28 = vector.shape_cast %27 : vector<1x256xi1> to vector<1x256xi1>
    %29 = vector.broadcast %28 : vector<1x256xi1> to vector<8x256xi1>
    %30 = vector.broadcast %cst_20 : f32 to vector<8x256xf32>
    %31 = arith.select %29, %25, %30 : vector<8x256xi1>, vector<8x256xf32>
    %c0_21 = arith.constant 0 : index
    %c241 = arith.constant 241 : index
    %32 = vector.load %arg12[%c0_21, %c241] : memref<8x768xf32, #tpu.memory_space<vmem>>, vector<8x256xf32>
    %c1_i32_22 = arith.constant 1 : i32
    %33 = vector.broadcast %c1_i32_22 : i32 to vector<1x256xi32>
    %34 = arith.cmpi sge, %0, %33 : vector<1x256xi32>
    %c15_i32 = arith.constant 15 : i32
    %35 = vector.broadcast %c15_i32 : i32 to vector<1x256xi32>
    %36 = arith.cmpi slt, %1, %35 : vector<1x256xi32>
    %37 = arith.andi %34, %36 : vector<1x256xi1>
    %cst_23 = arith.constant 0.000000e+00 : f32
    %38 = vector.shape_cast %37 : vector<1x256xi1> to vector<1x256xi1>
    %39 = vector.broadcast %38 : vector<1x256xi1> to vector<8x256xi1>
    %40 = vector.broadcast %cst_23 : f32 to vector<8x256xf32>
    %41 = arith.select %39, %32, %40 : vector<8x256xi1>, vector<8x256xf32>
    %c0_24 = arith.constant 0 : index
    %c255 = arith.constant 255 : index
    %42 = vector.load %arg12[%c0_24, %c255] : memref<8x768xf32, #tpu.memory_space<vmem>>, vector<8x256xf32>
    %c1_i32_25 = arith.constant 1 : i32
    %43 = vector.broadcast %c1_i32_25 : i32 to vector<1x256xi32>
    %44 = arith.cmpi sge, %1, %43 : vector<1x256xi32>
    %cst_26 = arith.constant 0.000000e+00 : f32
    %45 = vector.shape_cast %44 : vector<1x256xi1> to vector<1x256xi1>
    %46 = vector.broadcast %45 : vector<1x256xi1> to vector<8x256xi1>
    %47 = vector.broadcast %cst_26 : f32 to vector<8x256xf32>
    %48 = arith.select %46, %42, %47 : vector<8x256xi1>, vector<8x256xf32>
    %c0_27 = arith.constant 0 : index
    %c257 = arith.constant 257 : index
    %49 = vector.load %arg12[%c0_27, %c257] : memref<8x768xf32, #tpu.memory_space<vmem>>, vector<8x256xf32>
    %c15_i32_28 = arith.constant 15 : i32
    %50 = vector.broadcast %c15_i32_28 : i32 to vector<1x256xi32>
    %51 = arith.cmpi slt, %1, %50 : vector<1x256xi32>
    %cst_29 = arith.constant 0.000000e+00 : f32
    %52 = vector.shape_cast %51 : vector<1x256xi1> to vector<1x256xi1>
    %53 = vector.broadcast %52 : vector<1x256xi1> to vector<8x256xi1>
    %54 = vector.broadcast %cst_29 : f32 to vector<8x256xf32>
    %55 = arith.select %53, %49, %54 : vector<8x256xi1>, vector<8x256xf32>
    %c0_30 = arith.constant 0 : index
    %c271 = arith.constant 271 : index
    %56 = vector.load %arg12[%c0_30, %c271] : memref<8x768xf32, #tpu.memory_space<vmem>>, vector<8x256xf32>
    %c15_i32_31 = arith.constant 15 : i32
    %57 = vector.broadcast %c15_i32_31 : i32 to vector<1x256xi32>
    %58 = arith.cmpi slt, %0, %57 : vector<1x256xi32>
    %c1_i32_32 = arith.constant 1 : i32
    %59 = vector.broadcast %c1_i32_32 : i32 to vector<1x256xi32>
    %60 = arith.cmpi sge, %1, %59 : vector<1x256xi32>
    %61 = arith.andi %58, %60 : vector<1x256xi1>
    %cst_33 = arith.constant 0.000000e+00 : f32
    %62 = vector.shape_cast %61 : vector<1x256xi1> to vector<1x256xi1>
    %63 = vector.broadcast %62 : vector<1x256xi1> to vector<8x256xi1>
    %64 = vector.broadcast %cst_33 : f32 to vector<8x256xf32>
    %65 = arith.select %63, %56, %64 : vector<8x256xi1>, vector<8x256xf32>
    %c0_34 = arith.constant 0 : index
    %c272 = arith.constant 272 : index
    %66 = vector.load %arg12[%c0_34, %c272] : memref<8x768xf32, #tpu.memory_space<vmem>>, vector<8x256xf32>
    %c15_i32_35 = arith.constant 15 : i32
    %67 = vector.broadcast %c15_i32_35 : i32 to vector<1x256xi32>
    %68 = arith.cmpi slt, %0, %67 : vector<1x256xi32>
    %cst_36 = arith.constant 0.000000e+00 : f32
    %69 = vector.shape_cast %68 : vector<1x256xi1> to vector<1x256xi1>
    %70 = vector.broadcast %69 : vector<1x256xi1> to vector<8x256xi1>
    %71 = vector.broadcast %cst_36 : f32 to vector<8x256xf32>
    %72 = arith.select %70, %66, %71 : vector<8x256xi1>, vector<8x256xf32>
    %c0_37 = arith.constant 0 : index
    %c273 = arith.constant 273 : index
    %73 = vector.load %arg12[%c0_37, %c273] : memref<8x768xf32, #tpu.memory_space<vmem>>, vector<8x256xf32>
    %c15_i32_38 = arith.constant 15 : i32
    %74 = vector.broadcast %c15_i32_38 : i32 to vector<1x256xi32>
    %75 = arith.cmpi slt, %0, %74 : vector<1x256xi32>
    %c15_i32_39 = arith.constant 15 : i32
    %76 = vector.broadcast %c15_i32_39 : i32 to vector<1x256xi32>
    %77 = arith.cmpi slt, %1, %76 : vector<1x256xi32>
    %78 = arith.andi %75, %77 : vector<1x256xi1>
    %cst_40 = arith.constant 0.000000e+00 : f32
    %79 = vector.shape_cast %78 : vector<1x256xi1> to vector<1x256xi1>
    %80 = vector.broadcast %79 : vector<1x256xi1> to vector<8x256xi1>
    %81 = vector.broadcast %cst_40 : f32 to vector<8x256xf32>
    %82 = arith.select %80, %73, %81 : vector<8x256xi1>, vector<8x256xf32>
    %83 = tpu.concatenate %24, %31, %41, %48, %10, %55, %65, %72, %82 in 0 : vector<8x256xf32>, vector<8x256xf32>, vector<8x256xf32>, vector<8x256xf32>, vector<8x256xf32>, vector<8x256xf32>, vector<8x256xf32>, vector<8x256xf32>, vector<8x256xf32> -> vector<72x256xf32>
    %c0_41 = arith.constant 0 : index
    %c0_42 = arith.constant 0 : index
    %c0_43 = arith.constant 0 : index
    %84 = vector.load %arg5[%c0_41, %c0_42, %c0_43] : memref<5x8x72xf32, #tpu.memory_space<vmem>>, vector<1x8x72xf32>
    %85 = vector.shape_cast %84 : vector<1x8x72xf32> to vector<8x72xf32>
    %cst_44 = arith.constant dense<0.000000e+00> : vector<8x256xf32>
    %86 = tpu.matmul %85, %83, %cst_44 {dimension_numbers = #tpu.dot_dimension_numbers<[1], [0], [0], [1], [0, 0, 1, 1], [], []>} : vector<8x72xf32>, vector<72x256xf32>, vector<8x256xf32> -> vector<8x256xf32>
    %c0_45 = arith.constant 0 : index
    %c0_46 = arith.constant 0 : index
    %c0_47 = arith.constant 0 : index
    %87 = vector.load %arg6[%c0_45, %c0_46, %c0_47] : memref<5x8x1xf32, #tpu.memory_space<vmem>>, vector<1x8x1xf32>
    %88 = vector.shape_cast %87 : vector<1x8x1xf32> to vector<8x1xf32>
    %89 = vector.broadcast %88 : vector<8x1xf32> to vector<8x256xf32>
    %90 = arith.addf %86, %89 : vector<8x256xf32>
    %cst_48 = arith.constant 0.000000e+00 : f32
    %91 = vector.broadcast %cst_48 : f32 to vector<8x256xf32>
    %92 = arith.maximumf %90, %91 : vector<8x256xf32>
    %c0_49 = arith.constant 0 : index
    %c0_50 = arith.constant 0 : index
    %c0_51 = arith.constant 0 : index
    %93 = vector.load %arg7[%c0_49, %c0_50, %c0_51] : memref<5x8x8xf32, #tpu.memory_space<vmem>>, vector<1x8x8xf32>
    %94 = vector.shape_cast %93 : vector<1x8x8xf32> to vector<8x8xf32>
    %cst_52 = arith.constant dense<0.000000e+00> : vector<8x256xf32>
    %95 = tpu.matmul %94, %92, %cst_52 {dimension_numbers = #tpu.dot_dimension_numbers<[1], [0], [0], [1], [0, 0, 1, 1], [], []>} : vector<8x8xf32>, vector<8x256xf32>, vector<8x256xf32> -> vector<8x256xf32>
    %96 = arith.addf %13, %95 : vector<8x256xf32>
    %97 = arith.addf %10, %92 : vector<8x256xf32>
    %c0_53 = arith.constant 0 : index
    %c256_54 = arith.constant 256 : index
    %98 = vector.load %arg12[%c0_53, %c256_54] : memref<8x768xf32, #tpu.memory_space<vmem>>, vector<8x256xf32>
    tpu.vector_store %arg12[%c0_53, %c256_54], %97 {strides = array<i32>} : memref<8x768xf32, #tpu.memory_space<vmem>>, vector<8x256xf32>,
    %c0_55 = arith.constant 0 : index
    %c222 = arith.constant 222 : index
    %99 = vector.load %arg12[%c0_55, %c222] : memref<8x768xf32, #tpu.memory_space<vmem>>, vector<8x256xf32>
    %c2_i32 = arith.constant 2 : i32
    %100 = vector.broadcast %c2_i32 : i32 to vector<1x256xi32>
    %101 = arith.cmpi sge, %0, %100 : vector<1x256xi32>
    %c2_i32_56 = arith.constant 2 : i32
    %102 = vector.broadcast %c2_i32_56 : i32 to vector<1x256xi32>
    %103 = arith.cmpi sge, %1, %102 : vector<1x256xi32>
    %104 = arith.andi %101, %103 : vector<1x256xi1>
    %cst_57 = arith.constant 0.000000e+00 : f32
    %105 = vector.shape_cast %104 : vector<1x256xi1> to vector<1x256xi1>
    %106 = vector.broadcast %105 : vector<1x256xi1> to vector<8x256xi1>
    %107 = vector.broadcast %cst_57 : f32 to vector<8x256xf32>
    %108 = arith.select %106, %99, %107 : vector<8x256xi1>, vector<8x256xf32>
    %c0_58 = arith.constant 0 : index
    %c224 = arith.constant 224 : index
    %109 = vector.load %arg12[%c0_58, %c224] : memref<8x768xf32, #tpu.memory_space<vmem>>, vector<8x256xf32>
    %c2_i32_59 = arith.constant 2 : i32
    %110 = vector.broadcast %c2_i32_59 : i32 to vector<1x256xi32>
    %111 = arith.cmpi sge, %0, %110 : vector<1x256xi32>
    %cst_60 = arith.constant 0.000000e+00 : f32
    %112 = vector.shape_cast %111 : vector<1x256xi1> to vector<1x256xi1>
    %113 = vector.broadcast %112 : vector<1x256xi1> to vector<8x256xi1>
    %114 = vector.broadcast %cst_60 : f32 to vector<8x256xf32>
    %115 = arith.select %113, %109, %114 : vector<8x256xi1>, vector<8x256xf32>
    %c0_61 = arith.constant 0 : index
    %c226 = arith.constant 226 : index
    %116 = vector.load %arg12[%c0_61, %c226] : memref<8x768xf32, #tpu.memory_space<vmem>>, vector<8x256xf32>
    %c2_i32_62 = arith.constant 2 : i32
    %117 = vector.broadcast %c2_i32_62 : i32 to vector<1x256xi32>
    %118 = arith.cmpi sge, %0, %117 : vector<1x256xi32>
    %c14_i32 = arith.constant 14 : i32
    %119 = vector.broadcast %c14_i32 : i32 to vector<1x256xi32>
    %120 = arith.cmpi slt, %1, %119 : vector<1x256xi32>
    %121 = arith.andi %118, %120 : vector<1x256xi1>
    %cst_63 = arith.constant 0.000000e+00 : f32
    %122 = vector.shape_cast %121 : vector<1x256xi1> to vector<1x256xi1>
    %123 = vector.broadcast %122 : vector<1x256xi1> to vector<8x256xi1>
    %124 = vector.broadcast %cst_63 : f32 to vector<8x256xf32>
    %125 = arith.select %123, %116, %124 : vector<8x256xi1>, vector<8x256xf32>
    %c0_64 = arith.constant 0 : index
    %c254 = arith.constant 254 : index
    %126 = vector.load %arg12[%c0_64, %c254] : memref<8x768xf32, #tpu.memory_space<vmem>>, vector<8x256xf32>
    %c2_i32_65 = arith.constant 2 : i32
    %127 = vector.broadcast %c2_i32_65 : i32 to vector<1x256xi32>
    %128 = arith.cmpi sge, %1, %127 : vector<1x256xi32>
    %cst_66 = arith.constant 0.000000e+00 : f32
    %129 = vector.shape_cast %128 : vector<1x256xi1> to vector<1x256xi1>
    %130 = vector.broadcast %129 : vector<1x256xi1> to vector<8x256xi1>
    %131 = vector.broadcast %cst_66 : f32 to vector<8x256xf32>
    %132 = arith.select %130, %126, %131 : vector<8x256xi1>, vector<8x256xf32>
    %c0_67 = arith.constant 0 : index
    %c258 = arith.constant 258 : index
    %133 = vector.load %arg12[%c0_67, %c258] : memref<8x768xf32, #tpu.memory_space<vmem>>, vector<8x256xf32>
    %c14_i32_68 = arith.constant 14 : i32
    %134 = vector.broadcast %c14_i32_68 : i32 to vector<1x256xi32>
    %135 = arith.cmpi slt, %1, %134 : vector<1x256xi32>
    %cst_69 = arith.constant 0.000000e+00 : f32
    %136 = vector.shape_cast %135 : vector<1x256xi1> to vector<1x256xi1>
    %137 = vector.broadcast %136 : vector<1x256xi1> to vector<8x256xi1>
    %138 = vector.broadcast %cst_69 : f32 to vector<8x256xf32>
    %139 = arith.select %137, %133, %138 : vector<8x256xi1>, vector<8x256xf32>
    %c0_70 = arith.constant 0 : index
    %c286 = arith.constant 286 : index
    %140 = vector.load %arg12[%c0_70, %c286] : memref<8x768xf32, #tpu.memory_space<vmem>>, vector<8x256xf32>
    %c14_i32_71 = arith.constant 14 : i32
    %141 = vector.broadcast %c14_i32_71 : i32 to vector<1x256xi32>
    %142 = arith.cmpi slt, %0, %141 : vector<1x256xi32>
    %c2_i32_72 = arith.constant 2 : i32
    %143 = vector.broadcast %c2_i32_72 : i32 to vector<1x256xi32>
    %144 = arith.cmpi sge, %1, %143 : vector<1x256xi32>
    %145 = arith.andi %142, %144 : vector<1x256xi1>
    %cst_73 = arith.constant 0.000000e+00 : f32
    %146 = vector.shape_cast %145 : vector<1x256xi1> to vector<1x256xi1>
    %147 = vector.broadcast %146 : vector<1x256xi1> to vector<8x256xi1>
    %148 = vector.broadcast %cst_73 : f32 to vector<8x256xf32>
    %149 = arith.select %147, %140, %148 : vector<8x256xi1>, vector<8x256xf32>
    %c0_74 = arith.constant 0 : index
    %c288 = arith.constant 288 : index
    %150 = vector.load %arg12[%c0_74, %c288] : memref<8x768xf32, #tpu.memory_space<vmem>>, vector<8x256xf32>
    %c14_i32_75 = arith.constant 14 : i32
    %151 = vector.broadcast %c14_i32_75 : i32 to vector<1x256xi32>
    %152 = arith.cmpi slt, %0, %151 : vector<1x256xi32>
    %cst_76 = arith.constant 0.000000e+00 : f32
    %153 = vector.shape_cast %152 : vector<1x256xi1> to vector<1x256xi1>
    %154 = vector.broadcast %153 : vector<1x256xi1> to vector<8x256xi1>
    %155 = vector.broadcast %cst_76 : f32 to vector<8x256xf32>
    %156 = arith.select %154, %150, %155 : vector<8x256xi1>, vector<8x256xf32>
    %c0_77 = arith.constant 0 : index
    %c290 = arith.constant 290 : index
    %157 = vector.load %arg12[%c0_77, %c290] : memref<8x768xf32, #tpu.memory_space<vmem>>, vector<8x256xf32>
    %c14_i32_78 = arith.constant 14 : i32
    %158 = vector.broadcast %c14_i32_78 : i32 to vector<1x256xi32>
    %159 = arith.cmpi slt, %0, %158 : vector<1x256xi32>
    %c14_i32_79 = arith.constant 14 : i32
    %160 = vector.broadcast %c14_i32_79 : i32 to vector<1x256xi32>
    %161 = arith.cmpi slt, %1, %160 : vector<1x256xi32>
    %162 = arith.andi %159, %161 : vector<1x256xi1>
    %cst_80 = arith.constant 0.000000e+00 : f32
    %163 = vector.shape_cast %162 : vector<1x256xi1> to vector<1x256xi1>
    %164 = vector.broadcast %163 : vector<1x256xi1> to vector<8x256xi1>
    %165 = vector.broadcast %cst_80 : f32 to vector<8x256xf32>
    %166 = arith.select %164, %157, %165 : vector<8x256xi1>, vector<8x256xf32>
    %167 = tpu.concatenate %108, %115, %125, %132, %97, %139, %149, %156, %166 in 0 : vector<8x256xf32>, vector<8x256xf32>, vector<8x256xf32>, vector<8x256xf32>, vector<8x256xf32>, vector<8x256xf32>, vector<8x256xf32>, vector<8x256xf32>, vector<8x256xf32> -> vector<72x256xf32>
    %c1_81 = arith.constant 1 : index
    %c0_82 = arith.constant 0 : index
    %c0_83 = arith.constant 0 : index
    %168 = vector.load %arg5[%c1_81, %c0_82, %c0_83] : memref<5x8x72xf32, #tpu.memory_space<vmem>>, vector<1x8x72xf32>
    %169 = vector.shape_cast %168 : vector<1x8x72xf32> to vector<8x72xf32>
    %cst_84 = arith.constant dense<0.000000e+00> : vector<8x256xf32>
    %170 = tpu.matmul %169, %167, %cst_84 {dimension_numbers = #tpu.dot_dimension_numbers<[1], [0], [0], [1], [0, 0, 1, 1], [], []>} : vector<8x72xf32>, vector<72x256xf32>, vector<8x256xf32> -> vector<8x256xf32>
    %c1_85 = arith.constant 1 : index
    %c0_86 = arith.constant 0 : index
    %c0_87 = arith.constant 0 : index
    %171 = vector.load %arg6[%c1_85, %c0_86, %c0_87] : memref<5x8x1xf32, #tpu.memory_space<vmem>>, vector<1x8x1xf32>
    %172 = vector.shape_cast %171 : vector<1x8x1xf32> to vector<8x1xf32>
    %173 = vector.broadcast %172 : vector<8x1xf32> to vector<8x256xf32>
    %174 = arith.addf %170, %173 : vector<8x256xf32>
    %cst_88 = arith.constant 0.000000e+00 : f32
    %175 = vector.broadcast %cst_88 : f32 to vector<8x256xf32>
    %176 = arith.maximumf %174, %175 : vector<8x256xf32>
    %c1_89 = arith.constant 1 : index
    %c0_90 = arith.constant 0 : index
    %c0_91 = arith.constant 0 : index
    %177 = vector.load %arg7[%c1_89, %c0_90, %c0_91] : memref<5x8x8xf32, #tpu.memory_space<vmem>>, vector<1x8x8xf32>
    %178 = vector.shape_cast %177 : vector<1x8x8xf32> to vector<8x8xf32>
    %cst_92 = arith.constant dense<0.000000e+00> : vector<8x256xf32>
    %179 = tpu.matmul %178, %176, %cst_92 {dimension_numbers = #tpu.dot_dimension_numbers<[1], [0], [0], [1], [0, 0, 1, 1], [], []>} : vector<8x8xf32>, vector<8x256xf32>, vector<8x256xf32> -> vector<8x256xf32>
    %180 = arith.addf %96, %179 : vector<8x256xf32>
    %181 = arith.addf %97, %176 : vector<8x256xf32>
    %c0_93 = arith.constant 0 : index
    %c256_94 = arith.constant 256 : index
    %182 = vector.load %arg12[%c0_93, %c256_94] : memref<8x768xf32, #tpu.memory_space<vmem>>, vector<8x256xf32>
    tpu.vector_store %arg12[%c0_93, %c256_94], %181 {strides = array<i32>} : memref<8x768xf32, #tpu.memory_space<vmem>>, vector<8x256xf32>,
    %c0_95 = arith.constant 0 : index
    %c188 = arith.constant 188 : index
    %183 = vector.load %arg12[%c0_95, %c188] : memref<8x768xf32, #tpu.memory_space<vmem>>, vector<8x256xf32>
    %c4_i32 = arith.constant 4 : i32
    %184 = vector.broadcast %c4_i32 : i32 to vector<1x256xi32>
    %185 = arith.cmpi sge, %0, %184 : vector<1x256xi32>
    %c4_i32_96 = arith.constant 4 : i32
    %186 = vector.broadcast %c4_i32_96 : i32 to vector<1x256xi32>
    %187 = arith.cmpi sge, %1, %186 : vector<1x256xi32>
    %188 = arith.andi %185, %187 : vector<1x256xi1>
    %cst_97 = arith.constant 0.000000e+00 : f32
    %189 = vector.shape_cast %188 : vector<1x256xi1> to vector<1x256xi1>
    %190 = vector.broadcast %189 : vector<1x256xi1> to vector<8x256xi1>
    %191 = vector.broadcast %cst_97 : f32 to vector<8x256xf32>
    %192 = arith.select %190, %183, %191 : vector<8x256xi1>, vector<8x256xf32>
    %c0_98 = arith.constant 0 : index
    %c192 = arith.constant 192 : index
    %193 = vector.load %arg12[%c0_98, %c192] : memref<8x768xf32, #tpu.memory_space<vmem>>, vector<8x256xf32>
    %c4_i32_99 = arith.constant 4 : i32
    %194 = vector.broadcast %c4_i32_99 : i32 to vector<1x256xi32>
    %195 = arith.cmpi sge, %0, %194 : vector<1x256xi32>
    %cst_100 = arith.constant 0.000000e+00 : f32
    %196 = vector.shape_cast %195 : vector<1x256xi1> to vector<1x256xi1>
    %197 = vector.broadcast %196 : vector<1x256xi1> to vector<8x256xi1>
    %198 = vector.broadcast %cst_100 : f32 to vector<8x256xf32>
    %199 = arith.select %197, %193, %198 : vector<8x256xi1>, vector<8x256xf32>
    %c0_101 = arith.constant 0 : index
    %c196 = arith.constant 196 : index
    %200 = vector.load %arg12[%c0_101, %c196] : memref<8x768xf32, #tpu.memory_space<vmem>>, vector<8x256xf32>
    %c4_i32_102 = arith.constant 4 : i32
    %201 = vector.broadcast %c4_i32_102 : i32 to vector<1x256xi32>
    %202 = arith.cmpi sge, %0, %201 : vector<1x256xi32>
    %c12_i32 = arith.constant 12 : i32
    %203 = vector.broadcast %c12_i32 : i32 to vector<1x256xi32>
    %204 = arith.cmpi slt, %1, %203 : vector<1x256xi32>
    %205 = arith.andi %202, %204 : vector<1x256xi1>
    %cst_103 = arith.constant 0.000000e+00 : f32
    %206 = vector.shape_cast %205 : vector<1x256xi1> to vector<1x256xi1>
    %207 = vector.broadcast %206 : vector<1x256xi1> to vector<8x256xi1>
    %208 = vector.broadcast %cst_103 : f32 to vector<8x256xf32>
    %209 = arith.select %207, %200, %208 : vector<8x256xi1>, vector<8x256xf32>
    %c0_104 = arith.constant 0 : index
    %c252 = arith.constant 252 : index
    %210 = vector.load %arg12[%c0_104, %c252] : memref<8x768xf32, #tpu.memory_space<vmem>>, vector<8x256xf32>
    %c4_i32_105 = arith.constant 4 : i32
    %211 = vector.broadcast %c4_i32_105 : i32 to vector<1x256xi32>
    %212 = arith.cmpi sge, %1, %211 : vector<1x256xi32>
    %cst_106 = arith.constant 0.000000e+00 : f32
    %213 = vector.shape_cast %212 : vector<1x256xi1> to vector<1x256xi1>
    %214 = vector.broadcast %213 : vector<1x256xi1> to vector<8x256xi1>
    %215 = vector.broadcast %cst_106 : f32 to vector<8x256xf32>
    %216 = arith.select %214, %210, %215 : vector<8x256xi1>, vector<8x256xf32>
    %c0_107 = arith.constant 0 : index
    %c260 = arith.constant 260 : index
    %217 = vector.load %arg12[%c0_107, %c260] : memref<8x768xf32, #tpu.memory_space<vmem>>, vector<8x256xf32>
    %c12_i32_108 = arith.constant 12 : i32
    %218 = vector.broadcast %c12_i32_108 : i32 to vector<1x256xi32>
    %219 = arith.cmpi slt, %1, %218 : vector<1x256xi32>
    %cst_109 = arith.constant 0.000000e+00 : f32
    %220 = vector.shape_cast %219 : vector<1x256xi1> to vector<1x256xi1>
    %221 = vector.broadcast %220 : vector<1x256xi1> to vector<8x256xi1>
    %222 = vector.broadcast %cst_109 : f32 to vector<8x256xf32>
    %223 = arith.select %221, %217, %222 : vector<8x256xi1>, vector<8x256xf32>
    %c0_110 = arith.constant 0 : index
    %c316 = arith.constant 316 : index
    %224 = vector.load %arg12[%c0_110, %c316] : memref<8x768xf32, #tpu.memory_space<vmem>>, vector<8x256xf32>
    %c12_i32_111 = arith.constant 12 : i32
    %225 = vector.broadcast %c12_i32_111 : i32 to vector<1x256xi32>
    %226 = arith.cmpi slt, %0, %225 : vector<1x256xi32>
    %c4_i32_112 = arith.constant 4 : i32
    %227 = vector.broadcast %c4_i32_112 : i32 to vector<1x256xi32>
    %228 = arith.cmpi sge, %1, %227 : vector<1x256xi32>
    %229 = arith.andi %226, %228 : vector<1x256xi1>
    %cst_113 = arith.constant 0.000000e+00 : f32
    %230 = vector.shape_cast %229 : vector<1x256xi1> to vector<1x256xi1>
    %231 = vector.broadcast %230 : vector<1x256xi1> to vector<8x256xi1>
    %232 = vector.broadcast %cst_113 : f32 to vector<8x256xf32>
    %233 = arith.select %231, %224, %232 : vector<8x256xi1>, vector<8x256xf32>
    %c0_114 = arith.constant 0 : index
    %c320 = arith.constant 320 : index
    %234 = vector.load %arg12[%c0_114, %c320] : memref<8x768xf32, #tpu.memory_space<vmem>>, vector<8x256xf32>
    %c12_i32_115 = arith.constant 12 : i32
    %235 = vector.broadcast %c12_i32_115 : i32 to vector<1x256xi32>
    %236 = arith.cmpi slt, %0, %235 : vector<1x256xi32>
    %cst_116 = arith.constant 0.000000e+00 : f32
    %237 = vector.shape_cast %236 : vector<1x256xi1> to vector<1x256xi1>
    %238 = vector.broadcast %237 : vector<1x256xi1> to vector<8x256xi1>
    %239 = vector.broadcast %cst_116 : f32 to vector<8x256xf32>
    %240 = arith.select %238, %234, %239 : vector<8x256xi1>, vector<8x256xf32>
    %c0_117 = arith.constant 0 : index
    %c324 = arith.constant 324 : index
    %241 = vector.load %arg12[%c0_117, %c324] : memref<8x768xf32, #tpu.memory_space<vmem>>, vector<8x256xf32>
    %c12_i32_118 = arith.constant 12 : i32
    %242 = vector.broadcast %c12_i32_118 : i32 to vector<1x256xi32>
    %243 = arith.cmpi slt, %0, %242 : vector<1x256xi32>
    %c12_i32_119 = arith.constant 12 : i32
    %244 = vector.broadcast %c12_i32_119 : i32 to vector<1x256xi32>
    %245 = arith.cmpi slt, %1, %244 : vector<1x256xi32>
    %246 = arith.andi %243, %245 : vector<1x256xi1>
    %cst_120 = arith.constant 0.000000e+00 : f32
    %247 = vector.shape_cast %246 : vector<1x256xi1> to vector<1x256xi1>
    %248 = vector.broadcast %247 : vector<1x256xi1> to vector<8x256xi1>
    %249 = vector.broadcast %cst_120 : f32 to vector<8x256xf32>
    %250 = arith.select %248, %241, %249 : vector<8x256xi1>, vector<8x256xf32>
    %251 = tpu.concatenate %192, %199, %209, %216, %181, %223, %233, %240, %250 in 0 : vector<8x256xf32>, vector<8x256xf32>, vector<8x256xf32>, vector<8x256xf32>, vector<8x256xf32>, vector<8x256xf32>, vector<8x256xf32>, vector<8x256xf32>, vector<8x256xf32> -> vector<72x256xf32>
    %c2 = arith.constant 2 : index
    %c0_121 = arith.constant 0 : index
    %c0_122 = arith.constant 0 : index
    %252 = vector.load %arg5[%c2, %c0_121, %c0_122] : memref<5x8x72xf32, #tpu.memory_space<vmem>>, vector<1x8x72xf32>
    %253 = vector.shape_cast %252 : vector<1x8x72xf32> to vector<8x72xf32>
    %cst_123 = arith.constant dense<0.000000e+00> : vector<8x256xf32>
    %254 = tpu.matmul %253, %251, %cst_123 {dimension_numbers = #tpu.dot_dimension_numbers<[1], [0], [0], [1], [0, 0, 1, 1], [], []>} : vector<8x72xf32>, vector<72x256xf32>, vector<8x256xf32> -> vector<8x256xf32>
    %c2_124 = arith.constant 2 : index
    %c0_125 = arith.constant 0 : index
    %c0_126 = arith.constant 0 : index
    %255 = vector.load %arg6[%c2_124, %c0_125, %c0_126] : memref<5x8x1xf32, #tpu.memory_space<vmem>>, vector<1x8x1xf32>
    %256 = vector.shape_cast %255 : vector<1x8x1xf32> to vector<8x1xf32>
    %257 = vector.broadcast %256 : vector<8x1xf32> to vector<8x256xf32>
    %258 = arith.addf %254, %257 : vector<8x256xf32>
    %cst_127 = arith.constant 0.000000e+00 : f32
    %259 = vector.broadcast %cst_127 : f32 to vector<8x256xf32>
    %260 = arith.maximumf %258, %259 : vector<8x256xf32>
    %c2_128 = arith.constant 2 : index
    %c0_129 = arith.constant 0 : index
    %c0_130 = arith.constant 0 : index
    %261 = vector.load %arg7[%c2_128, %c0_129, %c0_130] : memref<5x8x8xf32, #tpu.memory_space<vmem>>, vector<1x8x8xf32>
    %262 = vector.shape_cast %261 : vector<1x8x8xf32> to vector<8x8xf32>
    %cst_131 = arith.constant dense<0.000000e+00> : vector<8x256xf32>
    %263 = tpu.matmul %262, %260, %cst_131 {dimension_numbers = #tpu.dot_dimension_numbers<[1], [0], [0], [1], [0, 0, 1, 1], [], []>} : vector<8x8xf32>, vector<8x256xf32>, vector<8x256xf32> -> vector<8x256xf32>
    %264 = arith.addf %180, %263 : vector<8x256xf32>
    %265 = arith.addf %181, %260 : vector<8x256xf32>
    %c0_132 = arith.constant 0 : index
    %c256_133 = arith.constant 256 : index
    %266 = vector.load %arg12[%c0_132, %c256_133] : memref<8x768xf32, #tpu.memory_space<vmem>>, vector<8x256xf32>
    tpu.vector_store %arg12[%c0_132, %c256_133], %265 {strides = array<i32>} : memref<8x768xf32, #tpu.memory_space<vmem>>, vector<8x256xf32>,
    %c0_134 = arith.constant 0 : index
    %c154 = arith.constant 154 : index
    %267 = vector.load %arg12[%c0_134, %c154] : memref<8x768xf32, #tpu.memory_space<vmem>>, vector<8x256xf32>
    %c6_i32 = arith.constant 6 : i32
    %268 = vector.broadcast %c6_i32 : i32 to vector<1x256xi32>
    %269 = arith.cmpi sge, %0, %268 : vector<1x256xi32>
    %c6_i32_135 = arith.constant 6 : i32
    %270 = vector.broadcast %c6_i32_135 : i32 to vector<1x256xi32>
    %271 = arith.cmpi sge, %1, %270 : vector<1x256xi32>
    %272 = arith.andi %269, %271 : vector<1x256xi1>
    %cst_136 = arith.constant 0.000000e+00 : f32
    %273 = vector.shape_cast %272 : vector<1x256xi1> to vector<1x256xi1>
    %274 = vector.broadcast %273 : vector<1x256xi1> to vector<8x256xi1>
    %275 = vector.broadcast %cst_136 : f32 to vector<8x256xf32>
    %276 = arith.select %274, %267, %275 : vector<8x256xi1>, vector<8x256xf32>
    %c0_137 = arith.constant 0 : index
    %c160 = arith.constant 160 : index
    %277 = vector.load %arg12[%c0_137, %c160] : memref<8x768xf32, #tpu.memory_space<vmem>>, vector<8x256xf32>
    %c6_i32_138 = arith.constant 6 : i32
    %278 = vector.broadcast %c6_i32_138 : i32 to vector<1x256xi32>
    %279 = arith.cmpi sge, %0, %278 : vector<1x256xi32>
    %cst_139 = arith.constant 0.000000e+00 : f32
    %280 = vector.shape_cast %279 : vector<1x256xi1> to vector<1x256xi1>
    %281 = vector.broadcast %280 : vector<1x256xi1> to vector<8x256xi1>
    %282 = vector.broadcast %cst_139 : f32 to vector<8x256xf32>
    %283 = arith.select %281, %277, %282 : vector<8x256xi1>, vector<8x256xf32>
    %c0_140 = arith.constant 0 : index
    %c166 = arith.constant 166 : index
    %284 = vector.load %arg12[%c0_140, %c166] : memref<8x768xf32, #tpu.memory_space<vmem>>, vector<8x256xf32>
    %c6_i32_141 = arith.constant 6 : i32
    %285 = vector.broadcast %c6_i32_141 : i32 to vector<1x256xi32>
    %286 = arith.cmpi sge, %0, %285 : vector<1x256xi32>
    %c10_i32 = arith.constant 10 : i32
    %287 = vector.broadcast %c10_i32 : i32 to vector<1x256xi32>
    %288 = arith.cmpi slt, %1, %287 : vector<1x256xi32>
    %289 = arith.andi %286, %288 : vector<1x256xi1>
    %cst_142 = arith.constant 0.000000e+00 : f32
    %290 = vector.shape_cast %289 : vector<1x256xi1> to vector<1x256xi1>
    %291 = vector.broadcast %290 : vector<1x256xi1> to vector<8x256xi1>
    %292 = vector.broadcast %cst_142 : f32 to vector<8x256xf32>
    %293 = arith.select %291, %284, %292 : vector<8x256xi1>, vector<8x256xf32>
    %c0_143 = arith.constant 0 : index
    %c250 = arith.constant 250 : index
    %294 = vector.load %arg12[%c0_143, %c250] : memref<8x768xf32, #tpu.memory_space<vmem>>, vector<8x256xf32>
    %c6_i32_144 = arith.constant 6 : i32
    %295 = vector.broadcast %c6_i32_144 : i32 to vector<1x256xi32>
    %296 = arith.cmpi sge, %1, %295 : vector<1x256xi32>
    %cst_145 = arith.constant 0.000000e+00 : f32
    %297 = vector.shape_cast %296 : vector<1x256xi1> to vector<1x256xi1>
    %298 = vector.broadcast %297 : vector<1x256xi1> to vector<8x256xi1>
    %299 = vector.broadcast %cst_145 : f32 to vector<8x256xf32>
    %300 = arith.select %298, %294, %299 : vector<8x256xi1>, vector<8x256xf32>
    %c0_146 = arith.constant 0 : index
    %c262 = arith.constant 262 : index
    %301 = vector.load %arg12[%c0_146, %c262] : memref<8x768xf32, #tpu.memory_space<vmem>>, vector<8x256xf32>
    %c10_i32_147 = arith.constant 10 : i32
    %302 = vector.broadcast %c10_i32_147 : i32 to vector<1x256xi32>
    %303 = arith.cmpi slt, %1, %302 : vector<1x256xi32>
    %cst_148 = arith.constant 0.000000e+00 : f32
    %304 = vector.shape_cast %303 : vector<1x256xi1> to vector<1x256xi1>
    %305 = vector.broadcast %304 : vector<1x256xi1> to vector<8x256xi1>
    %306 = vector.broadcast %cst_148 : f32 to vector<8x256xf32>
    %307 = arith.select %305, %301, %306 : vector<8x256xi1>, vector<8x256xf32>
    %c0_149 = arith.constant 0 : index
    %c346 = arith.constant 346 : index
    %308 = vector.load %arg12[%c0_149, %c346] : memref<8x768xf32, #tpu.memory_space<vmem>>, vector<8x256xf32>
    %c10_i32_150 = arith.constant 10 : i32
    %309 = vector.broadcast %c10_i32_150 : i32 to vector<1x256xi32>
    %310 = arith.cmpi slt, %0, %309 : vector<1x256xi32>
    %c6_i32_151 = arith.constant 6 : i32
    %311 = vector.broadcast %c6_i32_151 : i32 to vector<1x256xi32>
    %312 = arith.cmpi sge, %1, %311 : vector<1x256xi32>
    %313 = arith.andi %310, %312 : vector<1x256xi1>
    %cst_152 = arith.constant 0.000000e+00 : f32
    %314 = vector.shape_cast %313 : vector<1x256xi1> to vector<1x256xi1>
    %315 = vector.broadcast %314 : vector<1x256xi1> to vector<8x256xi1>
    %316 = vector.broadcast %cst_152 : f32 to vector<8x256xf32>
    %317 = arith.select %315, %308, %316 : vector<8x256xi1>, vector<8x256xf32>
    %c0_153 = arith.constant 0 : index
    %c352 = arith.constant 352 : index
    %318 = vector.load %arg12[%c0_153, %c352] : memref<8x768xf32, #tpu.memory_space<vmem>>, vector<8x256xf32>
    %c10_i32_154 = arith.constant 10 : i32
    %319 = vector.broadcast %c10_i32_154 : i32 to vector<1x256xi32>
    %320 = arith.cmpi slt, %0, %319 : vector<1x256xi32>
    %cst_155 = arith.constant 0.000000e+00 : f32
    %321 = vector.shape_cast %320 : vector<1x256xi1> to vector<1x256xi1>
    %322 = vector.broadcast %321 : vector<1x256xi1> to vector<8x256xi1>
    %323 = vector.broadcast %cst_155 : f32 to vector<8x256xf32>
    %324 = arith.select %322, %318, %323 : vector<8x256xi1>, vector<8x256xf32>
    %c0_156 = arith.constant 0 : index
    %c358 = arith.constant 358 : index
    %325 = vector.load %arg12[%c0_156, %c358] : memref<8x768xf32, #tpu.memory_space<vmem>>, vector<8x256xf32>
    %c10_i32_157 = arith.constant 10 : i32
    %326 = vector.broadcast %c10_i32_157 : i32 to vector<1x256xi32>
    %327 = arith.cmpi slt, %0, %326 : vector<1x256xi32>
    %c10_i32_158 = arith.constant 10 : i32
    %328 = vector.broadcast %c10_i32_158 : i32 to vector<1x256xi32>
    %329 = arith.cmpi slt, %1, %328 : vector<1x256xi32>
    %330 = arith.andi %327, %329 : vector<1x256xi1>
    %cst_159 = arith.constant 0.000000e+00 : f32
    %331 = vector.shape_cast %330 : vector<1x256xi1> to vector<1x256xi1>
    %332 = vector.broadcast %331 : vector<1x256xi1> to vector<8x256xi1>
    %333 = vector.broadcast %cst_159 : f32 to vector<8x256xf32>
    %334 = arith.select %332, %325, %333 : vector<8x256xi1>, vector<8x256xf32>
    %335 = tpu.concatenate %276, %283, %293, %300, %265, %307, %317, %324, %334 in 0 : vector<8x256xf32>, vector<8x256xf32>, vector<8x256xf32>, vector<8x256xf32>, vector<8x256xf32>, vector<8x256xf32>, vector<8x256xf32>, vector<8x256xf32>, vector<8x256xf32> -> vector<72x256xf32>
    %c3 = arith.constant 3 : index
    %c0_160 = arith.constant 0 : index
    %c0_161 = arith.constant 0 : index
    %336 = vector.load %arg5[%c3, %c0_160, %c0_161] : memref<5x8x72xf32, #tpu.memory_space<vmem>>, vector<1x8x72xf32>
    %337 = vector.shape_cast %336 : vector<1x8x72xf32> to vector<8x72xf32>
    %cst_162 = arith.constant dense<0.000000e+00> : vector<8x256xf32>
    %338 = tpu.matmul %337, %335, %cst_162 {dimension_numbers = #tpu.dot_dimension_numbers<[1], [0], [0], [1], [0, 0, 1, 1], [], []>} : vector<8x72xf32>, vector<72x256xf32>, vector<8x256xf32> -> vector<8x256xf32>
    %c3_163 = arith.constant 3 : index
    %c0_164 = arith.constant 0 : index
    %c0_165 = arith.constant 0 : index
    %339 = vector.load %arg6[%c3_163, %c0_164, %c0_165] : memref<5x8x1xf32, #tpu.memory_space<vmem>>, vector<1x8x1xf32>
    %340 = vector.shape_cast %339 : vector<1x8x1xf32> to vector<8x1xf32>
    %341 = vector.broadcast %340 : vector<8x1xf32> to vector<8x256xf32>
    %342 = arith.addf %338, %341 : vector<8x256xf32>
    %cst_166 = arith.constant 0.000000e+00 : f32
    %343 = vector.broadcast %cst_166 : f32 to vector<8x256xf32>
    %344 = arith.maximumf %342, %343 : vector<8x256xf32>
    %c3_167 = arith.constant 3 : index
    %c0_168 = arith.constant 0 : index
    %c0_169 = arith.constant 0 : index
    %345 = vector.load %arg7[%c3_167, %c0_168, %c0_169] : memref<5x8x8xf32, #tpu.memory_space<vmem>>, vector<1x8x8xf32>
    %346 = vector.shape_cast %345 : vector<1x8x8xf32> to vector<8x8xf32>
    %cst_170 = arith.constant dense<0.000000e+00> : vector<8x256xf32>
    %347 = tpu.matmul %346, %344, %cst_170 {dimension_numbers = #tpu.dot_dimension_numbers<[1], [0], [0], [1], [0, 0, 1, 1], [], []>} : vector<8x8xf32>, vector<8x256xf32>, vector<8x256xf32> -> vector<8x256xf32>
    %348 = arith.addf %264, %347 : vector<8x256xf32>
    %349 = arith.addf %265, %344 : vector<8x256xf32>
    %c0_171 = arith.constant 0 : index
    %c256_172 = arith.constant 256 : index
    %350 = vector.load %arg12[%c0_171, %c256_172] : memref<8x768xf32, #tpu.memory_space<vmem>>, vector<8x256xf32>
    tpu.vector_store %arg12[%c0_171, %c256_172], %349 {strides = array<i32>} : memref<8x768xf32, #tpu.memory_space<vmem>>, vector<8x256xf32>,
    %c0_173 = arith.constant 0 : index
    %c120 = arith.constant 120 : index
    %351 = vector.load %arg12[%c0_173, %c120] : memref<8x768xf32, #tpu.memory_space<vmem>>, vector<8x256xf32>
    %c8_i32 = arith.constant 8 : i32
    %352 = vector.broadcast %c8_i32 : i32 to vector<1x256xi32>
    %353 = arith.cmpi sge, %0, %352 : vector<1x256xi32>
    %c8_i32_174 = arith.constant 8 : i32
    %354 = vector.broadcast %c8_i32_174 : i32 to vector<1x256xi32>
    %355 = arith.cmpi sge, %1, %354 : vector<1x256xi32>
    %356 = arith.andi %353, %355 : vector<1x256xi1>
    %cst_175 = arith.constant 0.000000e+00 : f32
    %357 = vector.shape_cast %356 : vector<1x256xi1> to vector<1x256xi1>
    %358 = vector.broadcast %357 : vector<1x256xi1> to vector<8x256xi1>
    %359 = vector.broadcast %cst_175 : f32 to vector<8x256xf32>
    %360 = arith.select %358, %351, %359 : vector<8x256xi1>, vector<8x256xf32>
    %c0_176 = arith.constant 0 : index
    %c128 = arith.constant 128 : index
    %361 = vector.load %arg12[%c0_176, %c128] : memref<8x768xf32, #tpu.memory_space<vmem>>, vector<8x256xf32>
    %c8_i32_177 = arith.constant 8 : i32
    %362 = vector.broadcast %c8_i32_177 : i32 to vector<1x256xi32>
    %363 = arith.cmpi sge, %0, %362 : vector<1x256xi32>
    %cst_178 = arith.constant 0.000000e+00 : f32
    %364 = vector.shape_cast %363 : vector<1x256xi1> to vector<1x256xi1>
    %365 = vector.broadcast %364 : vector<1x256xi1> to vector<8x256xi1>
    %366 = vector.broadcast %cst_178 : f32 to vector<8x256xf32>
    %367 = arith.select %365, %361, %366 : vector<8x256xi1>, vector<8x256xf32>
    %c0_179 = arith.constant 0 : index
    %c136 = arith.constant 136 : index
    %368 = vector.load %arg12[%c0_179, %c136] : memref<8x768xf32, #tpu.memory_space<vmem>>, vector<8x256xf32>
    %c8_i32_180 = arith.constant 8 : i32
    %369 = vector.broadcast %c8_i32_180 : i32 to vector<1x256xi32>
    %370 = arith.cmpi sge, %0, %369 : vector<1x256xi32>
    %c8_i32_181 = arith.constant 8 : i32
    %371 = vector.broadcast %c8_i32_181 : i32 to vector<1x256xi32>
    %372 = arith.cmpi slt, %1, %371 : vector<1x256xi32>
    %373 = arith.andi %370, %372 : vector<1x256xi1>
    %cst_182 = arith.constant 0.000000e+00 : f32
    %374 = vector.shape_cast %373 : vector<1x256xi1> to vector<1x256xi1>
    %375 = vector.broadcast %374 : vector<1x256xi1> to vector<8x256xi1>
    %376 = vector.broadcast %cst_182 : f32 to vector<8x256xf32>
    %377 = arith.select %375, %368, %376 : vector<8x256xi1>, vector<8x256xf32>
    %c0_183 = arith.constant 0 : index
    %c248 = arith.constant 248 : index
    %378 = vector.load %arg12[%c0_183, %c248] : memref<8x768xf32, #tpu.memory_space<vmem>>, vector<8x256xf32>
    %c8_i32_184 = arith.constant 8 : i32
    %379 = vector.broadcast %c8_i32_184 : i32 to vector<1x256xi32>
    %380 = arith.cmpi sge, %1, %379 : vector<1x256xi32>
    %cst_185 = arith.constant 0.000000e+00 : f32
    %381 = vector.shape_cast %380 : vector<1x256xi1> to vector<1x256xi1>
    %382 = vector.broadcast %381 : vector<1x256xi1> to vector<8x256xi1>
    %383 = vector.broadcast %cst_185 : f32 to vector<8x256xf32>
    %384 = arith.select %382, %378, %383 : vector<8x256xi1>, vector<8x256xf32>
    %c0_186 = arith.constant 0 : index
    %c264 = arith.constant 264 : index
    %385 = vector.load %arg12[%c0_186, %c264] : memref<8x768xf32, #tpu.memory_space<vmem>>, vector<8x256xf32>
    %c8_i32_187 = arith.constant 8 : i32
    %386 = vector.broadcast %c8_i32_187 : i32 to vector<1x256xi32>
    %387 = arith.cmpi slt, %1, %386 : vector<1x256xi32>
    %cst_188 = arith.constant 0.000000e+00 : f32
    %388 = vector.shape_cast %387 : vector<1x256xi1> to vector<1x256xi1>
    %389 = vector.broadcast %388 : vector<1x256xi1> to vector<8x256xi1>
    %390 = vector.broadcast %cst_188 : f32 to vector<8x256xf32>
    %391 = arith.select %389, %385, %390 : vector<8x256xi1>, vector<8x256xf32>
    %c0_189 = arith.constant 0 : index
    %c376 = arith.constant 376 : index
    %392 = vector.load %arg12[%c0_189, %c376] : memref<8x768xf32, #tpu.memory_space<vmem>>, vector<8x256xf32>
    %c8_i32_190 = arith.constant 8 : i32
    %393 = vector.broadcast %c8_i32_190 : i32 to vector<1x256xi32>
    %394 = arith.cmpi slt, %0, %393 : vector<1x256xi32>
    %c8_i32_191 = arith.constant 8 : i32
    %395 = vector.broadcast %c8_i32_191 : i32 to vector<1x256xi32>
    %396 = arith.cmpi sge, %1, %395 : vector<1x256xi32>
    %397 = arith.andi %394, %396 : vector<1x256xi1>
    %cst_192 = arith.constant 0.000000e+00 : f32
    %398 = vector.shape_cast %397 : vector<1x256xi1> to vector<1x256xi1>
    %399 = vector.broadcast %398 : vector<1x256xi1> to vector<8x256xi1>
    %400 = vector.broadcast %cst_192 : f32 to vector<8x256xf32>
    %401 = arith.select %399, %392, %400 : vector<8x256xi1>, vector<8x256xf32>
    %c0_193 = arith.constant 0 : index
    %c384 = arith.constant 384 : index
    %402 = vector.load %arg12[%c0_193, %c384] : memref<8x768xf32, #tpu.memory_space<vmem>>, vector<8x256xf32>
    %c8_i32_194 = arith.constant 8 : i32
    %403 = vector.broadcast %c8_i32_194 : i32 to vector<1x256xi32>
    %404 = arith.cmpi slt, %0, %403 : vector<1x256xi32>
    %cst_195 = arith.constant 0.000000e+00 : f32
    %405 = vector.shape_cast %404 : vector<1x256xi1> to vector<1x256xi1>
    %406 = vector.broadcast %405 : vector<1x256xi1> to vector<8x256xi1>
    %407 = vector.broadcast %cst_195 : f32 to vector<8x256xf32>
    %408 = arith.select %406, %402, %407 : vector<8x256xi1>, vector<8x256xf32>
    %c0_196 = arith.constant 0 : index
    %c392 = arith.constant 392 : index
    %409 = vector.load %arg12[%c0_196, %c392] : memref<8x768xf32, #tpu.memory_space<vmem>>, vector<8x256xf32>
    %c8_i32_197 = arith.constant 8 : i32
    %410 = vector.broadcast %c8_i32_197 : i32 to vector<1x256xi32>
    %411 = arith.cmpi slt, %0, %410 : vector<1x256xi32>
    %c8_i32_198 = arith.constant 8 : i32
    %412 = vector.broadcast %c8_i32_198 : i32 to vector<1x256xi32>
    %413 = arith.cmpi slt, %1, %412 : vector<1x256xi32>
    %414 = arith.andi %411, %413 : vector<1x256xi1>
    %cst_199 = arith.constant 0.000000e+00 : f32
    %415 = vector.shape_cast %414 : vector<1x256xi1> to vector<1x256xi1>
    %416 = vector.broadcast %415 : vector<1x256xi1> to vector<8x256xi1>
    %417 = vector.broadcast %cst_199 : f32 to vector<8x256xf32>
    %418 = arith.select %416, %409, %417 : vector<8x256xi1>, vector<8x256xf32>
    %419 = tpu.concatenate %360, %367, %377, %384, %349, %391, %401, %408, %418 in 0 : vector<8x256xf32>, vector<8x256xf32>, vector<8x256xf32>, vector<8x256xf32>, vector<8x256xf32>, vector<8x256xf32>, vector<8x256xf32>, vector<8x256xf32>, vector<8x256xf32> -> vector<72x256xf32>
    %c4 = arith.constant 4 : index
    %c0_200 = arith.constant 0 : index
    %c0_201 = arith.constant 0 : index
    %420 = vector.load %arg5[%c4, %c0_200, %c0_201] : memref<5x8x72xf32, #tpu.memory_space<vmem>>, vector<1x8x72xf32>
    %421 = vector.shape_cast %420 : vector<1x8x72xf32> to vector<8x72xf32>
    %cst_202 = arith.constant dense<0.000000e+00> : vector<8x256xf32>
    %422 = tpu.matmul %421, %419, %cst_202 {dimension_numbers = #tpu.dot_dimension_numbers<[1], [0], [0], [1], [0, 0, 1, 1], [], []>} : vector<8x72xf32>, vector<72x256xf32>, vector<8x256xf32> -> vector<8x256xf32>
    %c4_203 = arith.constant 4 : index
    %c0_204 = arith.constant 0 : index
    %c0_205 = arith.constant 0 : index
    %423 = vector.load %arg6[%c4_203, %c0_204, %c0_205] : memref<5x8x1xf32, #tpu.memory_space<vmem>>, vector<1x8x1xf32>
    %424 = vector.shape_cast %423 : vector<1x8x1xf32> to vector<8x1xf32>
    %425 = vector.broadcast %424 : vector<8x1xf32> to vector<8x256xf32>
    %426 = arith.addf %422, %425 : vector<8x256xf32>
    %cst_206 = arith.constant 0.000000e+00 : f32
    %427 = vector.broadcast %cst_206 : f32 to vector<8x256xf32>
    %428 = arith.maximumf %426, %427 : vector<8x256xf32>
    %c4_207 = arith.constant 4 : index
    %c0_208 = arith.constant 0 : index
    %c0_209 = arith.constant 0 : index
    %429 = vector.load %arg7[%c4_207, %c0_208, %c0_209] : memref<5x8x8xf32, #tpu.memory_space<vmem>>, vector<1x8x8xf32>
    %430 = vector.shape_cast %429 : vector<1x8x8xf32> to vector<8x8xf32>
    %cst_210 = arith.constant dense<0.000000e+00> : vector<8x256xf32>
    %431 = tpu.matmul %430, %428, %cst_210 {dimension_numbers = #tpu.dot_dimension_numbers<[1], [0], [0], [1], [0, 0, 1, 1], [], []>} : vector<8x8xf32>, vector<8x256xf32>, vector<8x256xf32> -> vector<8x256xf32>
    %432 = arith.addf %348, %431 : vector<8x256xf32>
    %c0_211 = arith.constant 0 : index
    %c0_212 = arith.constant 0 : index
    %433 = vector.load %arg9[%c0_211, %c0_212] : memref<8x8xf32, #tpu.memory_space<vmem>>, vector<8x8xf32>
    %cst_213 = arith.constant dense<0.000000e+00> : vector<8x256xf32>
    %434 = tpu.matmul %433, %10, %cst_213 {dimension_numbers = #tpu.dot_dimension_numbers<[1], [0], [0], [1], [0, 0, 1, 1], [], []>} : vector<8x8xf32>, vector<8x256xf32>, vector<8x256xf32> -> vector<8x256xf32>
    %c0_214 = arith.constant 0 : index
    %c0_215 = arith.constant 0 : index
    %435 = vector.load %arg10[%c0_214, %c0_215] : memref<8x1xf32, #tpu.memory_space<vmem>>, vector<8x1xf32>
    %436 = vector.broadcast %435 : vector<8x1xf32> to vector<8x256xf32>
    %437 = arith.addf %434, %436 : vector<8x256xf32>
    %cst_216 = arith.constant 0.000000e+00 : f32
    %438 = vector.broadcast %cst_216 : f32 to vector<8x256xf32>
    %439 = arith.maximumf %437, %438 : vector<8x256xf32>
    %c0_217 = arith.constant 0 : index
    %c0_218 = arith.constant 0 : index
    %440 = vector.load %arg8[%c0_217, %c0_218] : memref<8x1xf32, #tpu.memory_space<vmem>>, vector<8x1xf32>
    %441 = vector.broadcast %440 : vector<8x1xf32> to vector<8x256xf32>
    %442 = arith.addf %432, %441 : vector<8x256xf32>
    %cst_219 = arith.constant 0.000000e+00 : f32
    %443 = vector.broadcast %cst_219 : f32 to vector<8x256xf32>
    %444 = arith.maximumf %442, %443 : vector<8x256xf32>
    %445 = arith.addf %444, %439 : vector<8x256xf32>
    %c0_220 = arith.constant 0 : index
    %c0_221 = arith.constant 0 : index
    %c0_222 = arith.constant 0 : index
    %446 = vector.load %arg11[%c0_220, %c0_221, %c0_222] : memref<1x8x256xf32, #tpu.memory_space<vmem>>, vector<1x8x256xf32>
    %447 = vector.shape_cast %446 : vector<1x8x256xf32> to vector<8x256xf32>
    %448 = vector.shape_cast %445 : vector<8x256xf32> to vector<1x8x256xf32>
    tpu.vector_store %arg11[%c0_220, %c0_221, %c0_222], %448 {strides = array<i32>} : memref<1x8x256xf32, #tpu.memory_space<vmem>>, vector<1x8x256xf32>,
    return
  }
  func.func @transform_0(%arg0: i32) -> (i32, i32, i32) {
    %c0_i32 = arith.constant 0 : i32
    %c0_i32_0 = arith.constant 0 : i32
    %c0_i32_1 = arith.constant 0 : i32
    return %arg0, %c0_i32, %c0_i32_0 : i32, i32, i32
  }
  func.func @transform_1(%arg0: i32) -> (i32, i32) {
    %c0_i32 = arith.constant 0 : i32
    %c0_i32_0 = arith.constant 0 : i32
    %c0_i32_1 = arith.constant 0 : i32
    return %c0_i32, %c0_i32_0 : i32, i32
  }
  func.func @transform_2(%arg0: i32) -> (i32, i32) {
    %c0_i32 = arith.constant 0 : i32
    %c0_i32_0 = arith.constant 0 : i32
    %c0_i32_1 = arith.constant 0 : i32
    return %c0_i32, %c0_i32_0 : i32, i32
  }
  func.func @transform_3(%arg0: i32) -> (i32, i32) {
    %c0_i32 = arith.constant 0 : i32
    %c0_i32_0 = arith.constant 0 : i32
    %c0_i32_1 = arith.constant 0 : i32
    return %c0_i32, %c0_i32_0 : i32, i32
  }
  func.func @transform_4(%arg0: i32) -> (i32, i32, i32) {
    %c0_i32 = arith.constant 0 : i32
    %c0_i32_0 = arith.constant 0 : i32
    %c0_i32_1 = arith.constant 0 : i32
    %c0_i32_2 = arith.constant 0 : i32
    return %c0_i32, %c0_i32_0, %c0_i32_1 : i32, i32, i32
  }
  func.func @transform_5(%arg0: i32) -> (i32, i32, i32) {
    %c0_i32 = arith.constant 0 : i32
    %c0_i32_0 = arith.constant 0 : i32
    %c0_i32_1 = arith.constant 0 : i32
    %c0_i32_2 = arith.constant 0 : i32
    return %c0_i32, %c0_i32_0, %c0_i32_1 : i32, i32, i32
  }
  func.func @transform_6(%arg0: i32) -> (i32, i32, i32) {
    %c0_i32 = arith.constant 0 : i32
    %c0_i32_0 = arith.constant 0 : i32
    %c0_i32_1 = arith.constant 0 : i32
    %c0_i32_2 = arith.constant 0 : i32
    return %c0_i32, %c0_i32_0, %c0_i32_1 : i32, i32, i32
  }
  func.func @transform_7(%arg0: i32) -> (i32, i32) {
    %c0_i32 = arith.constant 0 : i32
    %c0_i32_0 = arith.constant 0 : i32
    %c0_i32_1 = arith.constant 0 : i32
    return %c0_i32, %c0_i32_0 : i32, i32
  }
  func.func @transform_8(%arg0: i32) -> (i32, i32) {
    %c0_i32 = arith.constant 0 : i32
    %c0_i32_0 = arith.constant 0 : i32
    %c0_i32_1 = arith.constant 0 : i32
    return %c0_i32, %c0_i32_0 : i32, i32
  }
  func.func @transform_9(%arg0: i32) -> (i32, i32) {
    %c0_i32 = arith.constant 0 : i32
    %c0_i32_0 = arith.constant 0 : i32
    %c0_i32_1 = arith.constant 0 : i32
    return %c0_i32, %c0_i32_0 : i32, i32
  }
  func.func @transform_10(%arg0: i32) -> (i32, i32, i32) {
    %c0_i32 = arith.constant 0 : i32
    %c0_i32_0 = arith.constant 0 : i32
    %c0_i32_1 = arith.constant 0 : i32
    return %arg0, %c0_i32, %c0_i32_0 : i32, i32, i32
  }
}

</mosaic_0001>

<llo_original>
// kernel: sprm_forward.1
$region0: #{sprm_forward.1}
  #allocation0 [shape = 'u32[]', space=smem, size = 0x4, offset = 0x4, fixed_abs, tag = 'smem constant byte address 0x4 - core index']
  #allocation1 [shape = 'u32[144,128]{1,0:T(1,128)}', space=vmem, size = 0x12000, scoped, tag = 'internal scratch']
  #allocation2 [shape = 'f32[8,768]{1,0:T(8,128)}', space=vmem, size = 0x6000, scoped, tag = 'scratch operand']
  %s0 = inlined_call_operand.vmem [shape: f32[2,4,256], index: 0, kind: input, shape index: {}]
  %s1 = inlined_call_operand.vmem [shape: s32[2,256], index: 1, kind: input, shape index: {}]
  %s2 = inlined_call_operand.vmem [shape: f32[8,4], index: 2, kind: input, shape index: {}]
  %s3 = inlined_call_operand.vmem [shape: f32[8,1], index: 3, kind: input, shape index: {}]
  %s4 = inlined_call_operand.vmem [shape: f32[5,8,72], index: 4, kind: input, shape index: {}]
  %s5 = inlined_call_operand.vmem [shape: f32[5,8,1], index: 5, kind: input, shape index: {}]
  %s6 = inlined_call_operand.vmem [shape: f32[5,8,8], index: 6, kind: input, shape index: {}]
  %s7 = inlined_call_operand.vmem [shape: f32[8,1], index: 7, kind: input, shape index: {}]
  %s8 = inlined_call_operand.vmem [shape: f32[8,8], index: 8, kind: input, shape index: {}]
  %s9 = inlined_call_operand.vmem [shape: f32[8,1], index: 9, kind: input, shape index: {}]
  %s10 = inlined_call_operand.vmem [shape: f32[2,8,256], index: 10, kind: output, shape index: {}]
  %s11 = sld [smem:[#allocation0]]
  $region73: #{sprm_forward.1} parent=0
    _
  %s13 = ssub.s32 1, %s11
  %s14 = scalar_select 0, %s13, %s11
  loop: start=0, step=1, limit=4
  $region2: #{sprm_forward.1} parent=0 // loop_pre_header
    _
  $region3: #{sprm_forward.1} parent=0 // loop_header
    %s16 = sphi 0, %s20
    %p17 = scmp.ge.s32.totalorder %s16, 4
    %s26 = sphi 0, %s28
    %s29 = sphi 0, %s26
    %s30 = sphi 0, %s29
    %s46 = sphi 0, %s30
    %s50 = sphi 0, %s50
    %s52 = sphi 0, %s50
    %s53 = sphi 0, %s52
    %s67 = sphi 0, %s53
    %s71 = sphi 0, %s71
    %s73 = sphi 0, %s71
    %s74 = sphi 0, %s73
    %s88 = sphi 0, %s74
    %s92 = sphi 0, %s92
    %s94 = sphi 0, %s92
    %s95 = sphi 0, %s94
    %s109 = sphi 0, %s95
    %s113 = sphi 0, %s113
    %s115 = sphi 0, %s113
    %s116 = sphi 0, %s115
    %s130 = sphi 0, %s116
    %s134 = sphi 0, %s134
    %s136 = sphi 0, %s134
    %s137 = sphi 0, %s136
    %s151 = sphi 0, %s137
    %s155 = sphi 0, %s155
    %s157 = sphi 0, %s155
    %s158 = sphi 0, %s157
    %s172 = sphi 0, %s158
    %s176 = sphi 0, %s176
    %s178 = sphi 0, %s176
    %s179 = sphi 0, %s178
    %s193 = sphi 0, %s179
    %s197 = sphi 0, %s197
    %s199 = sphi 0, %s197
    %s200 = sphi 0, %s199
    %s214 = sphi 0, %s200
    %s218 = sphi 0, %s218
    %s220 = sphi 0, %s218
    %s221 = sphi 0, %s220
    %s235 = sphi 0, %s221
    %s241 = sphi 0, %s243
    %s244 = sphi 0, %s241
    %s245 = sphi 0, %s244
    %s261 = sphi 0, %s245
  $region4: #{sprm_forward.1} parent=0 // loop_header_branch
    %19 = sbr.rel (%p17) target = $region8
  $region5: #{sprm_forward.1} parent=0 // loop_body
    %s21 = ssub.s32 %s16, 1
    %s22 = ssub.s32 %s16, 2
    %s23 = sadd.s32 %s16, 1
    %s24 = ssub.s32 %s16, %s23
    %p25 = scmp.eq.s32.totalorder %s24, 0
    %s27 = sadd.s32 %s26, 1
    %s28 = scalar_select %p25, %s26, %s27
    %p31 = pneg %p25
    %p32 = scmp.eq.s32.totalorder %s16, 1
    %p33 = por %p31, %p32
    %p34 = scmp.ne.s32.totalorder %s26, %s29
    %p35 = scmp.eq.s32.totalorder %s16, 0
    %p36 = por %p34, %p35
    %p37 = scmp.ne.s32.totalorder %s26, %s29
    %p38 = scmp.eq.s32.totalorder %s21, 1
    %p39 = por %p37, %p38
    %p40 = scmp.ne.s32.totalorder %s29, %s30
    %p41 = scmp.eq.s32.totalorder %s21, 0
    %p42 = por %p40, %p41
    %p43 = scmp.ne.s32.totalorder %s29, %s30
    %p44 = scmp.eq.s32.totalorder %s22, 1
    %p45 = por %p43, %p44
    %p47 = scmp.ne.s32.totalorder %s30, %s46
    %p48 = scmp.eq.s32.totalorder %s22, 0
    %p49 = por %p47, %p48
    %s51 = sadd.s32 %s50, 1
    %p54 = scmp.eq.s32.totalorder %s16, 1
    %p55 = scmp.ne.s32.totalorder %s50, %s52
    %p56 = scmp.eq.s32.totalorder %s16, 0
    %p57 = por %p55, %p56
    %p58 = scmp.ne.s32.totalorder %s50, %s52
    %p59 = scmp.eq.s32.totalorder %s21, 1
    %p60 = por %p58, %p59
    %p61 = scmp.ne.s32.totalorder %s52, %s53
    %p62 = scmp.eq.s32.totalorder %s21, 0
    %p63 = por %p61, %p62
    %p64 = scmp.ne.s32.totalorder %s52, %s53
    %p65 = scmp.eq.s32.totalorder %s22, 1
    %p66 = por %p64, %p65
    %p68 = scmp.ne.s32.totalorder %s53, %s67
    %p69 = scmp.eq.s32.totalorder %s22, 0
    %p70 = por %p68, %p69
    %s72 = sadd.s32 %s71, 1
    %p75 = scmp.eq.s32.totalorder %s16, 1
    %p76 = scmp.ne.s32.totalorder %s71, %s73
    %p77 = scmp.eq.s32.totalorder %s16, 0
    %p78 = por %p76, %p77
    %p79 = scmp.ne.s32.totalorder %s71, %s73
    %p80 = scmp.eq.s32.totalorder %s21, 1
    %p81 = por %p79, %p80
    %p82 = scmp.ne.s32.totalorder %s73, %s74
    %p83 = scmp.eq.s32.totalorder %s21, 0
    %p84 = por %p82, %p83
    %p85 = scmp.ne.s32.totalorder %s73, %s74
    %p86 = scmp.eq.s32.totalorder %s22, 1
    %p87 = por %p85, %p86
    %p89 = scmp.ne.s32.totalorder %s74, %s88
    %p90 = scmp.eq.s32.totalorder %s22, 0
    %p91 = por %p89, %p90
    %s93 = sadd.s32 %s92, 1
    %p96 = scmp.eq.s32.totalorder %s16, 1
    %p97 = scmp.ne.s32.totalorder %s92, %s94
    %p98 = scmp.eq.s32.totalorder %s16, 0
    %p99 = por %p97, %p98
    %p100 = scmp.ne.s32.totalorder %s92, %s94
    %p101 = scmp.eq.s32.totalorder %s21, 1
    %p102 = por %p100, %p101
    %p103 = scmp.ne.s32.totalorder %s94, %s95
    %p104 = scmp.eq.s32.totalorder %s21, 0
    %p105 = por %p103, %p104
    %p106 = scmp.ne.s32.totalorder %s94, %s95
    %p107 = scmp.eq.s32.totalorder %s22, 1
    %p108 = por %p106, %p107
    %p110 = scmp.ne.s32.totalorder %s95, %s109
    %p111 = scmp.eq.s32.totalorder %s22, 0
    %p112 = por %p110, %p111
    %s114 = sadd.s32 %s113, 1
    %p117 = scmp.eq.s32.totalorder %s16, 1
    %p118 = scmp.ne.s32.totalorder %s113, %s115
    %p119 = scmp.eq.s32.totalorder %s16, 0
    %p120 = por %p118, %p119
    %p121 = scmp.ne.s32.totalorder %s113, %s115
    %p122 = scmp.eq.s32.totalorder %s21, 1
    %p123 = por %p121, %p122
    %p124 = scmp.ne.s32.totalorder %s115, %s116
    %p125 = scmp.eq.s32.totalorder %s21, 0
    %p126 = por %p124, %p125
    %p127 = scmp.ne.s32.totalorder %s115, %s116
    %p128 = scmp.eq.s32.totalorder %s22, 1
    %p129 = por %p127, %p128
    %p131 = scmp.ne.s32.totalorder %s116, %s130
    %p132 = scmp.eq.s32.totalorder %s22, 0
    %p133 = por %p131, %p132
    %s135 = sadd.s32 %s134, 1
    %p138 = scmp.eq.s32.totalorder %s16, 1
    %p139 = scmp.ne.s32.totalorder %s134, %s136
    %p140 = scmp.eq.s32.totalorder %s16, 0
    %p141 = por %p139, %p140
    %p142 = scmp.ne.s32.totalorder %s134, %s136
    %p143 = scmp.eq.s32.totalorder %s21, 1
    %p144 = por %p142, %p143
    %p145 = scmp.ne.s32.totalorder %s136, %s137
    %p146 = scmp.eq.s32.totalorder %s21, 0
    %p147 = por %p145, %p146
    %p148 = scmp.ne.s32.totalorder %s136, %s137
    %p149 = scmp.eq.s32.totalorder %s22, 1
    %p150 = por %p148, %p149
    %p152 = scmp.ne.s32.totalorder %s137, %s151
    %p153 = scmp.eq.s32.totalorder %s22, 0
    %p154 = por %p152, %p153
    %s156 = sadd.s32 %s155, 1
    %p159 = scmp.eq.s32.totalorder %s16, 1
    %p160 = scmp.ne.s32.totalorder %s155, %s157
    %p161 = scmp.eq.s32.totalorder %s16, 0
    %p162 = por %p160, %p161
    %p163 = scmp.ne.s32.totalorder %s155, %s157
    %p164 = scmp.eq.s32.totalorder %s21, 1
    %p165 = por %p163, %p164
    %p166 = scmp.ne.s32.totalorder %s157, %s158
    %p167 = scmp.eq.s32.totalorder %s21, 0
    %p168 = por %p166, %p167
    %p169 = scmp.ne.s32.totalorder %s157, %s158
    %p170 = scmp.eq.s32.totalorder %s22, 1
    %p171 = por %p169, %p170
    %p173 = scmp.ne.s32.totalorder %s158, %s172
    %p174 = scmp.eq.s32.totalorder %s22, 0
    %p175 = por %p173, %p174
    %s177 = sadd.s32 %s176, 1
    %p180 = scmp.eq.s32.totalorder %s16, 1
    %p181 = scmp.ne.s32.totalorder %s176, %s178
    %p182 = scmp.eq.s32.totalorder %s16, 0
    %p183 = por %p181, %p182
    %p184 = scmp.ne.s32.totalorder %s176, %s178
    %p185 = scmp.eq.s32.totalorder %s21, 1
    %p186 = por %p184, %p185
    %p187 = scmp.ne.s32.totalorder %s178, %s179
    %p188 = scmp.eq.s32.totalorder %s21, 0
    %p189 = por %p187, %p188
    %p190 = scmp.ne.s32.totalorder %s178, %s179
    %p191 = scmp.eq.s32.totalorder %s22, 1
    %p192 = por %p190, %p191
    %p194 = scmp.ne.s32.totalorder %s179, %s193
    %p195 = scmp.eq.s32.totalorder %s22, 0
    %p196 = por %p194, %p195
    %s198 = sadd.s32 %s197, 1
    %p201 = scmp.eq.s32.totalorder %s16, 1
    %p202 = scmp.ne.s32.totalorder %s197, %s199
    %p203 = scmp.eq.s32.totalorder %s16, 0
    %p204 = por %p202, %p203
    %p205 = scmp.ne.s32.totalorder %s197, %s199
    %p206 = scmp.eq.s32.totalorder %s21, 1
    %p207 = por %p205, %p206
    %p208 = scmp.ne.s32.totalorder %s199, %s200
    %p209 = scmp.eq.s32.totalorder %s21, 0
    %p210 = por %p208, %p209
    %p211 = scmp.ne.s32.totalorder %s199, %s200
    %p212 = scmp.eq.s32.totalorder %s22, 1
    %p213 = por %p211, %p212
    %p215 = scmp.ne.s32.totalorder %s200, %s214
    %p216 = scmp.eq.s32.totalorder %s22, 0
    %p217 = por %p215, %p216
    %s219 = sadd.s32 %s218, 1
    %p222 = scmp.eq.s32.totalorder %s16, 1
    %p223 = scmp.ne.s32.totalorder %s218, %s220
    %p224 = scmp.eq.s32.totalorder %s16, 0
    %p225 = por %p223, %p224
    %p226 = scmp.ne.s32.totalorder %s218, %s220
    %p227 = scmp.eq.s32.totalorder %s21, 1
    %p228 = por %p226, %p227
    %p229 = scmp.ne.s32.totalorder %s220, %s221
    %p230 = scmp.eq.s32.totalorder %s21, 0
    %p231 = por %p229, %p230
    %p232 = scmp.ne.s32.totalorder %s220, %s221
    %p233 = scmp.eq.s32.totalorder %s22, 1
    %p234 = por %p232, %p233
    %p236 = scmp.ne.s32.totalorder %s221, %s235
    %p237 = scmp.eq.s32.totalorder %s22, 0
    %p238 = por %p236, %p237
    %s239 = ssub.s32 %s16, %s23
    %p240 = scmp.eq.s32.totalorder %s239, 0
    %s242 = sadd.s32 %s241, 1
    %s243 = scalar_select %p240, %s241, %s242
    %p246 = pneg %p240
    %p247 = scmp.eq.s32.totalorder %s16, 1
    %p248 = por %p246, %p247
    %p249 = scmp.ne.s32.totalorder %s241, %s244
    %p250 = scmp.eq.s32.totalorder %s16, 0
    %p251 = por %p249, %p250
    %p252 = scmp.ne.s32.totalorder %s241, %s244
    %p253 = scmp.eq.s32.totalorder %s21, 1
    %p254 = por %p252, %p253
    %p255 = scmp.ne.s32.totalorder %s244, %s245
    %p256 = scmp.eq.s32.totalorder %s21, 0
    %p257 = por %p255, %p256
    %p258 = scmp.ne.s32.totalorder %s244, %s245
    %p259 = scmp.eq.s32.totalorder %s22, 1
    %p260 = por %p258, %p259
    %p262 = scmp.ne.s32.totalorder %s245, %s261
    %p263 = scmp.eq.s32.totalorder %s22, 0
    %p264 = por %p262, %p263
    %p265 = scmp.le.s32.totalorder 1, %s16
    %p266 = scmp.lt.s32.totalorder %s16, 3
    %p267 = pnand %p265, %p266
    %p268 = pneg %p267
    // Predicated region
    $region9: #{sprm_forward.1} parent=5 // pred_check
      _
    $region10: #{sprm_forward.1} parent=5 // pred_check_branch
      %270 = sbr.rel (%p267) target = $region12
    $region11: #{sprm_forward.1} parent=5 // pred_region
      %s271 = ssub.s32 %s16, 1
      // Predicated region
      $region13: #{sprm_forward.1} parent=11 // pred_check
        %p272 = pneg %p63
      $region14: #{sprm_forward.1} parent=11 // pred_check_branch
        %274 = sbr.rel (%p272) target = $region16
      $region15: #{sprm_forward.1} parent=11 // pred_region
        _
      $region16: #{sprm_forward.1} parent=11 // pred_fallthru
        _
      // Predicated region
      $region17: #{sprm_forward.1} parent=11 // pred_check
        %p275 = pneg %p84
      $region18: #{sprm_forward.1} parent=11 // pred_check_branch
        %277 = sbr.rel (%p275) target = $region20
      $region19: #{sprm_forward.1} parent=11 // pred_region
        _
      $region20: #{sprm_forward.1} parent=11 // pred_fallthru
        _
      // Predicated region
      $region21: #{sprm_forward.1} parent=11 // pred_check
        %p278 = pneg %p105
      $region22: #{sprm_forward.1} parent=11 // pred_check_branch
        %280 = sbr.rel (%p278) target = $region24
      $region23: #{sprm_forward.1} parent=11 // pred_region
        _
      $region24: #{sprm_forward.1} parent=11 // pred_fallthru
        _
      // Predicated region
      $region25: #{sprm_forward.1} parent=11 // pred_check
        %p281 = pneg %p126
      $region26: #{sprm_forward.1} parent=11 // pred_check_branch
        %283 = sbr.rel (%p281) target = $region28
      $region27: #{sprm_forward.1} parent=11 // pred_region
        _
      $region28: #{sprm_forward.1} parent=11 // pred_fallthru
        _
      // Predicated region
      $region29: #{sprm_forward.1} parent=11 // pred_check
        %p284 = pneg %p147
      $region30: #{sprm_forward.1} parent=11 // pred_check_branch
        %286 = sbr.rel (%p284) target = $region32
      $region31: #{sprm_forward.1} parent=11 // pred_region
        _
      $region32: #{sprm_forward.1} parent=11 // pred_fallthru
        _
      // Predicated region
      $region33: #{sprm_forward.1} parent=11 // pred_check
        %p287 = pneg %p168
      $region34: #{sprm_forward.1} parent=11 // pred_check_branch
        %289 = sbr.rel (%p287) target = $region36
      $region35: #{sprm_forward.1} parent=11 // pred_region
        _
      $region36: #{sprm_forward.1} parent=11 // pred_fallthru
        _
      // Predicated region
      $region37: #{sprm_forward.1} parent=11 // pred_check
        %p290 = pneg %p189
      $region38: #{sprm_forward.1} parent=11 // pred_check_branch
        %292 = sbr.rel (%p290) target = $region40
      $region39: #{sprm_forward.1} parent=11 // pred_region
        _
      $region40: #{sprm_forward.1} parent=11 // pred_fallthru
        _
      // Predicated region
      $region41: #{sprm_forward.1} parent=11 // pred_check
        %p293 = pneg %p210
      $region42: #{sprm_forward.1} parent=11 // pred_check_branch
        %295 = sbr.rel (%p293) target = $region44
      $region43: #{sprm_forward.1} parent=11 // pred_region
        _
      $region44: #{sprm_forward.1} parent=11 // pred_fallthru
        _
      // Predicated region
      $region45: #{sprm_forward.1} parent=11 // pred_check
        %p296 = pneg %p231
      $region46: #{sprm_forward.1} parent=11 // pred_check_branch
        %298 = sbr.rel (%p296) target = $region48
      $region47: #{sprm_forward.1} parent=11 // pred_region
        _
      $region48: #{sprm_forward.1} parent=11 // pred_fallthru
        _
    $region12: #{sprm_forward.1} parent=5 // pred_fallthru
      _
    %p299 = scmp.lt.s32.totalorder %s16, 2
    // Predicated region
    $region49: #{sprm_forward.1} parent=5 // pred_check
      %p300 = pneg %p299
    $region50: #{sprm_forward.1} parent=5 // pred_check_branch
      %302 = sbr.rel (%p300) target = $region52
    $region51: #{sprm_forward.1} parent=5 // pred_region
      // Predicated region
      $region53: #{sprm_forward.1} parent=51 // pred_check
        %p303 = pneg %p36
      $region54: #{sprm_forward.1} parent=51 // pred_check_branch
        %305 = sbr.rel (%p303) target = $region56
      $region55: #{sprm_forward.1} parent=51 // pred_region
        %p306 = scmp.lt.s32.totalorder %s16, 1
        %s307 = scalar_select %p306, %s16, 1
        %s308 = smul.addr %s307, 2
        %s309 = smul.addr %s308, 4
        %s310 = scalar_lea.vmem %s0, %s309
      $region56: #{sprm_forward.1} parent=51 // pred_fallthru
        _
    $region52: #{sprm_forward.1} parent=5 // pred_fallthru
      _
    %p311 = scmp.le.s32.totalorder 1, %s16
    %p312 = scmp.lt.s32.totalorder %s16, 3
    %p313 = pnand %p311, %p312
    %p314 = pneg %p313
    // Predicated region
    $region57: #{sprm_forward.1} parent=5 // pred_check
      _
    $region58: #{sprm_forward.1} parent=5 // pred_check_branch
      %316 = sbr.rel (%p313) target = $region60
    $region59: #{sprm_forward.1} parent=5 // pred_region
      %s317 = ssub.s32 %s16, 1
      %p318 = scmp.lt.s32.totalorder %s21, 1
      %s319 = scalar_select %p318, %s21, 1
      %s320 = smul.addr %s319, 2
      %s321 = smul.addr %s320, 4
      %s322 = scalar_lea.vmem %s0, %s321
      %p323 = pneg %p42
      %p324 = pneg %p39
      %p325 = pneg %p63
      %p326 = pneg %p60
      %p327 = pneg %p84
      %p328 = pneg %p81
      %p329 = pneg %p105
      %p330 = pneg %p102
      %p331 = pneg %p126
      %p332 = pneg %p123
      %p333 = pneg %p147
      %p334 = pneg %p144
      %p335 = pneg %p168
      %p336 = pneg %p165
      %p337 = pneg %p189
      %p338 = pneg %p186
      %p339 = pneg %p210
      %p340 = pneg %p207
      %p341 = pneg %p231
      %p342 = pneg %p228
      %p343 = pneg %p257
      %p344 = pneg %p254
      %p345 = scmp.lt.s32.totalorder %s21, 1
      %s346 = scalar_select %p345, %s21, 1
      %s347 = smul.addr %s346, 2
      %s348 = smul.addr %s347, 8
      %s349 = scalar_lea.vmem %s10, %s348
      %p350 = scmp.lt.s32.totalorder %s21, 1
      %s351 = scalar_select %p350, %s21, 1
      %s352 = smul.addr %s351, 2
      %s353 = smul.addr %s352, 4
      %s354 = scalar_lea.vmem %s0, %s353
      %p355 = scmp.lt.s32.totalorder %s21, 1
      %s356 = scalar_select %p355, %s21, 1
      %s357 = smul.addr %s356, 2
      %s358 = smul.addr %s357, 8
      %s359 = scalar_lea.vmem %s10, %s358
      %v360 = vld [vmem:[%s1] ss:$2 sm:$0x3]
      %s361 = scalar_lea.vmem %s1, 1
      %v362 = vld [vmem:[%s361] ss:$2 sm:$0x3]
      %v363 = vld [vmem:[%s354] sm:$0xff]
      %v364 = vld [vmem:[%s2] sm:$0xff]
      %v365 = vld [vmem:[%s3] sm:$0xff]
      %367 = vset.pattern.permute.xlu0 0
      %368 = vperm.xlu0 %367, %v365
      %v369 = vpop.permute.xlu0 %368
      %v372 = vcombine.high %v363, %v363
      %vm373 = vcmask 31744
      %v375 = vsel %vm373, %v364, 0
      %vm377 = vcmask 1043456
      %v378 = vsel %vm377, %v363, 0
      %v380 = vsel %vm377, %v372, 0
      %382 = vmatprep.subr.mxu0 %v380
      %383 = vmatpush1.msra.mxu0 %v378
      %384 = vmatprep.subr.mxu0 0.0
      %385 = vmatpush1.msra.mxu0 0.0
      %386 = vmatprep.subr.mxu0 0.0
      %387 = vmatpush1.msra.mxu0 0.0
      %388 = vmatprep.subr.mxu0 0.0
      %389 = vmatpush1.msra.mxu0 0.0
      %390 = vmatprep.subr.mxu0 0.0
      %391 = vmatpush1.msra.mxu0 0.0
      %392 = vmatprep.subr.mxu0 0.0
      %393 = vmatpush1.msra.mxu0 0.0
      %394 = vmatprep.subr.mxu0 0.0
      %395 = vmatpush1.msra.mxu0 0.0
      %396 = vmatprep.subr.mxu0 0.0
      %397 = vmatpush1.msra.mxu0 0.0
      %398 = vmatprep.subr.mxu0 0.0
      %399 = vmatpush1.msra.mxu0 0.0
      %400 = vmatprep.subr.mxu0 0.0
      %401 = vmatpush1.msra.mxu0 0.0
      %402 = vmatprep.subr.mxu0 0.0
      %403 = vmatpush1.msra.mxu0 0.0
      %404 = vmatprep.subr.mxu0 0.0
      %405 = vmatpush1.msra.mxu0 0.0
      %406 = vmatprep.subr.mxu0 0.0
      %407 = vmatpush1.msra.mxu0 0.0
      %408 = vmatprep.subr.mxu0 0.0
      %409 = vmatpush1.msra.mxu0 0.0
      %410 = vmatprep.subr.mxu0 0.0
      %411 = vmatpush1.msra.mxu0 0.0
      %412 = vmatprep.subr.mxu0 0.0
      %413 = vmatpush1.msra.mxu0 0.0
      %414 = vmatprep.subr.mxu0 0.0
      %415 = vmatpush1.msra.mxu0 0.0
      %416 = vmatprep.subr.mxu0 0.0
      %417 = vmatpush1.msra.mxu0 0.0
      %418 = vmatprep.subr.mxu0 0.0
      %419 = vmatpush1.msra.mxu0 0.0
      %420 = vmatprep.subr.mxu0 0.0
      %421 = vmatpush1.msra.mxu0 0.0
      %422 = vmatprep.subr.mxu0 0.0
      %423 = vmatpush1.msra.mxu0 0.0
      %424 = vmatprep.subr.mxu0 0.0
      %425 = vmatpush1.msra.mxu0 0.0
      %426 = vmatprep.subr.mxu0 0.0
      %427 = vmatpush1.msra.mxu0 0.0
      %428 = vmatprep.subr.mxu0 0.0
      %429 = vmatpush1.msra.mxu0 0.0
      %430 = vmatprep.subr.mxu0 0.0
      %431 = vmatpush1.msra.mxu0 0.0
      %432 = vmatprep.subr.mxu0 0.0
      %433 = vmatpush1.msra.mxu0 0.0
      %434 = vmatprep.subr.mxu0 0.0
      %435 = vmatpush1.msra.mxu0 0.0
      %436 = vmatprep.subr.mxu0 0.0
      %437 = vmatpush1.msra.mxu0 0.0
      %438 = vmatprep.subr.mxu0 0.0
      %439 = vmatpush1.msra.mxu0 0.0
      %440 = vmatprep.subr.mxu0 0.0
      %441 = vmatpush1.msra.mxu0 0.0
      %442 = vmatprep.subr.mxu0 0.0
      %443 = vmatpush1.msra.mxu0 0.0
      %444 = vmatprep.subr.mxu0 0.0
      %445 = vmatpush1.msra.mxu0 0.0
      %446 = vmatprep.mubr.f32.mxu0 0.0
      %447 = vmatmul.mubr.f32.gmra.mrb[0].mxu0 %v375
      %v448 = vpop.f32.mrb[0].mxu0
      %v449 = vadd.f32 %v369, %v448
      %v450 = vpop.f32.mrb[0].mxu0
      %v451 = vadd.f32 %v369, %v450
      %452 = vdwg.mxu0
      %v453 = vmax.f32 %v449, 0.0
      %v454 = vmax.f32 %v451, 0.0
      %455 = vst [vmem:[#allocation2] sm:$0xff] 0.0
      %456 = vst [vmem:[#allocation2 + $0x8] sm:$0xff] 0.0
      %457 = vst [vmem:[#allocation2 + $0x10] sm:$0xff] 0.0
      %458 = vst [vmem:[#allocation2 + $0x18] sm:$0xff] 0.0
      %459 = vst [vmem:[#allocation2 + $0x20] sm:$0xff] 0.0
      %460 = vst [vmem:[#allocation2 + $0x28] sm:$0xff] 0.0
      %461 = vst [vmem:[#allocation2 + $0x10] sm:$0xff] %v453
      %462 = vst [vmem:[#allocation2 + $0x18] sm:$0xff] %v454
      %v463 = vld [vmem:[#allocation2 + $0x8] sm:$0xff]
      %v464 = vld [vmem:[#allocation2 + $0x10] sm:$0xff]
      %v465 = vld [vmem:[#allocation2 + $0x18] sm:$0xff]
      %vm466 = vcmp.ge.s32.totalorder %v360, 1
      %vm467 = vcmp.ge.s32.totalorder %v362, 1
      %vm468 = vmand %vm466, %vm467
      %v469 = vsel %vm468, 1, 0
      %v470 = vlaneseq
      %v471 = vshrl.u32 %v470, 7
      %v472 = vsub.s32 0, %v471
      %v473 = vrot.slane %v469, %v472
      %v474 = vlaneseq
      %v475 = vshrl.u32 %v474, 7
      %v476 = vsub.s32 1, %v475
      %v477 = vrot.slane %v469, %v476
      %vm478 = vcmp.eq.s32.totalorder %v473, 1
      %vm479 = vcmp.eq.s32.totalorder %v477, 1
      %483 = vrot.lane.b32.xlu0 %v463, 17
      %v484 = vpop.permute.xlu0 %483
      %485 = vrot.lane.b32.xlu0 %v464, 17
      %v486 = vpop.permute.xlu0 %485
      %487 = vrot.lane.b32.xlu0 %v465, 17
      %v488 = vpop.permute.xlu0 %487
      %vm489 = vcmask 138240
      %v490 = vsel %vm489, %v484, %v486
      %v491 = vsel %vm489, %v486, %v488
      %v494 = vsel %vm478, %v490, 0.0
      %v495 = vsel %vm479, %v491, 0.0
      %v496 = vsel %vm466, 1, 0
      %v497 = vlaneseq
      %v498 = vshrl.u32 %v497, 7
      %v499 = vsub.s32 0, %v498
      %v500 = vrot.slane %v496, %v499
      %v501 = vlaneseq
      %v502 = vshrl.u32 %v501, 7
      %v503 = vsub.s32 1, %v502
      %v504 = vrot.slane %v496, %v503
      %vm505 = vcmp.eq.s32.totalorder %v500, 1
      %vm506 = vcmp.eq.s32.totalorder %v504, 1
      %507 = vrot.lane.b32.xlu0 %v463, 16
      %v508 = vpop.permute.xlu0 %507
      %509 = vrot.lane.b32.xlu0 %v464, 16
      %v510 = vpop.permute.xlu0 %509
      %511 = vrot.lane.b32.xlu0 %v465, 16
      %v512 = vpop.permute.xlu0 %511
      %vm513 = vcmask 130048
      %v514 = vsel %vm513, %v508, %v510
      %v515 = vsel %vm513, %v510, %v512
      %v518 = vsel %vm505, %v514, 0.0
      %v519 = vsel %vm506, %v515, 0.0
      %vm520 = vcmp.lt.s32.totalorder %v362, 15
      %vm521 = vmand %vm466, %vm520
      %v522 = vsel %vm521, 1, 0
      %v523 = vlaneseq
      %v524 = vshrl.u32 %v523, 7
      %v525 = vsub.s32 0, %v524
      %v526 = vrot.slane %v522, %v525
      %v527 = vlaneseq
      %v528 = vshrl.u32 %v527, 7
      %v529 = vsub.s32 1, %v528
      %v530 = vrot.slane %v522, %v529
      %vm531 = vcmp.eq.s32.totalorder %v526, 1
      %vm532 = vcmp.eq.s32.totalorder %v530, 1
      %533 = vrot.lane.b32.xlu0 %v463, 15
      %v534 = vpop.permute.xlu0 %533
      %535 = vrot.lane.b32.xlu0 %v464, 15
      %v536 = vpop.permute.xlu0 %535
      %537 = vrot.lane.b32.xlu0 %v465, 15
      %v538 = vpop.permute.xlu0 %537
      %vm539 = vcmask 121856
      %v540 = vsel %vm539, %v534, %v536
      %v541 = vsel %vm539, %v536, %v538
      %v544 = vsel %vm531, %v540, 0.0
      %v545 = vsel %vm532, %v541, 0.0
      %v546 = vsel %vm467, 1, 0
      %v547 = vlaneseq
      %v548 = vshrl.u32 %v547, 7
      %v549 = vsub.s32 0, %v548
      %v550 = vrot.slane %v546, %v549
      %v551 = vlaneseq
      %v552 = vshrl.u32 %v551, 7
      %v553 = vsub.s32 1, %v552
      %v554 = vrot.slane %v546, %v553
      %vm555 = vcmp.eq.s32.totalorder %v550, 1
      %vm556 = vcmp.eq.s32.totalorder %v554, 1
      %557 = vrot.lane.b32.xlu0 %v463, 1
      %v558 = vpop.permute.xlu0 %557
      %559 = vrot.lane.b32.xlu0 %v464, 1
      %v560 = vpop.permute.xlu0 %559
      %561 = vrot.lane.b32.xlu0 %v465, 1
      %v562 = vpop.permute.xlu0 %561
      %vm563 = vcmask 7168
      %v564 = vsel %vm563, %v558, %v560
      %v565 = vsel %vm563, %v560, %v562
      %v568 = vsel %vm555, %v564, 0.0
      %v569 = vsel %vm556, %v565, 0.0
      %v570 = vld [vmem:[#allocation2 + $0x20] sm:$0xff]
      %v571 = vsel %vm520, 1, 0
      %v572 = vlaneseq
      %v573 = vshrl.u32 %v572, 7
      %v574 = vsub.s32 0, %v573
      %v575 = vrot.slane %v571, %v574
      %v576 = vlaneseq
      %v577 = vshrl.u32 %v576, 7
      %v578 = vsub.s32 1, %v577
      %v579 = vrot.slane %v571, %v578
      %vm580 = vcmp.eq.s32.totalorder %v575, 1
      %vm581 = vcmp.eq.s32.totalorder %v579, 1
      %583 = vrot.lane.b32.xlu0 %v464, 127
      %v584 = vpop.permute.xlu0 %583
      %585 = vrot.lane.b32.xlu0 %v465, 127
      %v586 = vpop.permute.xlu0 %585
      %587 = vrot.lane.b32.xlu0 %v570, 127
      %v588 = vpop.permute.xlu0 %587
      %vm589 = vcmask 1039360
      %v590 = vsel %vm589, %v584, %v586
      %v591 = vsel %vm589, %v586, %v588
      %v594 = vsel %vm580, %v590, 0.0
      %v595 = vsel %vm581, %v591, 0.0
      %vm596 = vcmp.lt.s32.totalorder %v360, 15
      %vm597 = vmand %vm596, %vm467
      %v598 = vsel %vm597, 1, 0
      %v599 = vlaneseq
      %v600 = vshrl.u32 %v599, 7
      %v601 = vsub.s32 0, %v600
      %v602 = vrot.slane %v598, %v601
      %v603 = vlaneseq
      %v604 = vshrl.u32 %v603, 7
      %v605 = vsub.s32 1, %v604
      %v606 = vrot.slane %v598, %v605
      %vm607 = vcmp.eq.s32.totalorder %v602, 1
      %vm608 = vcmp.eq.s32.totalorder %v606, 1
      %609 = vrot.lane.b32.xlu0 %v464, 113
      %v610 = vpop.permute.xlu0 %609
      %611 = vrot.lane.b32.xlu0 %v465, 113
      %v612 = vpop.permute.xlu0 %611
      %613 = vrot.lane.b32.xlu0 %v570, 113
      %v614 = vpop.permute.xlu0 %613
      %vm615 = vcmask 924672
      %v616 = vsel %vm615, %v610, %v612
      %v617 = vsel %vm615, %v612, %v614
      %v620 = vsel %vm607, %v616, 0.0
      %v621 = vsel %vm608, %v617, 0.0
      %v622 = vsel %vm596, 1, 0
      %v623 = vlaneseq
      %v624 = vshrl.u32 %v623, 7
      %v625 = vsub.s32 0, %v624
      %v626 = vrot.slane %v622, %v625
      %v627 = vlaneseq
      %v628 = vshrl.u32 %v627, 7
      %v629 = vsub.s32 1, %v628
      %v630 = vrot.slane %v622, %v629
      %vm631 = vcmp.eq.s32.totalorder %v626, 1
      %vm632 = vcmp.eq.s32.totalorder %v630, 1
      %633 = vrot.lane.b32.xlu0 %v464, 112
      %v634 = vpop.permute.xlu0 %633
      %635 = vrot.lane.b32.xlu0 %v465, 112
      %v636 = vpop.permute.xlu0 %635
      %637 = vrot.lane.b32.xlu0 %v570, 112
      %v638 = vpop.permute.xlu0 %637
      %vm639 = vcmask 916480
      %v640 = vsel %vm639, %v634, %v636
      %v641 = vsel %vm639, %v636, %v638
      %v644 = vsel %vm631, %v640, 0.0
      %v645 = vsel %vm632, %v641, 0.0
      %vm646 = vmand %vm596, %vm520
      %v647 = vsel %vm646, 1, 0
      %v648 = vlaneseq
      %v649 = vshrl.u32 %v648, 7
      %v650 = vsub.s32 0, %v649
      %v651 = vrot.slane %v647, %v650
      %v652 = vlaneseq
      %v653 = vshrl.u32 %v652, 7
      %v654 = vsub.s32 1, %v653
      %v655 = vrot.slane %v647, %v654
      %vm656 = vcmp.eq.s32.totalorder %v651, 1
      %vm657 = vcmp.eq.s32.totalorder %v655, 1
      %658 = vrot.lane.b32.xlu0 %v464, 111
      %v659 = vpop.permute.xlu0 %658
      %660 = vrot.lane.b32.xlu0 %v465, 111
      %v661 = vpop.permute.xlu0 %660
      %662 = vrot.lane.b32.xlu0 %v570, 111
      %v663 = vpop.permute.xlu0 %662
      %vm664 = vcmask 908288
      %v665 = vsel %vm664, %v659, %v661
      %v666 = vsel %vm664, %v661, %v663
      %v669 = vsel %vm656, %v665, 0.0
      %v670 = vsel %vm657, %v666, 0.0
      %v671 = vld [vmem:[%s4] sm:$0xff]
      %v672 = vld [vmem:[%s5] sm:$0xff]
      %674 = vset.pattern.permute.xlu0 0
      %675 = vperm.xlu0 %674, %v672
      %v676 = vpop.permute.xlu0 %675
      %vm678 = vcmask 588800
      %v680 = vsel %vm678, %v671, 0
      %682 = vmatprep.subr.mxu0 %v495
      %683 = vmatpush1.msra.mxu0 %v494
      %684 = vmatprep.subr.mxu0 %v519
      %685 = vmatpush1.msra.mxu0 %v518
      %686 = vmatprep.subr.mxu0 %v545
      %687 = vmatpush1.msra.mxu0 %v544
      %688 = vmatprep.subr.mxu0 %v569
      %689 = vmatpush1.msra.mxu0 %v568
      %690 = vmatprep.subr.mxu0 %v454
      %691 = vmatpush1.msra.mxu0 %v453
      %692 = vmatprep.subr.mxu0 %v595
      %693 = vmatpush1.msra.mxu0 %v594
      %694 = vmatprep.subr.mxu0 %v621
      %695 = vmatpush1.msra.mxu0 %v620
      %696 = vmatprep.subr.mxu0 %v645
      %697 = vmatpush1.msra.mxu0 %v644
      %698 = vmatprep.subr.mxu0 %v670
      %699 = vmatpush1.msra.mxu0 %v669
      %700 = vmatprep.subr.mxu0 0.0
      %701 = vmatpush1.msra.mxu0 0.0
      %702 = vmatprep.subr.mxu0 0.0
      %703 = vmatpush1.msra.mxu0 0.0
      %704 = vmatprep.subr.mxu0 0.0
      %705 = vmatpush1.msra.mxu0 0.0
      %706 = vmatprep.subr.mxu0 0.0
      %707 = vmatpush1.msra.mxu0 0.0
      %708 = vmatprep.subr.mxu0 0.0
      %709 = vmatpush1.msra.mxu0 0.0
      %710 = vmatprep.subr.mxu0 0.0
      %711 = vmatpush1.msra.mxu0 0.0
      %712 = vmatprep.subr.mxu0 0.0
      %713 = vmatpush1.msra.mxu0 0.0
      %714 = vmatprep.subr.mxu0 0.0
      %715 = vmatpush1.msra.mxu0 0.0
      %716 = vmatprep.subr.mxu0 0.0
      %717 = vmatpush1.msra.mxu0 0.0
      %718 = vmatprep.subr.mxu0 0.0
      %719 = vmatpush1.msra.mxu0 0.0
      %720 = vmatprep.subr.mxu0 0.0
      %721 = vmatpush1.msra.mxu0 0.0
      %722 = vmatprep.subr.mxu0 0.0
      %723 = vmatpush1.msra.mxu0 0.0
      %724 = vmatprep.subr.mxu0 0.0
      %725 = vmatpush1.msra.mxu0 0.0
      %726 = vmatprep.subr.mxu0 0.0
      %727 = vmatpush1.msra.mxu0 0.0
      %728 = vmatprep.subr.mxu0 0.0
      %729 = vmatpush1.msra.mxu0 0.0
      %730 = vmatprep.subr.mxu0 0.0
      %731 = vmatpush1.msra.mxu0 0.0
      %732 = vmatprep.subr.mxu0 0.0
      %733 = vmatpush1.msra.mxu0 0.0
      %734 = vmatprep.subr.mxu0 0.0
      %735 = vmatpush1.msra.mxu0 0.0
      %736 = vmatprep.subr.mxu0 0.0
      %737 = vmatpush1.msra.mxu0 0.0
      %738 = vmatprep.subr.mxu0 0.0
      %739 = vmatpush1.msra.mxu0 0.0
      %740 = vmatprep.subr.mxu0 0.0
      %741 = vmatpush1.msra.mxu0 0.0
      %742 = vmatprep.subr.mxu0 0.0
      %743 = vmatpush1.msra.mxu0 0.0
      %744 = vmatprep.subr.mxu0 0.0
      %745 = vmatpush1.msra.mxu0 0.0
      %746 = vmatprep.mubr.f32.mxu0 0.0
      %747 = vmatmul.mubr.f32.gmra.mrb[0].mxu0 %v680
      %v748 = vpop.f32.mrb[0].mxu0
      %v749 = vadd.f32 %v676, %v748
      %v750 = vpop.f32.mrb[0].mxu0
      %v751 = vadd.f32 %v676, %v750
      %752 = vdwg.mxu0
      %v753 = vmax.f32 %v749, 0.0
      %v754 = vmax.f32 %v751, 0.0
      %v755 = vld [vmem:[%s6] sm:$0xff]
      %v756 = vadd.f32 %v453, %v753
      %v757 = vadd.f32 %v454, %v754
      %758 = vst [vmem:[#allocation2 + $0x10] sm:$0xff] %v756
      %759 = vst [vmem:[#allocation2 + $0x18] sm:$0xff] %v757
      %v760 = vld [vmem:[#allocation2 + $0x8] sm:$0xff]
      %v761 = vld [vmem:[#allocation2 + $0x10] sm:$0xff]
      %v762 = vld [vmem:[#allocation2 + $0x18] sm:$0xff]
      %vm763 = vcmp.ge.s32.totalorder %v360, 2
      %vm764 = vcmp.ge.s32.totalorder %v362, 2
      %vm765 = vmand %vm763, %vm764
      %v766 = vsel %vm765, 1, 0
      %v767 = vlaneseq
      %v768 = vshrl.u32 %v767, 7
      %v769 = vsub.s32 0, %v768
      %v770 = vrot.slane %v766, %v769
      %v771 = vlaneseq
      %v772 = vshrl.u32 %v771, 7
      %v773 = vsub.s32 1, %v772
      %v774 = vrot.slane %v766, %v773
      %vm775 = vcmp.eq.s32.totalorder %v770, 1
      %vm776 = vcmp.eq.s32.totalorder %v774, 1
      %780 = vrot.lane.b32.xlu0 %v760, 34
      %v781 = vpop.permute.xlu0 %780
      %782 = vrot.lane.b32.xlu0 %v761, 34
      %v783 = vpop.permute.xlu0 %782
      %784 = vrot.lane.b32.xlu0 %v762, 34
      %v785 = vpop.permute.xlu0 %784
      %vm786 = vcmask 277504
      %v787 = vsel %vm786, %v781, %v783
      %v788 = vsel %vm786, %v783, %v785
      %v791 = vsel %vm775, %v787, 0.0
      %v792 = vsel %vm776, %v788, 0.0
      %v793 = vsel %vm763, 1, 0
      %v794 = vlaneseq
      %v795 = vshrl.u32 %v794, 7
      %v796 = vsub.s32 0, %v795
      %v797 = vrot.slane %v793, %v796
      %v798 = vlaneseq
      %v799 = vshrl.u32 %v798, 7
      %v800 = vsub.s32 1, %v799
      %v801 = vrot.slane %v793, %v800
      %vm802 = vcmp.eq.s32.totalorder %v797, 1
      %vm803 = vcmp.eq.s32.totalorder %v801, 1
      %804 = vrot.lane.b32.xlu0 %v760, 32
      %v805 = vpop.permute.xlu0 %804
      %806 = vrot.lane.b32.xlu0 %v761, 32
      %v807 = vpop.permute.xlu0 %806
      %808 = vrot.lane.b32.xlu0 %v762, 32
      %v809 = vpop.permute.xlu0 %808
      %vm810 = vcmask 261120
      %v811 = vsel %vm810, %v805, %v807
      %v812 = vsel %vm810, %v807, %v809
      %v815 = vsel %vm802, %v811, 0.0
      %v816 = vsel %vm803, %v812, 0.0
      %vm817 = vcmp.lt.s32.totalorder %v362, 14
      %vm818 = vmand %vm763, %vm817
      %v819 = vsel %vm818, 1, 0
      %v820 = vlaneseq
      %v821 = vshrl.u32 %v820, 7
      %v822 = vsub.s32 0, %v821
      %v823 = vrot.slane %v819, %v822
      %v824 = vlaneseq
      %v825 = vshrl.u32 %v824, 7
      %v826 = vsub.s32 1, %v825
      %v827 = vrot.slane %v819, %v826
      %vm828 = vcmp.eq.s32.totalorder %v823, 1
      %vm829 = vcmp.eq.s32.totalorder %v827, 1
      %830 = vrot.lane.b32.xlu0 %v760, 30
      %v831 = vpop.permute.xlu0 %830
      %832 = vrot.lane.b32.xlu0 %v761, 30
      %v833 = vpop.permute.xlu0 %832
      %834 = vrot.lane.b32.xlu0 %v762, 30
      %v835 = vpop.permute.xlu0 %834
      %vm836 = vcmask 244736
      %v837 = vsel %vm836, %v831, %v833
      %v838 = vsel %vm836, %v833, %v835
      %v841 = vsel %vm828, %v837, 0.0
      %v842 = vsel %vm829, %v838, 0.0
      %v843 = vsel %vm764, 1, 0
      %v844 = vlaneseq
      %v845 = vshrl.u32 %v844, 7
      %v846 = vsub.s32 0, %v845
      %v847 = vrot.slane %v843, %v846
      %v848 = vlaneseq
      %v849 = vshrl.u32 %v848, 7
      %v850 = vsub.s32 1, %v849
      %v851 = vrot.slane %v843, %v850
      %vm852 = vcmp.eq.s32.totalorder %v847, 1
      %vm853 = vcmp.eq.s32.totalorder %v851, 1
      %854 = vrot.lane.b32.xlu0 %v760, 2
      %v855 = vpop.permute.xlu0 %854
      %856 = vrot.lane.b32.xlu0 %v761, 2
      %v857 = vpop.permute.xlu0 %856
      %858 = vrot.lane.b32.xlu0 %v762, 2
      %v859 = vpop.permute.xlu0 %858
      %vm860 = vcmask 15360
      %v861 = vsel %vm860, %v855, %v857
      %v862 = vsel %vm860, %v857, %v859
      %v865 = vsel %vm852, %v861, 0.0
      %v866 = vsel %vm853, %v862, 0.0
      %v867 = vld [vmem:[#allocation2 + $0x20] sm:$0xff]
      %v868 = vsel %vm817, 1, 0
      %v869 = vlaneseq
      %v870 = vshrl.u32 %v869, 7
      %v871 = vsub.s32 0, %v870
      %v872 = vrot.slane %v868, %v871
      %v873 = vlaneseq
      %v874 = vshrl.u32 %v873, 7
      %v875 = vsub.s32 1, %v874
      %v876 = vrot.slane %v868, %v875
      %vm877 = vcmp.eq.s32.totalorder %v872, 1
      %vm878 = vcmp.eq.s32.totalorder %v876, 1
      %880 = vrot.lane.b32.xlu0 %v761, 126
      %v881 = vpop.permute.xlu0 %880
      %882 = vrot.lane.b32.xlu0 %v762, 126
      %v883 = vpop.permute.xlu0 %882
      %884 = vrot.lane.b32.xlu0 %v867, 126
      %v885 = vpop.permute.xlu0 %884
      %vm886 = vcmask 1031168
      %v887 = vsel %vm886, %v881, %v883
      %v888 = vsel %vm886, %v883, %v885
      %v891 = vsel %vm877, %v887, 0.0
      %v892 = vsel %vm878, %v888, 0.0
      %vm893 = vcmp.lt.s32.totalorder %v360, 14
      %vm894 = vmand %vm893, %vm764
      %v895 = vsel %vm894, 1, 0
      %v896 = vlaneseq
      %v897 = vshrl.u32 %v896, 7
      %v898 = vsub.s32 0, %v897
      %v899 = vrot.slane %v895, %v898
      %v900 = vlaneseq
      %v901 = vshrl.u32 %v900, 7
      %v902 = vsub.s32 1, %v901
      %v903 = vrot.slane %v895, %v902
      %vm904 = vcmp.eq.s32.totalorder %v899, 1
      %vm905 = vcmp.eq.s32.totalorder %v903, 1
      %906 = vrot.lane.b32.xlu0 %v761, 98
      %v907 = vpop.permute.xlu0 %906
      %908 = vrot.lane.b32.xlu0 %v762, 98
      %v909 = vpop.permute.xlu0 %908
      %910 = vrot.lane.b32.xlu0 %v867, 98
      %v911 = vpop.permute.xlu0 %910
      %vm912 = vcmask 801792
      %v913 = vsel %vm912, %v907, %v909
      %v914 = vsel %vm912, %v909, %v911
      %v917 = vsel %vm904, %v913, 0.0
      %v918 = vsel %vm905, %v914, 0.0
      %v919 = vsel %vm893, 1, 0
      %v920 = vlaneseq
      %v921 = vshrl.u32 %v920, 7
      %v922 = vsub.s32 0, %v921
      %v923 = vrot.slane %v919, %v922
      %v924 = vlaneseq
      %v925 = vshrl.u32 %v924, 7
      %v926 = vsub.s32 1, %v925
      %v927 = vrot.slane %v919, %v926
      %vm928 = vcmp.eq.s32.totalorder %v923, 1
      %vm929 = vcmp.eq.s32.totalorder %v927, 1
      %930 = vrot.lane.b32.xlu0 %v761, 96
      %v931 = vpop.permute.xlu0 %930
      %932 = vrot.lane.b32.xlu0 %v762, 96
      %v933 = vpop.permute.xlu0 %932
      %934 = vrot.lane.b32.xlu0 %v867, 96
      %v935 = vpop.permute.xlu0 %934
      %vm936 = vcmask 785408
      %v937 = vsel %vm936, %v931, %v933
      %v938 = vsel %vm936, %v933, %v935
      %v941 = vsel %vm928, %v937, 0.0
      %v942 = vsel %vm929, %v938, 0.0
      %vm943 = vmand %vm893, %vm817
      %v944 = vsel %vm943, 1, 0
      %v945 = vlaneseq
      %v946 = vshrl.u32 %v945, 7
      %v947 = vsub.s32 0, %v946
      %v948 = vrot.slane %v944, %v947
      %v949 = vlaneseq
      %v950 = vshrl.u32 %v949, 7
      %v951 = vsub.s32 1, %v950
      %v952 = vrot.slane %v944, %v951
      %vm953 = vcmp.eq.s32.totalorder %v948, 1
      %vm954 = vcmp.eq.s32.totalorder %v952, 1
      %955 = vrot.lane.b32.xlu0 %v761, 94
      %v956 = vpop.permute.xlu0 %955
      %957 = vrot.lane.b32.xlu0 %v762, 94
      %v958 = vpop.permute.xlu0 %957
      %959 = vrot.lane.b32.xlu0 %v867, 94
      %v960 = vpop.permute.xlu0 %959
      %vm961 = vcmask 769024
      %v962 = vsel %vm961, %v956, %v958
      %v963 = vsel %vm961, %v958, %v960
      %v966 = vsel %vm953, %v962, 0.0
      %v967 = vsel %vm954, %v963, 0.0
      %s968 = scalar_lea.vmem %s4, 8
      %v969 = vld [vmem:[%s968] sm:$0xff]
      %s970 = scalar_lea.vmem %s5, 8
      %v971 = vld [vmem:[%s970] sm:$0xff]
      %973 = vset.pattern.permute.xlu0 0
      %974 = vperm.xlu0 %973, %v971
      %v975 = vpop.permute.xlu0 %974
      %v978 = vsel %vm678, %v969, 0
      %980 = vmatprep.subr.mxu0 %v792
      %981 = vmatpush1.msra.mxu0 %v791
      %982 = vmatprep.subr.mxu0 %v816
      %983 = vmatpush1.msra.mxu0 %v815
      %984 = vmatprep.subr.mxu0 %v842
      %985 = vmatpush1.msra.mxu0 %v841
      %986 = vmatprep.subr.mxu0 %v866
      %987 = vmatpush1.msra.mxu0 %v865
      %988 = vmatprep.subr.mxu0 %v757
      %989 = vmatpush1.msra.mxu0 %v756
      %990 = vmatprep.subr.mxu0 %v892
      %991 = vmatpush1.msra.mxu0 %v891
      %992 = vmatprep.subr.mxu0 %v918
      %993 = vmatpush1.msra.mxu0 %v917
      %994 = vmatprep.subr.mxu0 %v942
      %995 = vmatpush1.msra.mxu0 %v941
      %996 = vmatprep.subr.mxu0 %v967
      %997 = vmatpush1.msra.mxu0 %v966
      %998 = vmatprep.subr.mxu0 0.0
      %999 = vmatpush1.msra.mxu0 0.0
      %1000 = vmatprep.subr.mxu0 0.0
      %1001 = vmatpush1.msra.mxu0 0.0
      %1002 = vmatprep.subr.mxu0 0.0
      %1003 = vmatpush1.msra.mxu0 0.0
      %1004 = vmatprep.subr.mxu0 0.0
      %1005 = vmatpush1.msra.mxu0 0.0
      %1006 = vmatprep.subr.mxu0 0.0
      %1007 = vmatpush1.msra.mxu0 0.0
      %1008 = vmatprep.subr.mxu0 0.0
      %1009 = vmatpush1.msra.mxu0 0.0
      %1010 = vmatprep.subr.mxu0 0.0
      %1011 = vmatpush1.msra.mxu0 0.0
      %1012 = vmatprep.subr.mxu0 0.0
      %1013 = vmatpush1.msra.mxu0 0.0
      %1014 = vmatprep.subr.mxu0 0.0
      %1015 = vmatpush1.msra.mxu0 0.0
      %1016 = vmatprep.subr.mxu0 0.0
      %1017 = vmatpush1.msra.mxu0 0.0
      %1018 = vmatprep.subr.mxu0 0.0
      %1019 = vmatpush1.msra.mxu0 0.0
      %1020 = vmatprep.subr.mxu0 0.0
      %1021 = vmatpush1.msra.mxu0 0.0
      %1022 = vmatprep.subr.mxu0 0.0
      %1023 = vmatpush1.msra.mxu0 0.0
      %1024 = vmatprep.subr.mxu0 0.0
      %1025 = vmatpush1.msra.mxu0 0.0
      %1026 = vmatprep.subr.mxu0 0.0
      %1027 = vmatpush1.msra.mxu0 0.0
      %1028 = vmatprep.subr.mxu0 0.0
      %1029 = vmatpush1.msra.mxu0 0.0
      %1030 = vmatprep.subr.mxu0 0.0
      %1031 = vmatpush1.msra.mxu0 0.0
      %1032 = vmatprep.subr.mxu0 0.0
      %1033 = vmatpush1.msra.mxu0 0.0
      %1034 = vmatprep.subr.mxu0 0.0
      %1035 = vmatpush1.msra.mxu0 0.0
      %1036 = vmatprep.subr.mxu0 0.0
      %1037 = vmatpush1.msra.mxu0 0.0
      %1038 = vmatprep.subr.mxu0 0.0
      %1039 = vmatpush1.msra.mxu0 0.0
      %1040 = vmatprep.subr.mxu0 0.0
      %1041 = vmatpush1.msra.mxu0 0.0
      %1042 = vmatprep.subr.mxu0 0.0
      %1043 = vmatpush1.msra.mxu0 0.0
      %1044 = vmatprep.mubr.f32.mxu0 0.0
      %1045 = vmatmul.mubr.f32.gmra.mrb[0].mxu0 %v978
      %v1046 = vpop.f32.mrb[0].mxu0
      %v1047 = vadd.f32 %v975, %v1046
      %v1048 = vpop.f32.mrb[0].mxu0
      %v1049 = vadd.f32 %v975, %v1048
      %1050 = vdwg.mxu0
      %v1051 = vmax.f32 %v1047, 0.0
      %v1052 = vmax.f32 %v1049, 0.0
      %s1053 = scalar_lea.vmem %s6, 8
      %v1054 = vld [vmem:[%s1053] sm:$0xff]
      %vm1055 = vcmask 64512
      %v1057 = vsel %vm1055, %v1054, 0
      %1059 = vmatprep.subr.mxu0 %v1052
      %1060 = vmatpush1.msra.mxu0 %v1051
      %1061 = vmatprep.subr.mxu0 0.0
      %1062 = vmatpush1.msra.mxu0 0.0
      %1063 = vmatprep.subr.mxu0 0.0
      %1064 = vmatpush1.msra.mxu0 0.0
      %1065 = vmatprep.subr.mxu0 0.0
      %1066 = vmatpush1.msra.mxu0 0.0
      %1067 = vmatprep.subr.mxu0 0.0
      %1068 = vmatpush1.msra.mxu0 0.0
      %1069 = vmatprep.subr.mxu0 0.0
      %1070 = vmatpush1.msra.mxu0 0.0
      %1071 = vmatprep.subr.mxu0 0.0
      %1072 = vmatpush1.msra.mxu0 0.0
      %1073 = vmatprep.subr.mxu0 0.0
      %1074 = vmatpush1.msra.mxu0 0.0
      %1075 = vmatprep.subr.mxu0 0.0
      %1076 = vmatpush1.msra.mxu0 0.0
      %1077 = vmatprep.subr.mxu0 0.0
      %1078 = vmatpush1.msra.mxu0 0.0
      %1079 = vmatprep.subr.mxu0 0.0
      %1080 = vmatpush1.msra.mxu0 0.0
      %1081 = vmatprep.subr.mxu0 0.0
      %1082 = vmatpush1.msra.mxu0 0.0
      %1083 = vmatprep.subr.mxu0 0.0
      %1084 = vmatpush1.msra.mxu0 0.0
      %1085 = vmatprep.subr.mxu0 0.0
      %1086 = vmatpush1.msra.mxu0 0.0
      %1087 = vmatprep.subr.mxu0 0.0
      %1088 = vmatpush1.msra.mxu0 0.0
      %1089 = vmatprep.subr.mxu0 0.0
      %1090 = vmatpush1.msra.mxu0 0.0
      %1091 = vmatprep.subr.mxu0 0.0
      %1092 = vmatpush1.msra.mxu0 0.0
      %1093 = vmatprep.subr.mxu0 0.0
      %1094 = vmatpush1.msra.mxu0 0.0
      %1095 = vmatprep.subr.mxu0 0.0
      %1096 = vmatpush1.msra.mxu0 0.0
      %1097 = vmatprep.subr.mxu0 0.0
      %1098 = vmatpush1.msra.mxu0 0.0
      %1099 = vmatprep.subr.mxu0 0.0
      %1100 = vmatpush1.msra.mxu0 0.0
      %1101 = vmatprep.subr.mxu0 0.0
      %1102 = vmatpush1.msra.mxu0 0.0
      %1103 = vmatprep.subr.mxu0 0.0
      %1104 = vmatpush1.msra.mxu0 0.0
      %1105 = vmatprep.subr.mxu0 0.0
      %1106 = vmatpush1.msra.mxu0 0.0
      %1107 = vmatprep.subr.mxu0 0.0
      %1108 = vmatpush1.msra.mxu0 0.0
      %1109 = vmatprep.subr.mxu0 0.0
      %1110 = vmatpush1.msra.mxu0 0.0
      %1111 = vmatprep.subr.mxu0 0.0
      %1112 = vmatpush1.msra.mxu0 0.0
      %1113 = vmatprep.subr.mxu0 0.0
      %1114 = vmatpush1.msra.mxu0 0.0
      %1115 = vmatprep.subr.mxu0 0.0
      %1116 = vmatpush1.msra.mxu0 0.0
      %1117 = vmatprep.subr.mxu0 0.0
      %1118 = vmatpush1.msra.mxu0 0.0
      %1119 = vmatprep.subr.mxu0 0.0
      %1120 = vmatpush1.msra.mxu0 0.0
      %1121 = vmatprep.subr.mxu0 0.0
      %1122 = vmatpush1.msra.mxu0 0.0
      %1123 = vmatprep.mubr.f32.mxu0 0.0
      %1124 = vmatmul.mubr.f32.gmra.mrb[0].mxu0 %v1057
      %v1125 = vpop.f32.mrb[0].mxu0
      %v1126 = vadd.f32 0.0, %v1125
      %v1127 = vpop.f32.mrb[0].mxu0
      %v1128 = vadd.f32 0.0, %v1127
      %1129 = vdwg.mxu0
      %v1131 = vsel %vm1055, %v755, 0
      %1133 = vmatprep.subr.mxu0 %v754
      %1134 = vmatpush1.msra.mxu0 %v753
      %1135 = vmatprep.subr.mxu0 0.0
      %1136 = vmatpush1.msra.mxu0 0.0
      %1137 = vmatprep.subr.mxu0 0.0
      %1138 = vmatpush1.msra.mxu0 0.0
      %1139 = vmatprep.subr.mxu0 0.0
      %1140 = vmatpush1.msra.mxu0 0.0
      %1141 = vmatprep.subr.mxu0 0.0
      %1142 = vmatpush1.msra.mxu0 0.0
      %1143 = vmatprep.subr.mxu0 0.0
      %1144 = vmatpush1.msra.mxu0 0.0
      %1145 = vmatprep.subr.mxu0 0.0
      %1146 = vmatpush1.msra.mxu0 0.0
      %1147 = vmatprep.subr.mxu0 0.0
      %1148 = vmatpush1.msra.mxu0 0.0
      %1149 = vmatprep.subr.mxu0 0.0
      %1150 = vmatpush1.msra.mxu0 0.0
      %1151 = vmatprep.subr.mxu0 0.0
      %1152 = vmatpush1.msra.mxu0 0.0
      %1153 = vmatprep.subr.mxu0 0.0
      %1154 = vmatpush1.msra.mxu0 0.0
      %1155 = vmatprep.subr.mxu0 0.0
      %1156 = vmatpush1.msra.mxu0 0.0
      %1157 = vmatprep.subr.mxu0 0.0
      %1158 = vmatpush1.msra.mxu0 0.0
      %1159 = vmatprep.subr.mxu0 0.0
      %1160 = vmatpush1.msra.mxu0 0.0
      %1161 = vmatprep.subr.mxu0 0.0
      %1162 = vmatpush1.msra.mxu0 0.0
      %1163 = vmatprep.subr.mxu0 0.0
      %1164 = vmatpush1.msra.mxu0 0.0
      %1165 = vmatprep.subr.mxu0 0.0
      %1166 = vmatpush1.msra.mxu0 0.0
      %1167 = vmatprep.subr.mxu0 0.0
      %1168 = vmatpush1.msra.mxu0 0.0
      %1169 = vmatprep.subr.mxu0 0.0
      %1170 = vmatpush1.msra.mxu0 0.0
      %1171 = vmatprep.subr.mxu0 0.0
      %1172 = vmatpush1.msra.mxu0 0.0
      %1173 = vmatprep.subr.mxu0 0.0
      %1174 = vmatpush1.msra.mxu0 0.0
      %1175 = vmatprep.subr.mxu0 0.0
      %1176 = vmatpush1.msra.mxu0 0.0
      %1177 = vmatprep.subr.mxu0 0.0
      %1178 = vmatpush1.msra.mxu0 0.0
      %1179 = vmatprep.subr.mxu0 0.0
      %1180 = vmatpush1.msra.mxu0 0.0
      %1181 = vmatprep.subr.mxu0 0.0
      %1182 = vmatpush1.msra.mxu0 0.0
      %1183 = vmatprep.subr.mxu0 0.0
      %1184 = vmatpush1.msra.mxu0 0.0
      %1185 = vmatprep.subr.mxu0 0.0
      %1186 = vmatpush1.msra.mxu0 0.0
      %1187 = vmatprep.subr.mxu0 0.0
      %1188 = vmatpush1.msra.mxu0 0.0
      %1189 = vmatprep.subr.mxu0 0.0
      %1190 = vmatpush1.msra.mxu0 0.0
      %1191 = vmatprep.subr.mxu0 0.0
      %1192 = vmatpush1.msra.mxu0 0.0
      %1193 = vmatprep.subr.mxu0 0.0
      %1194 = vmatpush1.msra.mxu0 0.0
      %1195 = vmatprep.subr.mxu0 0.0
      %1196 = vmatpush1.msra.mxu0 0.0
      %1197 = vmatprep.mubr.f32.mxu0 0.0
      %1198 = vmatmul.mubr.f32.gmra.mrb[0].mxu0 %v1131
      %v1199 = vpop.f32.mrb[0].mxu0
      %v1200 = vadd.f32 %v1126, %v1199
      %v1201 = vpop.f32.mrb[0].mxu0
      %v1202 = vadd.f32 %v1128, %v1201
      %1203 = vdwg.mxu0
      %v1204 = vadd.f32 %v756, %v1051
      %v1205 = vadd.f32 %v757, %v1052
      %1206 = vst [vmem:[#allocation2 + $0x10] sm:$0xff] %v1204
      %1207 = vst [vmem:[#allocation2 + $0x18] sm:$0xff] %v1205
      %v1208 = vld [vmem:[#allocation2 + $0x8] sm:$0xff]
      %v1209 = vld [vmem:[#allocation2 + $0x10] sm:$0xff]
      %v1210 = vld [vmem:[#allocation2 + $0x18] sm:$0xff]
      %vm1211 = vcmp.ge.s32.totalorder %v360, 4
      %vm1212 = vcmp.ge.s32.totalorder %v362, 4
      %vm1213 = vmand %vm1211, %vm1212
      %v1214 = vsel %vm1213, 1, 0
      %v1215 = vlaneseq
      %v1216 = vshrl.u32 %v1215, 7
      %v1217 = vsub.s32 0, %v1216
      %v1218 = vrot.slane %v1214, %v1217
      %v1219 = vlaneseq
      %v1220 = vshrl.u32 %v1219, 7
      %v1221 = vsub.s32 1, %v1220
      %v1222 = vrot.slane %v1214, %v1221
      %vm1223 = vcmp.eq.s32.totalorder %v1218, 1
      %vm1224 = vcmp.eq.s32.totalorder %v1222, 1
      %1228 = vrot.lane.b32.xlu0 %v1208, 68
      %v1229 = vpop.permute.xlu0 %1228
      %1230 = vrot.lane.b32.xlu0 %v1209, 68
      %v1231 = vpop.permute.xlu0 %1230
      %1232 = vrot.lane.b32.xlu0 %v1210, 68
      %v1233 = vpop.permute.xlu0 %1232
      %vm1234 = vcmask 556032
      %v1235 = vsel %vm1234, %v1229, %v1231
      %v1236 = vsel %vm1234, %v1231, %v1233
      %v1239 = vsel %vm1223, %v1235, 0.0
      %v1240 = vsel %vm1224, %v1236, 0.0
      %v1241 = vsel %vm1211, 1, 0
      %v1242 = vlaneseq
      %v1243 = vshrl.u32 %v1242, 7
      %v1244 = vsub.s32 0, %v1243
      %v1245 = vrot.slane %v1241, %v1244
      %v1246 = vlaneseq
      %v1247 = vshrl.u32 %v1246, 7
      %v1248 = vsub.s32 1, %v1247
      %v1249 = vrot.slane %v1241, %v1248
      %vm1250 = vcmp.eq.s32.totalorder %v1245, 1
      %vm1251 = vcmp.eq.s32.totalorder %v1249, 1
      %1252 = vrot.lane.b32.xlu0 %v1208, 64
      %v1253 = vpop.permute.xlu0 %1252
      %1254 = vrot.lane.b32.xlu0 %v1209, 64
      %v1255 = vpop.permute.xlu0 %1254
      %1256 = vrot.lane.b32.xlu0 %v1210, 64
      %v1257 = vpop.permute.xlu0 %1256
      %vm1258 = vcmask 523264
      %v1259 = vsel %vm1258, %v1253, %v1255
      %v1260 = vsel %vm1258, %v1255, %v1257
      %v1263 = vsel %vm1250, %v1259, 0.0
      %v1264 = vsel %vm1251, %v1260, 0.0
      %vm1265 = vcmp.lt.s32.totalorder %v362, 12
      %vm1266 = vmand %vm1211, %vm1265
      %v1267 = vsel %vm1266, 1, 0
      %v1268 = vlaneseq
      %v1269 = vshrl.u32 %v1268, 7
      %v1270 = vsub.s32 0, %v1269
      %v1271 = vrot.slane %v1267, %v1270
      %v1272 = vlaneseq
      %v1273 = vshrl.u32 %v1272, 7
      %v1274 = vsub.s32 1, %v1273
      %v1275 = vrot.slane %v1267, %v1274
      %vm1276 = vcmp.eq.s32.totalorder %v1271, 1
      %vm1277 = vcmp.eq.s32.totalorder %v1275, 1
      %1278 = vrot.lane.b32.xlu0 %v1208, 60
      %v1279 = vpop.permute.xlu0 %1278
      %1280 = vrot.lane.b32.xlu0 %v1209, 60
      %v1281 = vpop.permute.xlu0 %1280
      %1282 = vrot.lane.b32.xlu0 %v1210, 60
      %v1283 = vpop.permute.xlu0 %1282
      %vm1284 = vcmask 490496
      %v1285 = vsel %vm1284, %v1279, %v1281
      %v1286 = vsel %vm1284, %v1281, %v1283
      %v1289 = vsel %vm1276, %v1285, 0.0
      %v1290 = vsel %vm1277, %v1286, 0.0
      %v1291 = vsel %vm1212, 1, 0
      %v1292 = vlaneseq
      %v1293 = vshrl.u32 %v1292, 7
      %v1294 = vsub.s32 0, %v1293
      %v1295 = vrot.slane %v1291, %v1294
      %v1296 = vlaneseq
      %v1297 = vshrl.u32 %v1296, 7
      %v1298 = vsub.s32 1, %v1297
      %v1299 = vrot.slane %v1291, %v1298
      %vm1300 = vcmp.eq.s32.totalorder %v1295, 1
      %vm1301 = vcmp.eq.s32.totalorder %v1299, 1
      %1302 = vrot.lane.b32.xlu0 %v1208, 4
      %v1303 = vpop.permute.xlu0 %1302
      %1304 = vrot.lane.b32.xlu0 %v1209, 4
      %v1305 = vpop.permute.xlu0 %1304
      %1306 = vrot.lane.b32.xlu0 %v1210, 4
      %v1307 = vpop.permute.xlu0 %1306
      %v1308 = vsel %vm373, %v1303, %v1305
      %v1309 = vsel %vm373, %v1305, %v1307
      %v1312 = vsel %vm1300, %v1308, 0.0
      %v1313 = vsel %vm1301, %v1309, 0.0
      %v1314 = vld [vmem:[#allocation2 + $0x20] sm:$0xff]
      %v1315 = vsel %vm1265, 1, 0
      %v1316 = vlaneseq
      %v1317 = vshrl.u32 %v1316, 7
      %v1318 = vsub.s32 0, %v1317
      %v1319 = vrot.slane %v1315, %v1318
      %v1320 = vlaneseq
      %v1321 = vshrl.u32 %v1320, 7
      %v1322 = vsub.s32 1, %v1321
      %v1323 = vrot.slane %v1315, %v1322
      %vm1324 = vcmp.eq.s32.totalorder %v1319, 1
      %vm1325 = vcmp.eq.s32.totalorder %v1323, 1
      %1327 = vrot.lane.b32.xlu0 %v1209, 124
      %v1328 = vpop.permute.xlu0 %1327
      %1329 = vrot.lane.b32.xlu0 %v1210, 124
      %v1330 = vpop.permute.xlu0 %1329
      %1331 = vrot.lane.b32.xlu0 %v1314, 124
      %v1332 = vpop.permute.xlu0 %1331
      %vm1333 = vcmask 1014784
      %v1334 = vsel %vm1333, %v1328, %v1330
      %v1335 = vsel %vm1333, %v1330, %v1332
      %v1338 = vsel %vm1324, %v1334, 0.0
      %v1339 = vsel %vm1325, %v1335, 0.0
      %vm1340 = vcmp.lt.s32.totalorder %v360, 12
      %vm1341 = vmand %vm1340, %vm1212
      %v1342 = vsel %vm1341, 1, 0
      %v1343 = vlaneseq
      %v1344 = vshrl.u32 %v1343, 7
      %v1345 = vsub.s32 0, %v1344
      %v1346 = vrot.slane %v1342, %v1345
      %v1347 = vlaneseq
      %v1348 = vshrl.u32 %v1347, 7
      %v1349 = vsub.s32 1, %v1348
      %v1350 = vrot.slane %v1342, %v1349
      %vm1351 = vcmp.eq.s32.totalorder %v1346, 1
      %vm1352 = vcmp.eq.s32.totalorder %v1350, 1
      %1353 = vrot.lane.b32.xlu0 %v1314, 68
      %v1354 = vpop.permute.xlu0 %1353
      %v1355 = vsel %vm1234, %v1233, %v1354
      %v1357 = vsel %vm1351, %v1236, 0.0
      %v1358 = vsel %vm1352, %v1355, 0.0
      %v1359 = vsel %vm1340, 1, 0
      %v1360 = vlaneseq
      %v1361 = vshrl.u32 %v1360, 7
      %v1362 = vsub.s32 0, %v1361
      %v1363 = vrot.slane %v1359, %v1362
      %v1364 = vlaneseq
      %v1365 = vshrl.u32 %v1364, 7
      %v1366 = vsub.s32 1, %v1365
      %v1367 = vrot.slane %v1359, %v1366
      %vm1368 = vcmp.eq.s32.totalorder %v1363, 1
      %vm1369 = vcmp.eq.s32.totalorder %v1367, 1
      %1370 = vrot.lane.b32.xlu0 %v1314, 64
      %v1371 = vpop.permute.xlu0 %1370
      %v1372 = vsel %vm1258, %v1257, %v1371
      %v1374 = vsel %vm1368, %v1260, 0.0
      %v1375 = vsel %vm1369, %v1372, 0.0
      %vm1376 = vmand %vm1340, %vm1265
      %v1377 = vsel %vm1376, 1, 0
      %v1378 = vlaneseq
      %v1379 = vshrl.u32 %v1378, 7
      %v1380 = vsub.s32 0, %v1379
      %v1381 = vrot.slane %v1377, %v1380
      %v1382 = vlaneseq
      %v1383 = vshrl.u32 %v1382, 7
      %v1384 = vsub.s32 1, %v1383
      %v1385 = vrot.slane %v1377, %v1384
      %vm1386 = vcmp.eq.s32.totalorder %v1381, 1
      %vm1387 = vcmp.eq.s32.totalorder %v1385, 1
      %1388 = vrot.lane.b32.xlu0 %v1314, 60
      %v1389 = vpop.permute.xlu0 %1388
      %v1390 = vsel %vm1284, %v1283, %v1389
      %v1392 = vsel %vm1386, %v1286, 0.0
      %v1393 = vsel %vm1387, %v1390, 0.0
      %s1394 = scalar_lea.vmem %s4, 16
      %v1395 = vld [vmem:[%s1394] sm:$0xff]
      %s1396 = scalar_lea.vmem %s5, 16
      %v1397 = vld [vmem:[%s1396] sm:$0xff]
      %1399 = vset.pattern.permute.xlu0 0
      %1400 = vperm.xlu0 %1399, %v1397
      %v1401 = vpop.permute.xlu0 %1400
      %v1404 = vsel %vm678, %v1395, 0
      %1406 = vmatprep.subr.mxu0 %v1240
      %1407 = vmatpush1.msra.mxu0 %v1239
      %1408 = vmatprep.subr.mxu0 %v1264
      %1409 = vmatpush1.msra.mxu0 %v1263
      %1410 = vmatprep.subr.mxu0 %v1290
      %1411 = vmatpush1.msra.mxu0 %v1289
      %1412 = vmatprep.subr.mxu0 %v1313
      %1413 = vmatpush1.msra.mxu0 %v1312
      %1414 = vmatprep.subr.mxu0 %v1205
      %1415 = vmatpush1.msra.mxu0 %v1204
      %1416 = vmatprep.subr.mxu0 %v1339
      %1417 = vmatpush1.msra.mxu0 %v1338
      %1418 = vmatprep.subr.mxu0 %v1358
      %1419 = vmatpush1.msra.mxu0 %v1357
      %1420 = vmatprep.subr.mxu0 %v1375
      %1421 = vmatpush1.msra.mxu0 %v1374
      %1422 = vmatprep.subr.mxu0 %v1393
      %1423 = vmatpush1.msra.mxu0 %v1392
      %1424 = vmatprep.subr.mxu0 0.0
      %1425 = vmatpush1.msra.mxu0 0.0
      %1426 = vmatprep.subr.mxu0 0.0
      %1427 = vmatpush1.msra.mxu0 0.0
      %1428 = vmatprep.subr.mxu0 0.0
      %1429 = vmatpush1.msra.mxu0 0.0
      %1430 = vmatprep.subr.mxu0 0.0
      %1431 = vmatpush1.msra.mxu0 0.0
      %1432 = vmatprep.subr.mxu0 0.0
      %1433 = vmatpush1.msra.mxu0 0.0
      %1434 = vmatprep.subr.mxu0 0.0
      %1435 = vmatpush1.msra.mxu0 0.0
      %1436 = vmatprep.subr.mxu0 0.0
      %1437 = vmatpush1.msra.mxu0 0.0
      %1438 = vmatprep.subr.mxu0 0.0
      %1439 = vmatpush1.msra.mxu0 0.0
      %1440 = vmatprep.subr.mxu0 0.0
      %1441 = vmatpush1.msra.mxu0 0.0
      %1442 = vmatprep.subr.mxu0 0.0
      %1443 = vmatpush1.msra.mxu0 0.0
      %1444 = vmatprep.subr.mxu0 0.0
      %1445 = vmatpush1.msra.mxu0 0.0
      %1446 = vmatprep.subr.mxu0 0.0
      %1447 = vmatpush1.msra.mxu0 0.0
      %1448 = vmatprep.subr.mxu0 0.0
      %1449 = vmatpush1.msra.mxu0 0.0
      %1450 = vmatprep.subr.mxu0 0.0
      %1451 = vmatpush1.msra.mxu0 0.0
      %1452 = vmatprep.subr.mxu0 0.0
      %1453 = vmatpush1.msra.mxu0 0.0
      %1454 = vmatprep.subr.mxu0 0.0
      %1455 = vmatpush1.msra.mxu0 0.0
      %1456 = vmatprep.subr.mxu0 0.0
      %1457 = vmatpush1.msra.mxu0 0.0
      %1458 = vmatprep.subr.mxu0 0.0
      %1459 = vmatpush1.msra.mxu0 0.0
      %1460 = vmatprep.subr.mxu0 0.0
      %1461 = vmatpush1.msra.mxu0 0.0
      %1462 = vmatprep.subr.mxu0 0.0
      %1463 = vmatpush1.msra.mxu0 0.0
      %1464 = vmatprep.subr.mxu0 0.0
      %1465 = vmatpush1.msra.mxu0 0.0
      %1466 = vmatprep.subr.mxu0 0.0
      %1467 = vmatpush1.msra.mxu0 0.0
      %1468 = vmatprep.subr.mxu0 0.0
      %1469 = vmatpush1.msra.mxu0 0.0
      %1470 = vmatprep.mubr.f32.mxu0 0.0
      %1471 = vmatmul.mubr.f32.gmra.mrb[0].mxu0 %v1404
      %v1472 = vpop.f32.mrb[0].mxu0
      %v1473 = vadd.f32 %v1401, %v1472
      %v1474 = vpop.f32.mrb[0].mxu0
      %v1475 = vadd.f32 %v1401, %v1474
      %1476 = vdwg.mxu0
      %v1477 = vmax.f32 %v1473, 0.0
      %v1478 = vmax.f32 %v1475, 0.0
      %s1479 = scalar_lea.vmem %s6, 16
      %v1480 = vld [vmem:[%s1479] sm:$0xff]
      %v1482 = vsel %vm1055, %v1480, 0
      %1484 = vmatprep.subr.mxu0 %v1478
      %1485 = vmatpush1.msra.mxu0 %v1477
      %1486 = vmatprep.subr.mxu0 0.0
      %1487 = vmatpush1.msra.mxu0 0.0
      %1488 = vmatprep.subr.mxu0 0.0
      %1489 = vmatpush1.msra.mxu0 0.0
      %1490 = vmatprep.subr.mxu0 0.0
      %1491 = vmatpush1.msra.mxu0 0.0
      %1492 = vmatprep.subr.mxu0 0.0
      %1493 = vmatpush1.msra.mxu0 0.0
      %1494 = vmatprep.subr.mxu0 0.0
      %1495 = vmatpush1.msra.mxu0 0.0
      %1496 = vmatprep.subr.mxu0 0.0
      %1497 = vmatpush1.msra.mxu0 0.0
      %1498 = vmatprep.subr.mxu0 0.0
      %1499 = vmatpush1.msra.mxu0 0.0
      %1500 = vmatprep.subr.mxu0 0.0
      %1501 = vmatpush1.msra.mxu0 0.0
      %1502 = vmatprep.subr.mxu0 0.0
      %1503 = vmatpush1.msra.mxu0 0.0
      %1504 = vmatprep.subr.mxu0 0.0
      %1505 = vmatpush1.msra.mxu0 0.0
      %1506 = vmatprep.subr.mxu0 0.0
      %1507 = vmatpush1.msra.mxu0 0.0
      %1508 = vmatprep.subr.mxu0 0.0
      %1509 = vmatpush1.msra.mxu0 0.0
      %1510 = vmatprep.subr.mxu0 0.0
      %1511 = vmatpush1.msra.mxu0 0.0
      %1512 = vmatprep.subr.mxu0 0.0
      %1513 = vmatpush1.msra.mxu0 0.0
      %1514 = vmatprep.subr.mxu0 0.0
      %1515 = vmatpush1.msra.mxu0 0.0
      %1516 = vmatprep.subr.mxu0 0.0
      %1517 = vmatpush1.msra.mxu0 0.0
      %1518 = vmatprep.subr.mxu0 0.0
      %1519 = vmatpush1.msra.mxu0 0.0
      %1520 = vmatprep.subr.mxu0 0.0
      %1521 = vmatpush1.msra.mxu0 0.0
      %1522 = vmatprep.subr.mxu0 0.0
      %1523 = vmatpush1.msra.mxu0 0.0
      %1524 = vmatprep.subr.mxu0 0.0
      %1525 = vmatpush1.msra.mxu0 0.0
      %1526 = vmatprep.subr.mxu0 0.0
      %1527 = vmatpush1.msra.mxu0 0.0
      %1528 = vmatprep.subr.mxu0 0.0
      %1529 = vmatpush1.msra.mxu0 0.0
      %1530 = vmatprep.subr.mxu0 0.0
      %1531 = vmatpush1.msra.mxu0 0.0
      %1532 = vmatprep.subr.mxu0 0.0
      %1533 = vmatpush1.msra.mxu0 0.0
      %1534 = vmatprep.subr.mxu0 0.0
      %1535 = vmatpush1.msra.mxu0 0.0
      %1536 = vmatprep.subr.mxu0 0.0
      %1537 = vmatpush1.msra.mxu0 0.0
      %1538 = vmatprep.subr.mxu0 0.0
      %1539 = vmatpush1.msra.mxu0 0.0
      %1540 = vmatprep.subr.mxu0 0.0
      %1541 = vmatpush1.msra.mxu0 0.0
      %1542 = vmatprep.subr.mxu0 0.0
      %1543 = vmatpush1.msra.mxu0 0.0
      %1544 = vmatprep.subr.mxu0 0.0
      %1545 = vmatpush1.msra.mxu0 0.0
      %1546 = vmatprep.subr.mxu0 0.0
      %1547 = vmatpush1.msra.mxu0 0.0
      %1548 = vmatprep.mubr.f32.mxu0 0.0
      %1549 = vmatmul.mubr.f32.gmra.mrb[0].mxu0 %v1482
      %v1550 = vpop.f32.mrb[0].mxu0
      %v1551 = vadd.f32 0.0, %v1550
      %v1552 = vpop.f32.mrb[0].mxu0
      %v1553 = vadd.f32 0.0, %v1552
      %1554 = vdwg.mxu0
      %v1555 = vadd.f32 %v1200, %v1551
      %v1556 = vadd.f32 %v1202, %v1553
      %v1557 = vadd.f32 %v1204, %v1477
      %v1558 = vadd.f32 %v1205, %v1478
      %1559 = vst [vmem:[#allocation2 + $0x10] sm:$0xff] %v1557
      %1560 = vst [vmem:[#allocation2 + $0x18] sm:$0xff] %v1558
      %v1561 = vld [vmem:[#allocation2 + $0x8] sm:$0xff]
      %v1562 = vld [vmem:[#allocation2 + $0x10] sm:$0xff]
      %v1563 = vld [vmem:[#allocation2 + $0x18] sm:$0xff]
      %vm1564 = vcmp.ge.s32.totalorder %v360, 6
      %vm1565 = vcmp.ge.s32.totalorder %v362, 6
      %vm1566 = vmand %vm1564, %vm1565
      %v1567 = vsel %vm1566, 1, 0
      %v1568 = vlaneseq
      %v1569 = vshrl.u32 %v1568, 7
      %v1570 = vsub.s32 0, %v1569
      %v1571 = vrot.slane %v1567, %v1570
      %v1572 = vlaneseq
      %v1573 = vshrl.u32 %v1572, 7
      %v1574 = vsub.s32 1, %v1573
      %v1575 = vrot.slane %v1567, %v1574
      %vm1576 = vcmp.eq.s32.totalorder %v1571, 1
      %vm1577 = vcmp.eq.s32.totalorder %v1575, 1
      %1581 = vrot.lane.b32.xlu0 %v1561, 102
      %v1582 = vpop.permute.xlu0 %1581
      %1583 = vrot.lane.b32.xlu0 %v1562, 102
      %v1584 = vpop.permute.xlu0 %1583
      %1585 = vrot.lane.b32.xlu0 %v1563, 102
      %v1586 = vpop.permute.xlu0 %1585
      %vm1587 = vcmask 834560
      %v1588 = vsel %vm1587, %v1582, %v1584
      %v1589 = vsel %vm1587, %v1584, %v1586
      %v1592 = vsel %vm1576, %v1588, 0.0
      %v1593 = vsel %vm1577, %v1589, 0.0
      %v1594 = vsel %vm1564, 1, 0
      %v1595 = vlaneseq
      %v1596 = vshrl.u32 %v1595, 7
      %v1597 = vsub.s32 0, %v1596
      %v1598 = vrot.slane %v1594, %v1597
      %v1599 = vlaneseq
      %v1600 = vshrl.u32 %v1599, 7
      %v1601 = vsub.s32 1, %v1600
      %v1602 = vrot.slane %v1594, %v1601
      %vm1603 = vcmp.eq.s32.totalorder %v1598, 1
      %vm1604 = vcmp.eq.s32.totalorder %v1602, 1
      %1605 = vrot.lane.b32.xlu0 %v1561, 96
      %v1606 = vpop.permute.xlu0 %1605
      %1607 = vrot.lane.b32.xlu0 %v1562, 96
      %v1608 = vpop.permute.xlu0 %1607
      %1609 = vrot.lane.b32.xlu0 %v1563, 96
      %v1610 = vpop.permute.xlu0 %1609
      %v1611 = vsel %vm936, %v1606, %v1608
      %v1612 = vsel %vm936, %v1608, %v1610
      %v1615 = vsel %vm1603, %v1611, 0.0
      %v1616 = vsel %vm1604, %v1612, 0.0
      %vm1617 = vcmp.lt.s32.totalorder %v362, 10
      %vm1618 = vmand %vm1564, %vm1617
      %v1619 = vsel %vm1618, 1, 0
      %v1620 = vlaneseq
      %v1621 = vshrl.u32 %v1620, 7
      %v1622 = vsub.s32 0, %v1621
      %v1623 = vrot.slane %v1619, %v1622
      %v1624 = vlaneseq
      %v1625 = vshrl.u32 %v1624, 7
      %v1626 = vsub.s32 1, %v1625
      %v1627 = vrot.slane %v1619, %v1626
      %vm1628 = vcmp.eq.s32.totalorder %v1623, 1
      %vm1629 = vcmp.eq.s32.totalorder %v1627, 1
      %1630 = vrot.lane.b32.xlu0 %v1561, 90
      %v1631 = vpop.permute.xlu0 %1630
      %1632 = vrot.lane.b32.xlu0 %v1562, 90
      %v1633 = vpop.permute.xlu0 %1632
      %1634 = vrot.lane.b32.xlu0 %v1563, 90
      %v1635 = vpop.permute.xlu0 %1634
      %vm1636 = vcmask 736256
      %v1637 = vsel %vm1636, %v1631, %v1633
      %v1638 = vsel %vm1636, %v1633, %v1635
      %v1641 = vsel %vm1628, %v1637, 0.0
      %v1642 = vsel %vm1629, %v1638, 0.0
      %v1643 = vsel %vm1565, 1, 0
      %v1644 = vlaneseq
      %v1645 = vshrl.u32 %v1644, 7
      %v1646 = vsub.s32 0, %v1645
      %v1647 = vrot.slane %v1643, %v1646
      %v1648 = vlaneseq
      %v1649 = vshrl.u32 %v1648, 7
      %v1650 = vsub.s32 1, %v1649
      %v1651 = vrot.slane %v1643, %v1650
      %vm1652 = vcmp.eq.s32.totalorder %v1647, 1
      %vm1653 = vcmp.eq.s32.totalorder %v1651, 1
      %1654 = vrot.lane.b32.xlu0 %v1561, 6
      %v1655 = vpop.permute.xlu0 %1654
      %1656 = vrot.lane.b32.xlu0 %v1562, 6
      %v1657 = vpop.permute.xlu0 %1656
      %1658 = vrot.lane.b32.xlu0 %v1563, 6
      %v1659 = vpop.permute.xlu0 %1658
      %vm1660 = vcmask 48128
      %v1661 = vsel %vm1660, %v1655, %v1657
      %v1662 = vsel %vm1660, %v1657, %v1659
      %v1665 = vsel %vm1652, %v1661, 0.0
      %v1666 = vsel %vm1653, %v1662, 0.0
      %v1667 = vld [vmem:[#allocation2 + $0x20] sm:$0xff]
      %v1668 = vsel %vm1617, 1, 0
      %v1669 = vlaneseq
      %v1670 = vshrl.u32 %v1669, 7
      %v1671 = vsub.s32 0, %v1670
      %v1672 = vrot.slane %v1668, %v1671
      %v1673 = vlaneseq
      %v1674 = vshrl.u32 %v1673, 7
      %v1675 = vsub.s32 1, %v1674
      %v1676 = vrot.slane %v1668, %v1675
      %vm1677 = vcmp.eq.s32.totalorder %v1672, 1
      %vm1678 = vcmp.eq.s32.totalorder %v1676, 1
      %1680 = vrot.lane.b32.xlu0 %v1562, 122
      %v1681 = vpop.permute.xlu0 %1680
      %1682 = vrot.lane.b32.xlu0 %v1563, 122
      %v1683 = vpop.permute.xlu0 %1682
      %1684 = vrot.lane.b32.xlu0 %v1667, 122
      %v1685 = vpop.permute.xlu0 %1684
      %vm1686 = vcmask 998400
      %v1687 = vsel %vm1686, %v1681, %v1683
      %v1688 = vsel %vm1686, %v1683, %v1685
      %v1691 = vsel %vm1677, %v1687, 0.0
      %v1692 = vsel %vm1678, %v1688, 0.0
      %vm1693 = vcmp.lt.s32.totalorder %v360, 10
      %vm1694 = vmand %vm1693, %vm1565
      %v1695 = vsel %vm1694, 1, 0
      %v1696 = vlaneseq
      %v1697 = vshrl.u32 %v1696, 7
      %v1698 = vsub.s32 0, %v1697
      %v1699 = vrot.slane %v1695, %v1698
      %v1700 = vlaneseq
      %v1701 = vshrl.u32 %v1700, 7
      %v1702 = vsub.s32 1, %v1701
      %v1703 = vrot.slane %v1695, %v1702
      %vm1704 = vcmp.eq.s32.totalorder %v1699, 1
      %vm1705 = vcmp.eq.s32.totalorder %v1703, 1
      %1706 = vrot.lane.b32.xlu0 %v1562, 38
      %v1707 = vpop.permute.xlu0 %1706
      %1708 = vrot.lane.b32.xlu0 %v1563, 38
      %v1709 = vpop.permute.xlu0 %1708
      %1710 = vrot.lane.b32.xlu0 %v1667, 38
      %v1711 = vpop.permute.xlu0 %1710
      %vm1712 = vcmask 310272
      %v1713 = vsel %vm1712, %v1707, %v1709
      %v1714 = vsel %vm1712, %v1709, %v1711
      %v1717 = vsel %vm1704, %v1713, 0.0
      %v1718 = vsel %vm1705, %v1714, 0.0
      %v1719 = vsel %vm1693, 1, 0
      %v1720 = vlaneseq
      %v1721 = vshrl.u32 %v1720, 7
      %v1722 = vsub.s32 0, %v1721
      %v1723 = vrot.slane %v1719, %v1722
      %v1724 = vlaneseq
      %v1725 = vshrl.u32 %v1724, 7
      %v1726 = vsub.s32 1, %v1725
      %v1727 = vrot.slane %v1719, %v1726
      %vm1728 = vcmp.eq.s32.totalorder %v1723, 1
      %vm1729 = vcmp.eq.s32.totalorder %v1727, 1
      %1730 = vrot.lane.b32.xlu0 %v1562, 32
      %v1731 = vpop.permute.xlu0 %1730
      %1732 = vrot.lane.b32.xlu0 %v1563, 32
      %v1733 = vpop.permute.xlu0 %1732
      %1734 = vrot.lane.b32.xlu0 %v1667, 32
      %v1735 = vpop.permute.xlu0 %1734
      %v1736 = vsel %vm810, %v1731, %v1733
      %v1737 = vsel %vm810, %v1733, %v1735
      %v1740 = vsel %vm1728, %v1736, 0.0
      %v1741 = vsel %vm1729, %v1737, 0.0
      %vm1742 = vmand %vm1693, %vm1617
      %v1743 = vsel %vm1742, 1, 0
      %v1744 = vlaneseq
      %v1745 = vshrl.u32 %v1744, 7
      %v1746 = vsub.s32 0, %v1745
      %v1747 = vrot.slane %v1743, %v1746
      %v1748 = vlaneseq
      %v1749 = vshrl.u32 %v1748, 7
      %v1750 = vsub.s32 1, %v1749
      %v1751 = vrot.slane %v1743, %v1750
      %vm1752 = vcmp.eq.s32.totalorder %v1747, 1
      %vm1753 = vcmp.eq.s32.totalorder %v1751, 1
      %1754 = vrot.lane.b32.xlu0 %v1562, 26
      %v1755 = vpop.permute.xlu0 %1754
      %1756 = vrot.lane.b32.xlu0 %v1563, 26
      %v1757 = vpop.permute.xlu0 %1756
      %1758 = vrot.lane.b32.xlu0 %v1667, 26
      %v1759 = vpop.permute.xlu0 %1758
      %vm1760 = vcmask 211968
      %v1761 = vsel %vm1760, %v1755, %v1757
      %v1762 = vsel %vm1760, %v1757, %v1759
      %v1765 = vsel %vm1752, %v1761, 0.0
      %v1766 = vsel %vm1753, %v1762, 0.0
      %s1767 = scalar_lea.vmem %s4, 24
      %v1768 = vld [vmem:[%s1767] sm:$0xff]
      %s1769 = scalar_lea.vmem %s5, 24
      %v1770 = vld [vmem:[%s1769] sm:$0xff]
      %1772 = vset.pattern.permute.xlu0 0
      %1773 = vperm.xlu0 %1772, %v1770
      %v1774 = vpop.permute.xlu0 %1773
      %v1777 = vsel %vm678, %v1768, 0
      %1779 = vmatprep.subr.mxu0 %v1593
      %1780 = vmatpush1.msra.mxu0 %v1592
      %1781 = vmatprep.subr.mxu0 %v1616
      %1782 = vmatpush1.msra.mxu0 %v1615
      %1783 = vmatprep.subr.mxu0 %v1642
      %1784 = vmatpush1.msra.mxu0 %v1641
      %1785 = vmatprep.subr.mxu0 %v1666
      %1786 = vmatpush1.msra.mxu0 %v1665
      %1787 = vmatprep.subr.mxu0 %v1558
      %1788 = vmatpush1.msra.mxu0 %v1557
      %1789 = vmatprep.subr.mxu0 %v1692
      %1790 = vmatpush1.msra.mxu0 %v1691
      %1791 = vmatprep.subr.mxu0 %v1718
      %1792 = vmatpush1.msra.mxu0 %v1717
      %1793 = vmatprep.subr.mxu0 %v1741
      %1794 = vmatpush1.msra.mxu0 %v1740
      %1795 = vmatprep.subr.mxu0 %v1766
      %1796 = vmatpush1.msra.mxu0 %v1765
      %1797 = vmatprep.subr.mxu0 0.0
      %1798 = vmatpush1.msra.mxu0 0.0
      %1799 = vmatprep.subr.mxu0 0.0
      %1800 = vmatpush1.msra.mxu0 0.0
      %1801 = vmatprep.subr.mxu0 0.0
      %1802 = vmatpush1.msra.mxu0 0.0
      %1803 = vmatprep.subr.mxu0 0.0
      %1804 = vmatpush1.msra.mxu0 0.0
      %1805 = vmatprep.subr.mxu0 0.0
      %1806 = vmatpush1.msra.mxu0 0.0
      %1807 = vmatprep.subr.mxu0 0.0
      %1808 = vmatpush1.msra.mxu0 0.0
      %1809 = vmatprep.subr.mxu0 0.0
      %1810 = vmatpush1.msra.mxu0 0.0
      %1811 = vmatprep.subr.mxu0 0.0
      %1812 = vmatpush1.msra.mxu0 0.0
      %1813 = vmatprep.subr.mxu0 0.0
      %1814 = vmatpush1.msra.mxu0 0.0
      %1815 = vmatprep.subr.mxu0 0.0
      %1816 = vmatpush1.msra.mxu0 0.0
      %1817 = vmatprep.subr.mxu0 0.0
      %1818 = vmatpush1.msra.mxu0 0.0
      %1819 = vmatprep.subr.mxu0 0.0
      %1820 = vmatpush1.msra.mxu0 0.0
      %1821 = vmatprep.subr.mxu0 0.0
      %1822 = vmatpush1.msra.mxu0 0.0
      %1823 = vmatprep.subr.mxu0 0.0
      %1824 = vmatpush1.msra.mxu0 0.0
      %1825 = vmatprep.subr.mxu0 0.0
      %1826 = vmatpush1.msra.mxu0 0.0
      %1827 = vmatprep.subr.mxu0 0.0
      %1828 = vmatpush1.msra.mxu0 0.0
      %1829 = vmatprep.subr.mxu0 0.0
      %1830 = vmatpush1.msra.mxu0 0.0
      %1831 = vmatprep.subr.mxu0 0.0
      %1832 = vmatpush1.msra.mxu0 0.0
      %1833 = vmatprep.subr.mxu0 0.0
      %1834 = vmatpush1.msra.mxu0 0.0
      %1835 = vmatprep.subr.mxu0 0.0
      %1836 = vmatpush1.msra.mxu0 0.0
      %1837 = vmatprep.subr.mxu0 0.0
      %1838 = vmatpush1.msra.mxu0 0.0
      %1839 = vmatprep.subr.mxu0 0.0
      %1840 = vmatpush1.msra.mxu0 0.0
      %1841 = vmatprep.subr.mxu0 0.0
      %1842 = vmatpush1.msra.mxu0 0.0
      %1843 = vmatprep.mubr.f32.mxu0 0.0
      %1844 = vmatmul.mubr.f32.gmra.mrb[0].mxu0 %v1777
      %v1845 = vpop.f32.mrb[0].mxu0
      %v1846 = vadd.f32 %v1774, %v1845
      %v1847 = vpop.f32.mrb[0].mxu0
      %v1848 = vadd.f32 %v1774, %v1847
      %1849 = vdwg.mxu0
      %v1850 = vmax.f32 %v1846, 0.0
      %v1851 = vmax.f32 %v1848, 0.0
      %s1852 = scalar_lea.vmem %s6, 24
      %v1853 = vld [vmem:[%s1852] sm:$0xff]
      %v1855 = vsel %vm1055, %v1853, 0
      %1857 = vmatprep.subr.mxu0 %v1851
      %1858 = vmatpush1.msra.mxu0 %v1850
      %1859 = vmatprep.subr.mxu0 0.0
      %1860 = vmatpush1.msra.mxu0 0.0
      %1861 = vmatprep.subr.mxu0 0.0
      %1862 = vmatpush1.msra.mxu0 0.0
      %1863 = vmatprep.subr.mxu0 0.0
      %1864 = vmatpush1.msra.mxu0 0.0
      %1865 = vmatprep.subr.mxu0 0.0
      %1866 = vmatpush1.msra.mxu0 0.0
      %1867 = vmatprep.subr.mxu0 0.0
      %1868 = vmatpush1.msra.mxu0 0.0
      %1869 = vmatprep.subr.mxu0 0.0
      %1870 = vmatpush1.msra.mxu0 0.0
      %1871 = vmatprep.subr.mxu0 0.0
      %1872 = vmatpush1.msra.mxu0 0.0
      %1873 = vmatprep.subr.mxu0 0.0
      %1874 = vmatpush1.msra.mxu0 0.0
      %1875 = vmatprep.subr.mxu0 0.0
      %1876 = vmatpush1.msra.mxu0 0.0
      %1877 = vmatprep.subr.mxu0 0.0
      %1878 = vmatpush1.msra.mxu0 0.0
      %1879 = vmatprep.subr.mxu0 0.0
      %1880 = vmatpush1.msra.mxu0 0.0
      %1881 = vmatprep.subr.mxu0 0.0
      %1882 = vmatpush1.msra.mxu0 0.0
      %1883 = vmatprep.subr.mxu0 0.0
      %1884 = vmatpush1.msra.mxu0 0.0
      %1885 = vmatprep.subr.mxu0 0.0
      %1886 = vmatpush1.msra.mxu0 0.0
      %1887 = vmatprep.subr.mxu0 0.0
      %1888 = vmatpush1.msra.mxu0 0.0
      %1889 = vmatprep.subr.mxu0 0.0
      %1890 = vmatpush1.msra.mxu0 0.0
      %1891 = vmatprep.subr.mxu0 0.0
      %1892 = vmatpush1.msra.mxu0 0.0
      %1893 = vmatprep.subr.mxu0 0.0
      %1894 = vmatpush1.msra.mxu0 0.0
      %1895 = vmatprep.subr.mxu0 0.0
      %1896 = vmatpush1.msra.mxu0 0.0
      %1897 = vmatprep.subr.mxu0 0.0
      %1898 = vmatpush1.msra.mxu0 0.0
      %1899 = vmatprep.subr.mxu0 0.0
      %1900 = vmatpush1.msra.mxu0 0.0
      %1901 = vmatprep.subr.mxu0 0.0
      %1902 = vmatpush1.msra.mxu0 0.0
      %1903 = vmatprep.subr.mxu0 0.0
      %1904 = vmatpush1.msra.mxu0 0.0
      %1905 = vmatprep.subr.mxu0 0.0
      %1906 = vmatpush1.msra.mxu0 0.0
      %1907 = vmatprep.subr.mxu0 0.0
      %1908 = vmatpush1.msra.mxu0 0.0
      %1909 = vmatprep.subr.mxu0 0.0
      %1910 = vmatpush1.msra.mxu0 0.0
      %1911 = vmatprep.subr.mxu0 0.0
      %1912 = vmatpush1.msra.mxu0 0.0
      %1913 = vmatprep.subr.mxu0 0.0
      %1914 = vmatpush1.msra.mxu0 0.0
      %1915 = vmatprep.subr.mxu0 0.0
      %1916 = vmatpush1.msra.mxu0 0.0
      %1917 = vmatprep.subr.mxu0 0.0
      %1918 = vmatpush1.msra.mxu0 0.0
      %1919 = vmatprep.subr.mxu0 0.0
      %1920 = vmatpush1.msra.mxu0 0.0
      %1921 = vmatprep.mubr.f32.mxu0 0.0
      %1922 = vmatmul.mubr.f32.gmra.mrb[0].mxu0 %v1855
      %v1923 = vpop.f32.mrb[0].mxu0
      %v1924 = vadd.f32 0.0, %v1923
      %v1925 = vpop.f32.mrb[0].mxu0
      %v1926 = vadd.f32 0.0, %v1925
      %1927 = vdwg.mxu0
      %v1928 = vadd.f32 %v1555, %v1924
      %v1929 = vadd.f32 %v1556, %v1926
      %v1930 = vadd.f32 %v1557, %v1850
      %v1931 = vadd.f32 %v1558, %v1851
      %1932 = vst [vmem:[#allocation2 + $0x10] sm:$0xff] %v1930
      %1933 = vst [vmem:[#allocation2 + $0x18] sm:$0xff] %v1931
      %v1934 = vld [vmem:[#allocation2] sm:$0xff]
      %v1935 = vld [vmem:[#allocation2 + $0x8] sm:$0xff]
      %v1936 = vld [vmem:[#allocation2 + $0x10] sm:$0xff]
      %vm1937 = vcmp.ge.s32.totalorder %v360, 8
      %vm1938 = vcmp.ge.s32.totalorder %v362, 8
      %vm1939 = vmand %vm1937, %vm1938
      %v1940 = vsel %vm1939, 1, 0
      %v1941 = vlaneseq
      %v1942 = vshrl.u32 %v1941, 7
      %v1943 = vsub.s32 0, %v1942
      %v1944 = vrot.slane %v1940, %v1943
      %v1945 = vlaneseq
      %v1946 = vshrl.u32 %v1945, 7
      %v1947 = vsub.s32 1, %v1946
      %v1948 = vrot.slane %v1940, %v1947
      %vm1949 = vcmp.eq.s32.totalorder %v1944, 1
      %vm1950 = vcmp.eq.s32.totalorder %v1948, 1
      %1954 = vrot.lane.b32.xlu0 %v1934, 8
      %v1955 = vpop.permute.xlu0 %1954
      %1956 = vrot.lane.b32.xlu0 %v1935, 8
      %v1957 = vpop.permute.xlu0 %1956
      %1958 = vrot.lane.b32.xlu0 %v1936, 8
      %v1959 = vpop.permute.xlu0 %1958
      %v1960 = vsel %vm1055, %v1955, %v1957
      %v1961 = vsel %vm1055, %v1957, %v1959
      %v1964 = vsel %vm1949, %v1960, 0.0
      %v1965 = vsel %vm1950, %v1961, 0.0
      %v1966 = vsel %vm1937, 1, 0
      %v1967 = vlaneseq
      %v1968 = vshrl.u32 %v1967, 7
      %v1969 = vsub.s32 0, %v1968
      %v1970 = vrot.slane %v1966, %v1969
      %v1971 = vlaneseq
      %v1972 = vshrl.u32 %v1971, 7
      %v1973 = vsub.s32 1, %v1972
      %v1974 = vrot.slane %v1966, %v1973
      %vm1975 = vcmp.eq.s32.totalorder %v1970, 1
      %vm1976 = vcmp.eq.s32.totalorder %v1974, 1
      %v1977 = vsel %vm1975, %v1935, 0.0
      %v1978 = vsel %vm1976, %v1936, 0.0
      %v1979 = vld [vmem:[#allocation2 + $0x18] sm:$0xff]
      %vm1980 = vcmp.lt.s32.totalorder %v362, 8
      %vm1981 = vmand %vm1937, %vm1980
      %v1982 = vsel %vm1981, 1, 0
      %v1983 = vlaneseq
      %v1984 = vshrl.u32 %v1983, 7
      %v1985 = vsub.s32 0, %v1984
      %v1986 = vrot.slane %v1982, %v1985
      %v1987 = vlaneseq
      %v1988 = vshrl.u32 %v1987, 7
      %v1989 = vsub.s32 1, %v1988
      %v1990 = vrot.slane %v1982, %v1989
      %vm1991 = vcmp.eq.s32.totalorder %v1986, 1
      %vm1992 = vcmp.eq.s32.totalorder %v1990, 1
      %1994 = vrot.lane.b32.xlu0 %v1935, 120
      %v1995 = vpop.permute.xlu0 %1994
      %1996 = vrot.lane.b32.xlu0 %v1936, 120
      %v1997 = vpop.permute.xlu0 %1996
      %1998 = vrot.lane.b32.xlu0 %v1979, 120
      %v1999 = vpop.permute.xlu0 %1998
      %vm2000 = vcmask 982016
      %v2001 = vsel %vm2000, %v1995, %v1997
      %v2002 = vsel %vm2000, %v1997, %v1999
      %v2005 = vsel %vm1991, %v2001, 0.0
      %v2006 = vsel %vm1992, %v2002, 0.0
      %v2007 = vsel %vm1938, 1, 0
      %v2008 = vlaneseq
      %v2009 = vshrl.u32 %v2008, 7
      %v2010 = vsub.s32 0, %v2009
      %v2011 = vrot.slane %v2007, %v2010
      %v2012 = vlaneseq
      %v2013 = vshrl.u32 %v2012, 7
      %v2014 = vsub.s32 1, %v2013
      %v2015 = vrot.slane %v2007, %v2014
      %vm2016 = vcmp.eq.s32.totalorder %v2011, 1
      %vm2017 = vcmp.eq.s32.totalorder %v2015, 1
      %2018 = vrot.lane.b32.xlu0 %v1979, 8
      %v2019 = vpop.permute.xlu0 %2018
      %v2020 = vsel %vm1055, %v1959, %v2019
      %v2022 = vsel %vm2016, %v1961, 0.0
      %v2023 = vsel %vm2017, %v2020, 0.0
      %v2024 = vld [vmem:[#allocation2 + $0x20] sm:$0xff]
      %v2025 = vsel %vm1980, 1, 0
      %v2026 = vlaneseq
      %v2027 = vshrl.u32 %v2026, 7
      %v2028 = vsub.s32 0, %v2027
      %v2029 = vrot.slane %v2025, %v2028
      %v2030 = vlaneseq
      %v2031 = vshrl.u32 %v2030, 7
      %v2032 = vsub.s32 1, %v2031
      %v2033 = vrot.slane %v2025, %v2032
      %vm2034 = vcmp.eq.s32.totalorder %v2029, 1
      %vm2035 = vcmp.eq.s32.totalorder %v2033, 1
      %2037 = vrot.lane.b32.xlu0 %v2024, 120
      %v2038 = vpop.permute.xlu0 %2037
      %v2039 = vsel %vm2000, %v1999, %v2038
      %v2041 = vsel %vm2034, %v2002, 0.0
      %v2042 = vsel %vm2035, %v2039, 0.0
      %vm2043 = vcmp.lt.s32.totalorder %v360, 8
      %vm2044 = vmand %vm2043, %vm1938
      %v2045 = vsel %vm2044, 1, 0
      %v2046 = vlaneseq
      %v2047 = vshrl.u32 %v2046, 7
      %v2048 = vsub.s32 0, %v2047
      %v2049 = vrot.slane %v2045, %v2048
      %v2050 = vlaneseq
      %v2051 = vshrl.u32 %v2050, 7
      %v2052 = vsub.s32 1, %v2051
      %v2053 = vrot.slane %v2045, %v2052
      %vm2054 = vcmp.eq.s32.totalorder %v2049, 1
      %vm2055 = vcmp.eq.s32.totalorder %v2053, 1
      %2056 = vrot.lane.b32.xlu0 %v2024, 8
      %v2057 = vpop.permute.xlu0 %2056
      %v2058 = vsel %vm1055, %v2019, %v2057
      %v2060 = vsel %vm2054, %v2020, 0.0
      %v2061 = vsel %vm2055, %v2058, 0.0
      %v2062 = vsel %vm2043, 1, 0
      %v2063 = vlaneseq
      %v2064 = vshrl.u32 %v2063, 7
      %v2065 = vsub.s32 0, %v2064
      %v2066 = vrot.slane %v2062, %v2065
      %v2067 = vlaneseq
      %v2068 = vshrl.u32 %v2067, 7
      %v2069 = vsub.s32 1, %v2068
      %v2070 = vrot.slane %v2062, %v2069
      %vm2071 = vcmp.eq.s32.totalorder %v2066, 1
      %vm2072 = vcmp.eq.s32.totalorder %v2070, 1
      %v2073 = vsel %vm2071, %v1979, 0.0
      %v2074 = vsel %vm2072, %v2024, 0.0
      %v2075 = vld [vmem:[#allocation2 + $0x18] sm:$0xff]
      %v2076 = vld [vmem:[#allocation2 + $0x20] sm:$0xff]
      %v2077 = vld [vmem:[#allocation2 + $0x28] sm:$0xff]
      %vm2078 = vmand %vm2043, %vm1980
      %v2079 = vsel %vm2078, 1, 0
      %v2080 = vlaneseq
      %v2081 = vshrl.u32 %v2080, 7
      %v2082 = vsub.s32 0, %v2081
      %v2083 = vrot.slane %v2079, %v2082
      %v2084 = vlaneseq
      %v2085 = vshrl.u32 %v2084, 7
      %v2086 = vsub.s32 1, %v2085
      %v2087 = vrot.slane %v2079, %v2086
      %vm2088 = vcmp.eq.s32.totalorder %v2083, 1
      %vm2089 = vcmp.eq.s32.totalorder %v2087, 1
      %2093 = vrot.lane.b32.xlu0 %v2075, 120
      %v2094 = vpop.permute.xlu0 %2093
      %2095 = vrot.lane.b32.xlu0 %v2076, 120
      %v2096 = vpop.permute.xlu0 %2095
      %2097 = vrot.lane.b32.xlu0 %v2077, 120
      %v2098 = vpop.permute.xlu0 %2097
      %v2099 = vsel %vm2000, %v2094, %v2096
      %v2100 = vsel %vm2000, %v2096, %v2098
      %v2103 = vsel %vm2088, %v2099, 0.0
      %v2104 = vsel %vm2089, %v2100, 0.0
      %s2105 = scalar_lea.vmem %s4, 32
      %v2106 = vld [vmem:[%s2105] sm:$0xff]
      %s2107 = scalar_lea.vmem %s5, 32
      %v2108 = vld [vmem:[%s2107] sm:$0xff]
      %2110 = vset.pattern.permute.xlu0 0
      %2111 = vperm.xlu0 %2110, %v2108
      %v2112 = vpop.permute.xlu0 %2111
      %v2115 = vsel %vm678, %v2106, 0
      %2117 = vmatprep.subr.mxu0 %v1965
      %2118 = vmatpush1.msra.mxu0 %v1964
      %2119 = vmatprep.subr.mxu0 %v1978
      %2120 = vmatpush1.msra.mxu0 %v1977
      %2121 = vmatprep.subr.mxu0 %v2006
      %2122 = vmatpush1.msra.mxu0 %v2005
      %2123 = vmatprep.subr.mxu0 %v2023
      %2124 = vmatpush1.msra.mxu0 %v2022
      %2125 = vmatprep.subr.mxu0 %v1931
      %2126 = vmatpush1.msra.mxu0 %v1930
      %2127 = vmatprep.subr.mxu0 %v2042
      %2128 = vmatpush1.msra.mxu0 %v2041
      %2129 = vmatprep.subr.mxu0 %v2061
      %2130 = vmatpush1.msra.mxu0 %v2060
      %2131 = vmatprep.subr.mxu0 %v2074
      %2132 = vmatpush1.msra.mxu0 %v2073
      %2133 = vmatprep.subr.mxu0 %v2104
      %2134 = vmatpush1.msra.mxu0 %v2103
      %2135 = vmatprep.subr.mxu0 0.0
      %2136 = vmatpush1.msra.mxu0 0.0
      %2137 = vmatprep.subr.mxu0 0.0
      %2138 = vmatpush1.msra.mxu0 0.0
      %2139 = vmatprep.subr.mxu0 0.0
      %2140 = vmatpush1.msra.mxu0 0.0
      %2141 = vmatprep.subr.mxu0 0.0
      %2142 = vmatpush1.msra.mxu0 0.0
      %2143 = vmatprep.subr.mxu0 0.0
      %2144 = vmatpush1.msra.mxu0 0.0
      %2145 = vmatprep.subr.mxu0 0.0
      %2146 = vmatpush1.msra.mxu0 0.0
      %2147 = vmatprep.subr.mxu0 0.0
      %2148 = vmatpush1.msra.mxu0 0.0
      %2149 = vmatprep.subr.mxu0 0.0
      %2150 = vmatpush1.msra.mxu0 0.0
      %2151 = vmatprep.subr.mxu0 0.0
      %2152 = vmatpush1.msra.mxu0 0.0
      %2153 = vmatprep.subr.mxu0 0.0
      %2154 = vmatpush1.msra.mxu0 0.0
      %2155 = vmatprep.subr.mxu0 0.0
      %2156 = vmatpush1.msra.mxu0 0.0
      %2157 = vmatprep.subr.mxu0 0.0
      %2158 = vmatpush1.msra.mxu0 0.0
      %2159 = vmatprep.subr.mxu0 0.0
      %2160 = vmatpush1.msra.mxu0 0.0
      %2161 = vmatprep.subr.mxu0 0.0
      %2162 = vmatpush1.msra.mxu0 0.0
      %2163 = vmatprep.subr.mxu0 0.0
      %2164 = vmatpush1.msra.mxu0 0.0
      %2165 = vmatprep.subr.mxu0 0.0
      %2166 = vmatpush1.msra.mxu0 0.0
      %2167 = vmatprep.subr.mxu0 0.0
      %2168 = vmatpush1.msra.mxu0 0.0
      %2169 = vmatprep.subr.mxu0 0.0
      %2170 = vmatpush1.msra.mxu0 0.0
      %2171 = vmatprep.subr.mxu0 0.0
      %2172 = vmatpush1.msra.mxu0 0.0
      %2173 = vmatprep.subr.mxu0 0.0
      %2174 = vmatpush1.msra.mxu0 0.0
      %2175 = vmatprep.subr.mxu0 0.0
      %2176 = vmatpush1.msra.mxu0 0.0
      %2177 = vmatprep.subr.mxu0 0.0
      %2178 = vmatpush1.msra.mxu0 0.0
      %2179 = vmatprep.subr.mxu0 0.0
      %2180 = vmatpush1.msra.mxu0 0.0
      %2181 = vmatprep.mubr.f32.mxu0 0.0
      %2182 = vmatmul.mubr.f32.gmra.mrb[0].mxu0 %v2115
      %v2183 = vpop.f32.mrb[0].mxu0
      %v2184 = vadd.f32 %v2112, %v2183
      %v2185 = vpop.f32.mrb[0].mxu0
      %v2186 = vadd.f32 %v2112, %v2185
      %2187 = vdwg.mxu0
      %v2188 = vmax.f32 %v2184, 0.0
      %v2189 = vmax.f32 %v2186, 0.0
      %s2190 = scalar_lea.vmem %s6, 32
      %v2191 = vld [vmem:[%s2190] sm:$0xff]
      %v2193 = vsel %vm1055, %v2191, 0
      %2195 = vmatprep.subr.mxu0 %v2189
      %2196 = vmatpush1.msra.mxu0 %v2188
      %2197 = vmatprep.subr.mxu0 0.0
      %2198 = vmatpush1.msra.mxu0 0.0
      %2199 = vmatprep.subr.mxu0 0.0
      %2200 = vmatpush1.msra.mxu0 0.0
      %2201 = vmatprep.subr.mxu0 0.0
      %2202 = vmatpush1.msra.mxu0 0.0
      %2203 = vmatprep.subr.mxu0 0.0
      %2204 = vmatpush1.msra.mxu0 0.0
      %2205 = vmatprep.subr.mxu0 0.0
      %2206 = vmatpush1.msra.mxu0 0.0
      %2207 = vmatprep.subr.mxu0 0.0
      %2208 = vmatpush1.msra.mxu0 0.0
      %2209 = vmatprep.subr.mxu0 0.0
      %2210 = vmatpush1.msra.mxu0 0.0
      %2211 = vmatprep.subr.mxu0 0.0
      %2212 = vmatpush1.msra.mxu0 0.0
      %2213 = vmatprep.subr.mxu0 0.0
      %2214 = vmatpush1.msra.mxu0 0.0
      %2215 = vmatprep.subr.mxu0 0.0
      %2216 = vmatpush1.msra.mxu0 0.0
      %2217 = vmatprep.subr.mxu0 0.0
      %2218 = vmatpush1.msra.mxu0 0.0
      %2219 = vmatprep.subr.mxu0 0.0
      %2220 = vmatpush1.msra.mxu0 0.0
      %2221 = vmatprep.subr.mxu0 0.0
      %2222 = vmatpush1.msra.mxu0 0.0
      %2223 = vmatprep.subr.mxu0 0.0
      %2224 = vmatpush1.msra.mxu0 0.0
      %2225 = vmatprep.subr.mxu0 0.0
      %2226 = vmatpush1.msra.mxu0 0.0
      %2227 = vmatprep.subr.mxu0 0.0
      %2228 = vmatpush1.msra.mxu0 0.0
      %2229 = vmatprep.subr.mxu0 0.0
      %2230 = vmatpush1.msra.mxu0 0.0
      %2231 = vmatprep.subr.mxu0 0.0
      %2232 = vmatpush1.msra.mxu0 0.0
      %2233 = vmatprep.subr.mxu0 0.0
      %2234 = vmatpush1.msra.mxu0 0.0
      %2235 = vmatprep.subr.mxu0 0.0
      %2236 = vmatpush1.msra.mxu0 0.0
      %2237 = vmatprep.subr.mxu0 0.0
      %2238 = vmatpush1.msra.mxu0 0.0
      %2239 = vmatprep.subr.mxu0 0.0
      %2240 = vmatpush1.msra.mxu0 0.0
      %2241 = vmatprep.subr.mxu0 0.0
      %2242 = vmatpush1.msra.mxu0 0.0
      %2243 = vmatprep.subr.mxu0 0.0
      %2244 = vmatpush1.msra.mxu0 0.0
      %2245 = vmatprep.subr.mxu0 0.0
      %2246 = vmatpush1.msra.mxu0 0.0
      %2247 = vmatprep.subr.mxu0 0.0
      %2248 = vmatpush1.msra.mxu0 0.0
      %2249 = vmatprep.subr.mxu0 0.0
      %2250 = vmatpush1.msra.mxu0 0.0
      %2251 = vmatprep.subr.mxu0 0.0
      %2252 = vmatpush1.msra.mxu0 0.0
      %2253 = vmatprep.subr.mxu0 0.0
      %2254 = vmatpush1.msra.mxu0 0.0
      %2255 = vmatprep.subr.mxu0 0.0
      %2256 = vmatpush1.msra.mxu0 0.0
      %2257 = vmatprep.subr.mxu0 0.0
      %2258 = vmatpush1.msra.mxu0 0.0
      %2259 = vmatprep.mubr.f32.mxu0 0.0
      %2260 = vmatmul.mubr.f32.gmra.mrb[0].mxu0 %v2193
      %v2261 = vpop.f32.mrb[0].mxu0
      %v2262 = vadd.f32 0.0, %v2261
      %v2263 = vpop.f32.mrb[0].mxu0
      %v2264 = vadd.f32 0.0, %v2263
      %2265 = vdwg.mxu0
      %v2266 = vadd.f32 %v1928, %v2262
      %v2267 = vadd.f32 %v1929, %v2264
      %v2268 = vld [vmem:[%s8] sm:$0xff]
      %v2269 = vld [vmem:[%s9] sm:$0xff]
      %2271 = vset.pattern.permute.xlu0 0
      %2272 = vperm.xlu0 %2271, %v2269
      %v2273 = vpop.permute.xlu0 %2272
      %v2276 = vsel %vm1055, %v2268, 0
      %2278 = vmatprep.subr.mxu0 %v454
      %2279 = vmatpush1.msra.mxu0 %v453
      %2280 = vmatprep.subr.mxu0 0.0
      %2281 = vmatpush1.msra.mxu0 0.0
      %2282 = vmatprep.subr.mxu0 0.0
      %2283 = vmatpush1.msra.mxu0 0.0
      %2284 = vmatprep.subr.mxu0 0.0
      %2285 = vmatpush1.msra.mxu0 0.0
      %2286 = vmatprep.subr.mxu0 0.0
      %2287 = vmatpush1.msra.mxu0 0.0
      %2288 = vmatprep.subr.mxu0 0.0
      %2289 = vmatpush1.msra.mxu0 0.0
      %2290 = vmatprep.subr.mxu0 0.0
      %2291 = vmatpush1.msra.mxu0 0.0
      %2292 = vmatprep.subr.mxu0 0.0
      %2293 = vmatpush1.msra.mxu0 0.0
      %2294 = vmatprep.subr.mxu0 0.0
      %2295 = vmatpush1.msra.mxu0 0.0
      %2296 = vmatprep.subr.mxu0 0.0
      %2297 = vmatpush1.msra.mxu0 0.0
      %2298 = vmatprep.subr.mxu0 0.0
      %2299 = vmatpush1.msra.mxu0 0.0
      %2300 = vmatprep.subr.mxu0 0.0
      %2301 = vmatpush1.msra.mxu0 0.0
      %2302 = vmatprep.subr.mxu0 0.0
      %2303 = vmatpush1.msra.mxu0 0.0
      %2304 = vmatprep.subr.mxu0 0.0
      %2305 = vmatpush1.msra.mxu0 0.0
      %2306 = vmatprep.subr.mxu0 0.0
      %2307 = vmatpush1.msra.mxu0 0.0
      %2308 = vmatprep.subr.mxu0 0.0
      %2309 = vmatpush1.msra.mxu0 0.0
      %2310 = vmatprep.subr.mxu0 0.0
      %2311 = vmatpush1.msra.mxu0 0.0
      %2312 = vmatprep.subr.mxu0 0.0
      %2313 = vmatpush1.msra.mxu0 0.0
      %2314 = vmatprep.subr.mxu0 0.0
      %2315 = vmatpush1.msra.mxu0 0.0
      %2316 = vmatprep.subr.mxu0 0.0
      %2317 = vmatpush1.msra.mxu0 0.0
      %2318 = vmatprep.subr.mxu0 0.0
      %2319 = vmatpush1.msra.mxu0 0.0
      %2320 = vmatprep.subr.mxu0 0.0
      %2321 = vmatpush1.msra.mxu0 0.0
      %2322 = vmatprep.subr.mxu0 0.0
      %2323 = vmatpush1.msra.mxu0 0.0
      %2324 = vmatprep.subr.mxu0 0.0
      %2325 = vmatpush1.msra.mxu0 0.0
      %2326 = vmatprep.subr.mxu0 0.0
      %2327 = vmatpush1.msra.mxu0 0.0
      %2328 = vmatprep.subr.mxu0 0.0
      %2329 = vmatpush1.msra.mxu0 0.0
      %2330 = vmatprep.subr.mxu0 0.0
      %2331 = vmatpush1.msra.mxu0 0.0
      %2332 = vmatprep.subr.mxu0 0.0
      %2333 = vmatpush1.msra.mxu0 0.0
      %2334 = vmatprep.subr.mxu0 0.0
      %2335 = vmatpush1.msra.mxu0 0.0
      %2336 = vmatprep.subr.mxu0 0.0
      %2337 = vmatpush1.msra.mxu0 0.0
      %2338 = vmatprep.subr.mxu0 0.0
      %2339 = vmatpush1.msra.mxu0 0.0
      %2340 = vmatprep.subr.mxu0 0.0
      %2341 = vmatpush1.msra.mxu0 0.0
      %2342 = vmatprep.mubr.f32.mxu0 0.0
      %2343 = vmatmul.mubr.f32.gmra.mrb[0].mxu0 %v2276
      %v2344 = vpop.f32.mrb[0].mxu0
      %v2345 = vadd.f32 %v2273, %v2344
      %v2346 = vpop.f32.mrb[0].mxu0
      %v2347 = vadd.f32 %v2273, %v2346
      %2348 = vdwg.mxu0
      %v2349 = vmax.f32 %v2345, 0.0
      %v2350 = vmax.f32 %v2347, 0.0
      %v2351 = vld [vmem:[%s7] sm:$0xff]
      %2353 = vset.pattern.permute.xlu0 0
      %2354 = vperm.xlu0 %2353, %v2351
      %v2355 = vpop.permute.xlu0 %2354
      %v2357 = vadd.f32 %v2266, %v2355
      %v2358 = vadd.f32 %v2267, %v2355
      %v2359 = vmax.f32 %v2357, 0.0
      %v2360 = vmax.f32 %v2358, 0.0
      %v2361 = vadd.f32 %v2359, %v2349
      %v2362 = vadd.f32 %v2360, %v2350
      %2363 = vst [vmem:[%s359] sm:$0xff] %v2361
      %2364 = vst [vmem:[%s359 + $0x8] sm:$0xff] %v2362
      %p2365 = scmp.lt.s32.totalorder %s21, 1
      %s2366 = scalar_select %p2365, %s21, 1
      %s2367 = smul.addr %s2366, 2
      %s2368 = smul.addr %s2367, 8
      %s2369 = scalar_lea.vmem %s10, %s2368
      // Predicated region
      $region61: #{sprm_forward.1} parent=59 // pred_check
        %p2370 = pneg %p254
      $region62: #{sprm_forward.1} parent=59 // pred_check_branch
        %2372 = sbr.rel (%p2370) target = $region64
      $region63: #{sprm_forward.1} parent=59 // pred_region
        _
      $region64: #{sprm_forward.1} parent=59 // pred_fallthru
        _
    $region60: #{sprm_forward.1} parent=5 // pred_fallthru
      _
    %p2373 = scmp.le.s32.totalorder 2, %s16
    // Predicated region
    $region65: #{sprm_forward.1} parent=5 // pred_check
      %p2374 = pneg %p2373
    $region66: #{sprm_forward.1} parent=5 // pred_check_branch
      %2376 = sbr.rel (%p2374) target = $region68
    $region67: #{sprm_forward.1} parent=5 // pred_region
      %s2377 = ssub.s32 %s16, 2
      // Predicated region
      $region69: #{sprm_forward.1} parent=67 // pred_check
        %p2378 = pneg %p260
      $region70: #{sprm_forward.1} parent=67 // pred_check_branch
        %2380 = sbr.rel (%p2378) target = $region72
      $region71: #{sprm_forward.1} parent=67 // pred_region
        %p2381 = scmp.lt.s32.totalorder %s22, 1
        %s2382 = scalar_select %p2381, %s22, 1
        %s2383 = smul.addr %s2382, 2
        %s2384 = smul.addr %s2383, 8
        %s2385 = scalar_lea.vmem %s10, %s2384
      $region72: #{sprm_forward.1} parent=67 // pred_fallthru
        _
    $region68: #{sprm_forward.1} parent=5 // pred_fallthru
      _
  $region6: #{sprm_forward.1} parent=0 // loop_footer
    %s20 = sadd.s32 1, %s16
  $region7: #{sprm_forward.1} parent=0 // loop_footer_branch
    %15 = sbr.rel target = $region3
  $region8: #{sprm_forward.1} parent=0 // loop_exit
    _

</llo_original>
